<compile_context>
chip_gen: v7x
topology: tpu7x:2x2x1
jax: 0.10.0
libtpu: 0.0.40
codegen_flags: <defaults>
</compile_context>

<pallas_src>
import functools

import jax
import jax.numpy as jnp
from jax.experimental import pallas as pl
from jax.experimental.pallas import tpu as pltpu

# (in_features, out_features) for the 6 ResidualBlocks of PINN.
LAYER_SIZES = ((1, 24), (24, 17), (17, 10), (10, 3), (3, 3), (3, 1))
PAD = 128  # every feature dim is lane-padded to 128 inside the kernel / weights


# ----------------------------------------------------------------------------- kernel ----
def _make_pinn_kernel():
    shortcut_is_linear = tuple(fin != fout for (fin, fout) in LAYER_SIZES)

    def kernel(*refs):
        x_ref = refs[0]
        o_ref = refs[-1]
        w = refs[1:-1]  # 4 refs per layer: (wcat|w1, bcat|b1, w2, b2)

        h = x_ref[...].astype(jnp.float32)  # (tb, 1)
        idx = 0
        # Static Python unroll over the 6 layers: weights are VMEM-resident across steps.
        for li, linear_sc in enumerate(shortcut_is_linear):
            if linear_sc:
                wcat = w[idx][...]      # (F_in_pad, 256) = [W1_pad | Ws_pad]
                bcat = w[idx + 1][...]  # (1, 256)        = [b1_pad | bs_pad]
                w2 = w[idx + 2][...]    # (128, 128)
                b2 = w[idx + 3][...]    # (1, 128)
                idx += 4
                if li == 0:
                    # First layer has F_in = 1: the "matmul" is just an outer product,
                    # do it on the VPU as a broadcast multiply (no K=1 MXU pass).
                    cat = h * wcat + bcat                              # (tb, 256)
                else:
                    cat = jnp.dot(h, wcat,
                                  preferred_element_type=jnp.float32) + bcat
                pre1 = cat[:, :PAD]       # fc1 pre-activation (128-lane slice)
                identity = cat[:, PAD:]   # shortcut output   (128-lane slice)
            else:
                # in_features == out_features -> nn.Identity(): direct copy, no matmul.
                w1 = w[idx][...]
                b1 = w[idx + 1][...]
                w2 = w[idx + 2][...]
                b2 = w[idx + 3][...]
                idx += 4
                pre1 = jnp.dot(h, w1, preferred_element_type=jnp.float32) + b1
                identity = h

            a = jnp.sin(pre1)                                          # VPU
            y = jnp.tanh(jnp.dot(a, w2,                                # MXU + EUP
                                 preferred_element_type=jnp.float32) + b2)
            h = 0.1 * y + identity                                     # (tb, 128); padded
            #                                                          # lanes stay exactly 0

        # Final block is 3 -> 1: only lane 0 is meaningful.
        o_ref[...] = h[:, 0:1].astype(o_ref.dtype)

    return kernel


# ----------------------------------------------------------------------------- wrapper ---
@functools.partial(jax.jit, static_argnames=("block_rows",))
def pinn_forward(x, packed_params, *, block_rows=512):
    """x: (B, 1) float32. packed_params: output of pack_pinn_params()."""
    B = x.shape[0]
    dtype = x.dtype

    tb = min(block_rows, B)
    tb = max(8, (tb // 8) * 8)                       # sublane-aligned row tile
    Bp = ((B + tb - 1) // tb) * tb                   # pad batch to a whole number of tiles
    if Bp != B:
        x = jnp.concatenate([x, jnp.zeros((Bp - B, 1), dtype)], axis=0)
    grid = (Bp // tb,)

    in_specs = [pl.BlockSpec((tb, 1), lambda i: (i, 0))]      # x tile: rows stream
    for arr in packed_params:                                  # weights: full, resident
        in_specs.append(pl.BlockSpec(arr.shape, lambda i: (0, 0)))

    out = pl.pallas_call(
        _make_pinn_kernel(),
        out_shape=jax.ShapeDtypeStruct((Bp, 1), dtype),
        grid_spec=pltpu.PrefetchScalarGridSpec(
            num_scalar_prefetch=0,
            grid=grid,
            in_specs=in_specs,
            out_specs=pl.BlockSpec((tb, 1), lambda i: (i, 0)),
        ),
        compiler_params=pltpu.CompilerParams(
            dimension_semantics=("parallel",),       # row tiles are independent
            vmem_limit_bytes=32 * 1024 * 1024,       # explicit, fits v7x's 64 MiB physical
        ),
    )(x, *packed_params)
    return out[:B]


# --------------------------------------------------------------------------- parameters --
def init_pinn_params(key, dtype=jnp.float32):
    """nn.Linear-style U(-1/sqrt(fan_in), 1/sqrt(fan_in)) init; W stored as (fan_in, fan_out)."""
    params = []
    for (fin, fout) in LAYER_SIZES:
        key, k1, k2, k3, k4, k5, k6 = jax.random.split(key, 7)

        def lin(kw, kb, fi, fo):
            bound = 1.0 / jnp.sqrt(jnp.float32(fi))
            w = jax.random.uniform(kw, (fi, fo), dtype, -bound, bound)
            b = jax.random.uniform(kb, (fo,), dtype, -bound, bound)
            return w, b

        w1, b1 = lin(k1, k2, fin, fout)
        w2, b2 = lin(k3, k4, fout, fout)
        if fin != fout:
            ws, bs = lin(k5, k6, fin, fout)
        else:
            ws, bs = None, None                      # nn.Identity() shortcut
        params.append(dict(w1=w1, b1=b1, w2=w2, b2=b2, ws=ws, bs=bs))
    return params


def _pad2(a, rows, cols):
    r, c = a.shape
    return jnp.zeros((rows, cols), a.dtype).at[:r, :c].set(a)


def pack_pinn_params(params):
    """Lane-pad to 128 and column-concat fc1+shortcut weights for the fused kernel."""
    flat = []
    for li, (p, (fin, fout)) in enumerate(zip(params, LAYER_SIZES)):
        pin = 1 if li == 0 else PAD                  # first layer keeps true input width 1
        w1p = _pad2(p["w1"], pin, PAD)
        b1p = _pad2(p["b1"][None, :], 1, PAD)
        w2p = _pad2(p["w2"], PAD, PAD)
        b2p = _pad2(p["b2"][None, :], 1, PAD)
        if p["ws"] is not None:
            wsp = _pad2(p["ws"], pin, PAD)
            bsp = _pad2(p["bs"][None, :], 1, PAD)
            wcat = jnp.concatenate([w1p, wsp], axis=1)   # (pin, 256)
            bcat = jnp.concatenate([b1p, bsp], axis=1)   # (1,   256)
            flat += [wcat, bcat, w2p, b2p]
        else:
            flat += [w1p, b1p, w2p, b2p]
    return tuple(flat)


# --------------------------------------------------------------------------- reference ---
def pinn_ref(x, params):
    h = x
    for p in params:
        identity = h if p["ws"] is None else h @ p["ws"] + p["bs"]
        out = jnp.sin(h @ p["w1"] + p["b1"])
        out = jnp.tanh(out @ p["w2"] + p["b2"])
        h = 0.1 * out + identity
    return h


# -------------------------------------------------------------------------------- main ---
if __name__ == "__main__":
    key = jax.random.PRNGKey(0)
    kx, kp = jax.random.split(key)

    B = 64                                            # small demo batch
    x = jax.random.uniform(kx, (B, 1), jnp.float32, -2.0, 2.0)

    params = init_pinn_params(kp)
    packed = pack_pinn_params(params)

    out = pinn_forward(x, packed, block_rows=32)      # grid of 2 steps (pipelined / 2 TCs)
    out = jax.block_until_ready(out)

    ref = pinn_ref(x, params)
    assert out.shape == (B, 1)
    assert jnp.allclose(out, ref, atol=1e-4, rtol=1e-4), (
        float(jnp.max(jnp.abs(out - ref))))

    print("KERNEL_OK")
</pallas_src>

<mosaic_0001>
module attributes {stable_mosaic.version = 11 : i64} {
  func.func @kernel(%arg0: i32, %arg1: memref<32x1xf32, #tpu.memory_space<vmem>>, %arg2: memref<1x256xf32, #tpu.memory_space<vmem>>, %arg3: memref<1x256xf32, #tpu.memory_space<vmem>>, %arg4: memref<128x128xf32, #tpu.memory_space<vmem>>, %arg5: memref<1x128xf32, #tpu.memory_space<vmem>>, %arg6: memref<128x256xf32, #tpu.memory_space<vmem>>, %arg7: memref<1x256xf32, #tpu.memory_space<vmem>>, %arg8: memref<128x128xf32, #tpu.memory_space<vmem>>, %arg9: memref<1x128xf32, #tpu.memory_space<vmem>>, %arg10: memref<128x256xf32, #tpu.memory_space<vmem>>, %arg11: memref<1x256xf32, #tpu.memory_space<vmem>>, %arg12: memref<128x128xf32, #tpu.memory_space<vmem>>, %arg13: memref<1x128xf32, #tpu.memory_space<vmem>>, %arg14: memref<128x256xf32, #tpu.memory_space<vmem>>, %arg15: memref<1x256xf32, #tpu.memory_space<vmem>>, %arg16: memref<128x128xf32, #tpu.memory_space<vmem>>, %arg17: memref<1x128xf32, #tpu.memory_space<vmem>>, %arg18: memref<128x128xf32, #tpu.memory_space<vmem>>, %arg19: memref<1x128xf32, #tpu.memory_space<vmem>>, %arg20: memref<128x128xf32, #tpu.memory_space<vmem>>, %arg21: memref<1x128xf32, #tpu.memory_space<vmem>>, %arg22: memref<128x256xf32, #tpu.memory_space<vmem>>, %arg23: memref<1x256xf32, #tpu.memory_space<vmem>>, %arg24: memref<128x128xf32, #tpu.memory_space<vmem>>, %arg25: memref<1x128xf32, #tpu.memory_space<vmem>>, %arg26: memref<32x1xf32, #tpu.memory_space<vmem>>) attributes {dimension_semantics = [#tpu.dimension_semantics<parallel>], iteration_bounds = array<i64: 2>, scalar_prefetch = 0 : i64, scratch_operands = 0 : i64, tpu.core_type = #tpu.core_type<tc>, window_params = [{transform_indices = @transform_0, window_bounds = array<i64: 32, 1>}, {pipeline_mode = #tpu.pipeline_mode<synchronous>, transform_indices = @transform_1, window_bounds = array<i64: 1, 256>}, {pipeline_mode = #tpu.pipeline_mode<synchronous>, transform_indices = @transform_2, window_bounds = array<i64: 1, 256>}, {pipeline_mode = #tpu.pipeline_mode<synchronous>, transform_indices = @transform_3, window_bounds = array<i64: 128, 128>}, {pipeline_mode = #tpu.pipeline_mode<synchronous>, transform_indices = @transform_4, window_bounds = array<i64: 1, 128>}, {pipeline_mode = #tpu.pipeline_mode<synchronous>, transform_indices = @transform_5, window_bounds = array<i64: 128, 256>}, {pipeline_mode = #tpu.pipeline_mode<synchronous>, transform_indices = @transform_6, window_bounds = array<i64: 1, 256>}, {pipeline_mode = #tpu.pipeline_mode<synchronous>, transform_indices = @transform_7, window_bounds = array<i64: 128, 128>}, {pipeline_mode = #tpu.pipeline_mode<synchronous>, transform_indices = @transform_8, window_bounds = array<i64: 1, 128>}, {pipeline_mode = #tpu.pipeline_mode<synchronous>, transform_indices = @transform_9, window_bounds = array<i64: 128, 256>}, {pipeline_mode = #tpu.pipeline_mode<synchronous>, transform_indices = @transform_10, window_bounds = array<i64: 1, 256>}, {pipeline_mode = #tpu.pipeline_mode<synchronous>, transform_indices = @transform_11, window_bounds = array<i64: 128, 128>}, {pipeline_mode = #tpu.pipeline_mode<synchronous>, transform_indices = @transform_12, window_bounds = array<i64: 1, 128>}, {pipeline_mode = #tpu.pipeline_mode<synchronous>, transform_indices = @transform_13, window_bounds = array<i64: 128, 256>}, {pipeline_mode = #tpu.pipeline_mode<synchronous>, transform_indices = @transform_14, window_bounds = array<i64: 1, 256>}, {pipeline_mode = #tpu.pipeline_mode<synchronous>, transform_indices = @transform_15, window_bounds = array<i64: 128, 128>}, {pipeline_mode = #tpu.pipeline_mode<synchronous>, transform_indices = @transform_16, window_bounds = array<i64: 1, 128>}, {pipeline_mode = #tpu.pipeline_mode<synchronous>, transform_indices = @transform_17, window_bounds = array<i64: 128, 128>}, {pipeline_mode = #tpu.pipeline_mode<synchronous>, transform_indices = @transform_18, window_bounds = array<i64: 1, 128>}, {pipeline_mode = #tpu.pipeline_mode<synchronous>, transform_indices = @transform_19, window_bounds = array<i64: 128, 128>}, {pipeline_mode = #tpu.pipeline_mode<synchronous>, transform_indices = @transform_20, window_bounds = array<i64: 1, 128>}, {pipeline_mode = #tpu.pipeline_mode<synchronous>, transform_indices = @transform_21, window_bounds = array<i64: 128, 256>}, {pipeline_mode = #tpu.pipeline_mode<synchronous>, transform_indices = @transform_22, window_bounds = array<i64: 1, 256>}, {pipeline_mode = #tpu.pipeline_mode<synchronous>, transform_indices = @transform_23, window_bounds = array<i64: 128, 128>}, {pipeline_mode = #tpu.pipeline_mode<synchronous>, transform_indices = @transform_24, window_bounds = array<i64: 1, 128>}, {transform_indices = @transform_25, window_bounds = array<i64: 32, 1>}]} {
    %c0 = arith.constant 0 : index
    %c0_0 = arith.constant 0 : index
    %0 = vector.load %arg1[%c0, %c0_0] : memref<32x1xf32, #tpu.memory_space<vmem>>, vector<32x1xf32>
    %c0_1 = arith.constant 0 : index
    %c0_2 = arith.constant 0 : index
    %1 = vector.load %arg2[%c0_1, %c0_2] : memref<1x256xf32, #tpu.memory_space<vmem>>, vector<1x256xf32>
    %c0_3 = arith.constant 0 : index
    %c0_4 = arith.constant 0 : index
    %2 = vector.load %arg3[%c0_3, %c0_4] : memref<1x256xf32, #tpu.memory_space<vmem>>, vector<1x256xf32>
    %c0_5 = arith.constant 0 : index
    %c0_6 = arith.constant 0 : index
    %3 = vector.load %arg4[%c0_5, %c0_6] : memref<128x128xf32, #tpu.memory_space<vmem>>, vector<128x128xf32>
    %c0_7 = arith.constant 0 : index
    %c0_8 = arith.constant 0 : index
    %4 = vector.load %arg5[%c0_7, %c0_8] : memref<1x128xf32, #tpu.memory_space<vmem>>, vector<1x128xf32>
    %5 = vector.broadcast %0 : vector<32x1xf32> to vector<32x256xf32>
    %6 = vector.broadcast %1 : vector<1x256xf32> to vector<32x256xf32>
    %7 = arith.mulf %5, %6 : vector<32x256xf32>
    %8 = vector.broadcast %2 : vector<1x256xf32> to vector<32x256xf32>
    %9 = arith.addf %7, %8 : vector<32x256xf32>
    %10 = vector.extract_strided_slice %9 {offsets = [0, 0], sizes = [32, 128], strides = [1, 1]} : vector<32x256xf32> to vector<32x128xf32>
    %11 = vector.extract_strided_slice %9 {offsets = [0, 128], sizes = [32, 128], strides = [1, 1]} : vector<32x256xf32> to vector<32x128xf32>
    %12 = math.sin %10 : vector<32x128xf32>
    %cst = arith.constant dense<0.000000e+00> : vector<32x128xf32>
    %13 = tpu.matmul %12, %3, %cst {dimension_numbers = #tpu.dot_dimension_numbers<[1], [0], [0], [1], [0, 0, 1, 1], [], []>} : vector<32x128xf32>, vector<128x128xf32>, vector<32x128xf32> -> vector<32x128xf32>
    %14 = vector.broadcast %4 : vector<1x128xf32> to vector<32x128xf32>
    %15 = arith.addf %13, %14 : vector<32x128xf32>
    %16 = math.tanh %15 : vector<32x128xf32>
    %cst_9 = arith.constant 1.000000e-01 : f32
    %17 = vector.broadcast %cst_9 : f32 to vector<32x128xf32>
    %18 = arith.mulf %17, %16 : vector<32x128xf32>
    %19 = arith.addf %18, %11 : vector<32x128xf32>
    %c0_10 = arith.constant 0 : index
    %c0_11 = arith.constant 0 : index
    %20 = vector.load %arg6[%c0_10, %c0_11] : memref<128x256xf32, #tpu.memory_space<vmem>>, vector<128x256xf32>
    %c0_12 = arith.constant 0 : index
    %c0_13 = arith.constant 0 : index
    %21 = vector.load %arg7[%c0_12, %c0_13] : memref<1x256xf32, #tpu.memory_space<vmem>>, vector<1x256xf32>
    %c0_14 = arith.constant 0 : index
    %c0_15 = arith.constant 0 : index
    %22 = vector.load %arg8[%c0_14, %c0_15] : memref<128x128xf32, #tpu.memory_space<vmem>>, vector<128x128xf32>
    %c0_16 = arith.constant 0 : index
    %c0_17 = arith.constant 0 : index
    %23 = vector.load %arg9[%c0_16, %c0_17] : memref<1x128xf32, #tpu.memory_space<vmem>>, vector<1x128xf32>
    %cst_18 = arith.constant dense<0.000000e+00> : vector<32x256xf32>
    %24 = tpu.matmul %19, %20, %cst_18 {dimension_numbers = #tpu.dot_dimension_numbers<[1], [0], [0], [1], [0, 0, 1, 1], [], []>} : vector<32x128xf32>, vector<128x256xf32>, vector<32x256xf32> -> vector<32x256xf32>
    %25 = vector.broadcast %21 : vector<1x256xf32> to vector<32x256xf32>
    %26 = arith.addf %24, %25 : vector<32x256xf32>
    %27 = vector.extract_strided_slice %26 {offsets = [0, 0], sizes = [32, 128], strides = [1, 1]} : vector<32x256xf32> to vector<32x128xf32>
    %28 = vector.extract_strided_slice %26 {offsets = [0, 128], sizes = [32, 128], strides = [1, 1]} : vector<32x256xf32> to vector<32x128xf32>
    %29 = math.sin %27 : vector<32x128xf32>
    %cst_19 = arith.constant dense<0.000000e+00> : vector<32x128xf32>
    %30 = tpu.matmul %29, %22, %cst_19 {dimension_numbers = #tpu.dot_dimension_numbers<[1], [0], [0], [1], [0, 0, 1, 1], [], []>} : vector<32x128xf32>, vector<128x128xf32>, vector<32x128xf32> -> vector<32x128xf32>
    %31 = vector.broadcast %23 : vector<1x128xf32> to vector<32x128xf32>
    %32 = arith.addf %30, %31 : vector<32x128xf32>
    %33 = math.tanh %32 : vector<32x128xf32>
    %cst_20 = arith.constant 1.000000e-01 : f32
    %34 = vector.broadcast %cst_20 : f32 to vector<32x128xf32>
    %35 = arith.mulf %34, %33 : vector<32x128xf32>
    %36 = arith.addf %35, %28 : vector<32x128xf32>
    %c0_21 = arith.constant 0 : index
    %c0_22 = arith.constant 0 : index
    %37 = vector.load %arg10[%c0_21, %c0_22] : memref<128x256xf32, #tpu.memory_space<vmem>>, vector<128x256xf32>
    %c0_23 = arith.constant 0 : index
    %c0_24 = arith.constant 0 : index
    %38 = vector.load %arg11[%c0_23, %c0_24] : memref<1x256xf32, #tpu.memory_space<vmem>>, vector<1x256xf32>
    %c0_25 = arith.constant 0 : index
    %c0_26 = arith.constant 0 : index
    %39 = vector.load %arg12[%c0_25, %c0_26] : memref<128x128xf32, #tpu.memory_space<vmem>>, vector<128x128xf32>
    %c0_27 = arith.constant 0 : index
    %c0_28 = arith.constant 0 : index
    %40 = vector.load %arg13[%c0_27, %c0_28] : memref<1x128xf32, #tpu.memory_space<vmem>>, vector<1x128xf32>
    %cst_29 = arith.constant dense<0.000000e+00> : vector<32x256xf32>
    %41 = tpu.matmul %36, %37, %cst_29 {dimension_numbers = #tpu.dot_dimension_numbers<[1], [0], [0], [1], [0, 0, 1, 1], [], []>} : vector<32x128xf32>, vector<128x256xf32>, vector<32x256xf32> -> vector<32x256xf32>
    %42 = vector.broadcast %38 : vector<1x256xf32> to vector<32x256xf32>
    %43 = arith.addf %41, %42 : vector<32x256xf32>
    %44 = vector.extract_strided_slice %43 {offsets = [0, 0], sizes = [32, 128], strides = [1, 1]} : vector<32x256xf32> to vector<32x128xf32>
    %45 = vector.extract_strided_slice %43 {offsets = [0, 128], sizes = [32, 128], strides = [1, 1]} : vector<32x256xf32> to vector<32x128xf32>
    %46 = math.sin %44 : vector<32x128xf32>
    %cst_30 = arith.constant dense<0.000000e+00> : vector<32x128xf32>
    %47 = tpu.matmul %46, %39, %cst_30 {dimension_numbers = #tpu.dot_dimension_numbers<[1], [0], [0], [1], [0, 0, 1, 1], [], []>} : vector<32x128xf32>, vector<128x128xf32>, vector<32x128xf32> -> vector<32x128xf32>
    %48 = vector.broadcast %40 : vector<1x128xf32> to vector<32x128xf32>
    %49 = arith.addf %47, %48 : vector<32x128xf32>
    %50 = math.tanh %49 : vector<32x128xf32>
    %cst_31 = arith.constant 1.000000e-01 : f32
    %51 = vector.broadcast %cst_31 : f32 to vector<32x128xf32>
    %52 = arith.mulf %51, %50 : vector<32x128xf32>
    %53 = arith.addf %52, %45 : vector<32x128xf32>
    %c0_32 = arith.constant 0 : index
    %c0_33 = arith.constant 0 : index
    %54 = vector.load %arg14[%c0_32, %c0_33] : memref<128x256xf32, #tpu.memory_space<vmem>>, vector<128x256xf32>
    %c0_34 = arith.constant 0 : index
    %c0_35 = arith.constant 0 : index
    %55 = vector.load %arg15[%c0_34, %c0_35] : memref<1x256xf32, #tpu.memory_space<vmem>>, vector<1x256xf32>
    %c0_36 = arith.constant 0 : index
    %c0_37 = arith.constant 0 : index
    %56 = vector.load %arg16[%c0_36, %c0_37] : memref<128x128xf32, #tpu.memory_space<vmem>>, vector<128x128xf32>
    %c0_38 = arith.constant 0 : index
    %c0_39 = arith.constant 0 : index
    %57 = vector.load %arg17[%c0_38, %c0_39] : memref<1x128xf32, #tpu.memory_space<vmem>>, vector<1x128xf32>
    %cst_40 = arith.constant dense<0.000000e+00> : vector<32x256xf32>
    %58 = tpu.matmul %53, %54, %cst_40 {dimension_numbers = #tpu.dot_dimension_numbers<[1], [0], [0], [1], [0, 0, 1, 1], [], []>} : vector<32x128xf32>, vector<128x256xf32>, vector<32x256xf32> -> vector<32x256xf32>
    %59 = vector.broadcast %55 : vector<1x256xf32> to vector<32x256xf32>
    %60 = arith.addf %58, %59 : vector<32x256xf32>
    %61 = vector.extract_strided_slice %60 {offsets = [0, 0], sizes = [32, 128], strides = [1, 1]} : vector<32x256xf32> to vector<32x128xf32>
    %62 = vector.extract_strided_slice %60 {offsets = [0, 128], sizes = [32, 128], strides = [1, 1]} : vector<32x256xf32> to vector<32x128xf32>
    %63 = math.sin %61 : vector<32x128xf32>
    %cst_41 = arith.constant dense<0.000000e+00> : vector<32x128xf32>
    %64 = tpu.matmul %63, %56, %cst_41 {dimension_numbers = #tpu.dot_dimension_numbers<[1], [0], [0], [1], [0, 0, 1, 1], [], []>} : vector<32x128xf32>, vector<128x128xf32>, vector<32x128xf32> -> vector<32x128xf32>
    %65 = vector.broadcast %57 : vector<1x128xf32> to vector<32x128xf32>
    %66 = arith.addf %64, %65 : vector<32x128xf32>
    %67 = math.tanh %66 : vector<32x128xf32>
    %cst_42 = arith.constant 1.000000e-01 : f32
    %68 = vector.broadcast %cst_42 : f32 to vector<32x128xf32>
    %69 = arith.mulf %68, %67 : vector<32x128xf32>
    %70 = arith.addf %69, %62 : vector<32x128xf32>
    %c0_43 = arith.constant 0 : index
    %c0_44 = arith.constant 0 : index
    %71 = vector.load %arg18[%c0_43, %c0_44] : memref<128x128xf32, #tpu.memory_space<vmem>>, vector<128x128xf32>
    %c0_45 = arith.constant 0 : index
    %c0_46 = arith.constant 0 : index
    %72 = vector.load %arg19[%c0_45, %c0_46] : memref<1x128xf32, #tpu.memory_space<vmem>>, vector<1x128xf32>
    %c0_47 = arith.constant 0 : index
    %c0_48 = arith.constant 0 : index
    %73 = vector.load %arg20[%c0_47, %c0_48] : memref<128x128xf32, #tpu.memory_space<vmem>>, vector<128x128xf32>
    %c0_49 = arith.constant 0 : index
    %c0_50 = arith.constant 0 : index
    %74 = vector.load %arg21[%c0_49, %c0_50] : memref<1x128xf32, #tpu.memory_space<vmem>>, vector<1x128xf32>
    %cst_51 = arith.constant dense<0.000000e+00> : vector<32x128xf32>
    %75 = tpu.matmul %70, %71, %cst_51 {dimension_numbers = #tpu.dot_dimension_numbers<[1], [0], [0], [1], [0, 0, 1, 1], [], []>} : vector<32x128xf32>, vector<128x128xf32>, vector<32x128xf32> -> vector<32x128xf32>
    %76 = vector.broadcast %72 : vector<1x128xf32> to vector<32x128xf32>
    %77 = arith.addf %75, %76 : vector<32x128xf32>
    %78 = math.sin %77 : vector<32x128xf32>
    %cst_52 = arith.constant dense<0.000000e+00> : vector<32x128xf32>
    %79 = tpu.matmul %78, %73, %cst_52 {dimension_numbers = #tpu.dot_dimension_numbers<[1], [0], [0], [1], [0, 0, 1, 1], [], []>} : vector<32x128xf32>, vector<128x128xf32>, vector<32x128xf32> -> vector<32x128xf32>
    %80 = vector.broadcast %74 : vector<1x128xf32> to vector<32x128xf32>
    %81 = arith.addf %79, %80 : vector<32x128xf32>
    %82 = math.tanh %81 : vector<32x128xf32>
    %cst_53 = arith.constant 1.000000e-01 : f32
    %83 = vector.broadcast %cst_53 : f32 to vector<32x128xf32>
    %84 = arith.mulf %83, %82 : vector<32x128xf32>
    %85 = arith.addf %84, %70 : vector<32x128xf32>
    %c0_54 = arith.constant 0 : index
    %c0_55 = arith.constant 0 : index
    %86 = vector.load %arg22[%c0_54, %c0_55] : memref<128x256xf32, #tpu.memory_space<vmem>>, vector<128x256xf32>
    %c0_56 = arith.constant 0 : index
    %c0_57 = arith.constant 0 : index
    %87 = vector.load %arg23[%c0_56, %c0_57] : memref<1x256xf32, #tpu.memory_space<vmem>>, vector<1x256xf32>
    %c0_58 = arith.constant 0 : index
    %c0_59 = arith.constant 0 : index
    %88 = vector.load %arg24[%c0_58, %c0_59] : memref<128x128xf32, #tpu.memory_space<vmem>>, vector<128x128xf32>
    %c0_60 = arith.constant 0 : index
    %c0_61 = arith.constant 0 : index
    %89 = vector.load %arg25[%c0_60, %c0_61] : memref<1x128xf32, #tpu.memory_space<vmem>>, vector<1x128xf32>
    %cst_62 = arith.constant dense<0.000000e+00> : vector<32x256xf32>
    %90 = tpu.matmul %85, %86, %cst_62 {dimension_numbers = #tpu.dot_dimension_numbers<[1], [0], [0], [1], [0, 0, 1, 1], [], []>} : vector<32x128xf32>, vector<128x256xf32>, vector<32x256xf32> -> vector<32x256xf32>
    %91 = vector.broadcast %87 : vector<1x256xf32> to vector<32x256xf32>
    %92 = arith.addf %90, %91 : vector<32x256xf32>
    %93 = vector.extract_strided_slice %92 {offsets = [0, 0], sizes = [32, 128], strides = [1, 1]} : vector<32x256xf32> to vector<32x128xf32>
    %94 = vector.extract_strided_slice %92 {offsets = [0, 128], sizes = [32, 128], strides = [1, 1]} : vector<32x256xf32> to vector<32x128xf32>
    %95 = math.sin %93 : vector<32x128xf32>
    %cst_63 = arith.constant dense<0.000000e+00> : vector<32x128xf32>
    %96 = tpu.matmul %95, %88, %cst_63 {dimension_numbers = #tpu.dot_dimension_numbers<[1], [0], [0], [1], [0, 0, 1, 1], [], []>} : vector<32x128xf32>, vector<128x128xf32>, vector<32x128xf32> -> vector<32x128xf32>
    %97 = vector.broadcast %89 : vector<1x128xf32> to vector<32x128xf32>
    %98 = arith.addf %96, %97 : vector<32x128xf32>
    %99 = math.tanh %98 : vector<32x128xf32>
    %cst_64 = arith.constant 1.000000e-01 : f32
    %100 = vector.broadcast %cst_64 : f32 to vector<32x128xf32>
    %101 = arith.mulf %100, %99 : vector<32x128xf32>
    %102 = arith.addf %101, %94 : vector<32x128xf32>
    %103 = vector.extract_strided_slice %102 {offsets = [0, 0], sizes = [32, 1], strides = [1, 1]} : vector<32x128xf32> to vector<32x1xf32>
    %c0_65 = arith.constant 0 : index
    %c0_66 = arith.constant 0 : index
    %104 = vector.load %arg26[%c0_65, %c0_66] : memref<32x1xf32, #tpu.memory_space<vmem>>, vector<32x1xf32>
    tpu.vector_store %arg26[%c0_65, %c0_66], %103 {strides = array<i32>} : memref<32x1xf32, #tpu.memory_space<vmem>>, vector<32x1xf32>,
    return
  }
  func.func @transform_0(%arg0: i32) -> (i32, i32) {
    %c0_i32 = arith.constant 0 : i32
    %c0_i32_0 = arith.constant 0 : i32
    return %arg0, %c0_i32 : i32, i32
  }
  func.func @transform_1(%arg0: i32) -> (i32, i32) {
    %c0_i32 = arith.constant 0 : i32
    %c0_i32_0 = arith.constant 0 : i32
    %c0_i32_1 = arith.constant 0 : i32
    return %c0_i32, %c0_i32_0 : i32, i32
  }
  func.func @transform_2(%arg0: i32) -> (i32, i32) {
    %c0_i32 = arith.constant 0 : i32
    %c0_i32_0 = arith.constant 0 : i32
    %c0_i32_1 = arith.constant 0 : i32
    return %c0_i32, %c0_i32_0 : i32, i32
  }
  func.func @transform_3(%arg0: i32) -> (i32, i32) {
    %c0_i32 = arith.constant 0 : i32
    %c0_i32_0 = arith.constant 0 : i32
    %c0_i32_1 = arith.constant 0 : i32
    return %c0_i32, %c0_i32_0 : i32, i32
  }
  func.func @transform_4(%arg0: i32) -> (i32, i32) {
    %c0_i32 = arith.constant 0 : i32
    %c0_i32_0 = arith.constant 0 : i32
    %c0_i32_1 = arith.constant 0 : i32
    return %c0_i32, %c0_i32_0 : i32, i32
  }
  func.func @transform_5(%arg0: i32) -> (i32, i32) {
    %c0_i32 = arith.constant 0 : i32
    %c0_i32_0 = arith.constant 0 : i32
    %c0_i32_1 = arith.constant 0 : i32
    return %c0_i32, %c0_i32_0 : i32, i32
  }
  func.func @transform_6(%arg0: i32) -> (i32, i32) {
    %c0_i32 = arith.constant 0 : i32
    %c0_i32_0 = arith.constant 0 : i32
    %c0_i32_1 = arith.constant 0 : i32
    return %c0_i32, %c0_i32_0 : i32, i32
  }
  func.func @transform_7(%arg0: i32) -> (i32, i32) {
    %c0_i32 = arith.constant 0 : i32
    %c0_i32_0 = arith.constant 0 : i32
    %c0_i32_1 = arith.constant 0 : i32
    return %c0_i32, %c0_i32_0 : i32, i32
  }
  func.func @transform_8(%arg0: i32) -> (i32, i32) {
    %c0_i32 = arith.constant 0 : i32
    %c0_i32_0 = arith.constant 0 : i32
    %c0_i32_1 = arith.constant 0 : i32
    return %c0_i32, %c0_i32_0 : i32, i32
  }
  func.func @transform_9(%arg0: i32) -> (i32, i32) {
    %c0_i32 = arith.constant 0 : i32
    %c0_i32_0 = arith.constant 0 : i32
    %c0_i32_1 = arith.constant 0 : i32
    return %c0_i32, %c0_i32_0 : i32, i32
  }
  func.func @transform_10(%arg0: i32) -> (i32, i32) {
    %c0_i32 = arith.constant 0 : i32
    %c0_i32_0 = arith.constant 0 : i32
    %c0_i32_1 = arith.constant 0 : i32
    return %c0_i32, %c0_i32_0 : i32, i32
  }
  func.func @transform_11(%arg0: i32) -> (i32, i32) {
    %c0_i32 = arith.constant 0 : i32
    %c0_i32_0 = arith.constant 0 : i32
    %c0_i32_1 = arith.constant 0 : i32
    return %c0_i32, %c0_i32_0 : i32, i32
  }
  func.func @transform_12(%arg0: i32) -> (i32, i32) {
    %c0_i32 = arith.constant 0 : i32
    %c0_i32_0 = arith.constant 0 : i32
    %c0_i32_1 = arith.constant 0 : i32
    return %c0_i32, %c0_i32_0 : i32, i32
  }
  func.func @transform_13(%arg0: i32) -> (i32, i32) {
    %c0_i32 = arith.constant 0 : i32
    %c0_i32_0 = arith.constant 0 : i32
    %c0_i32_1 = arith.constant 0 : i32
    return %c0_i32, %c0_i32_0 : i32, i32
  }
  func.func @transform_14(%arg0: i32) -> (i32, i32) {
    %c0_i32 = arith.constant 0 : i32
    %c0_i32_0 = arith.constant 0 : i32
    %c0_i32_1 = arith.constant 0 : i32
    return %c0_i32, %c0_i32_0 : i32, i32
  }
  func.func @transform_15(%arg0: i32) -> (i32, i32) {
    %c0_i32 = arith.constant 0 : i32
    %c0_i32_0 = arith.constant 0 : i32
    %c0_i32_1 = arith.constant 0 : i32
    return %c0_i32, %c0_i32_0 : i32, i32
  }
  func.func @transform_16(%arg0: i32) -> (i32, i32) {
    %c0_i32 = arith.constant 0 : i32
    %c0_i32_0 = arith.constant 0 : i32
    %c0_i32_1 = arith.constant 0 : i32
    return %c0_i32, %c0_i32_0 : i32, i32
  }
  func.func @transform_17(%arg0: i32) -> (i32, i32) {
    %c0_i32 = arith.constant 0 : i32
    %c0_i32_0 = arith.constant 0 : i32
    %c0_i32_1 = arith.constant 0 : i32
    return %c0_i32, %c0_i32_0 : i32, i32
  }
  func.func @transform_18(%arg0: i32) -> (i32, i32) {
    %c0_i32 = arith.constant 0 : i32
    %c0_i32_0 = arith.constant 0 : i32
    %c0_i32_1 = arith.constant 0 : i32
    return %c0_i32, %c0_i32_0 : i32, i32
  }
  func.func @transform_19(%arg0: i32) -> (i32, i32) {
    %c0_i32 = arith.constant 0 : i32
    %c0_i32_0 = arith.constant 0 : i32
    %c0_i32_1 = arith.constant 0 : i32
    return %c0_i32, %c0_i32_0 : i32, i32
  }
  func.func @transform_20(%arg0: i32) -> (i32, i32) {
    %c0_i32 = arith.constant 0 : i32
    %c0_i32_0 = arith.constant 0 : i32
    %c0_i32_1 = arith.constant 0 : i32
    return %c0_i32, %c0_i32_0 : i32, i32
  }
  func.func @transform_21(%arg0: i32) -> (i32, i32) {
    %c0_i32 = arith.constant 0 : i32
    %c0_i32_0 = arith.constant 0 : i32
    %c0_i32_1 = arith.constant 0 : i32
    return %c0_i32, %c0_i32_0 : i32, i32
  }
  func.func @transform_22(%arg0: i32) -> (i32, i32) {
    %c0_i32 = arith.constant 0 : i32
    %c0_i32_0 = arith.constant 0 : i32
    %c0_i32_1 = arith.constant 0 : i32
    return %c0_i32, %c0_i32_0 : i32, i32
  }
  func.func @transform_23(%arg0: i32) -> (i32, i32) {
    %c0_i32 = arith.constant 0 : i32
    %c0_i32_0 = arith.constant 0 : i32
    %c0_i32_1 = arith.constant 0 : i32
    return %c0_i32, %c0_i32_0 : i32, i32
  }
  func.func @transform_24(%arg0: i32) -> (i32, i32) {
    %c0_i32 = arith.constant 0 : i32
    %c0_i32_0 = arith.constant 0 : i32
    %c0_i32_1 = arith.constant 0 : i32
    return %c0_i32, %c0_i32_0 : i32, i32
  }
  func.func @transform_25(%arg0: i32) -> (i32, i32) {
    %c0_i32 = arith.constant 0 : i32
    %c0_i32_0 = arith.constant 0 : i32
    return %arg0, %c0_i32 : i32, i32
  }
}

</mosaic_0001>

<llo_original>
// kernel: pinn_forward.1
$region0: #{pinn_forward.1}
  #allocation0 [shape = 'u32[]', space=smem, size = 0x4, offset = 0x4, fixed_abs, tag = 'smem constant byte address 0x4 - core index']
  #allocation1 [shape = 'u32[144,128]{1,0:T(1,128)}', space=vmem, size = 0x12000, scoped, tag = 'internal scratch']
  %s0 = inlined_call_operand.vmem [shape: f32[64,1], index: 0, kind: input, shape index: {}]
  %s1 = inlined_call_operand.hbm [shape: f32[1,256], index: 1, kind: input, shape index: {}]
  %s2 = inlined_call_operand.hbm [shape: f32[1,256], index: 2, kind: input, shape index: {}]
  %s3 = inlined_call_operand.hbm [shape: f32[128,128], index: 3, kind: input, shape index: {}]
  %s4 = inlined_call_operand.vmem [shape: f32[1,128], index: 4, kind: input, shape index: {}]
  %s5 = inlined_call_operand.hbm [shape: f32[128,256], index: 5, kind: input, shape index: {}]
  %s6 = inlined_call_operand.hbm [shape: f32[1,256], index: 6, kind: input, shape index: {}]
  %s7 = inlined_call_operand.hbm [shape: f32[128,128], index: 7, kind: input, shape index: {}]
  %s8 = inlined_call_operand.hbm [shape: f32[1,128], index: 8, kind: input, shape index: {}]
  %s9 = inlined_call_operand.hbm [shape: f32[128,256], index: 9, kind: input, shape index: {}]
  %s10 = inlined_call_operand.hbm [shape: f32[1,256], index: 10, kind: input, shape index: {}]
  %s11 = inlined_call_operand.hbm [shape: f32[128,128], index: 11, kind: input, shape index: {}]
  %s12 = inlined_call_operand.hbm [shape: f32[1,128], index: 12, kind: input, shape index: {}]
  %s13 = inlined_call_operand.hbm [shape: f32[128,256], index: 13, kind: input, shape index: {}]
  %s14 = inlined_call_operand.hbm [shape: f32[1,256], index: 14, kind: input, shape index: {}]
  %s15 = inlined_call_operand.hbm [shape: f32[128,128], index: 15, kind: input, shape index: {}]
  %s16 = inlined_call_operand.hbm [shape: f32[1,128], index: 16, kind: input, shape index: {}]
  %s17 = inlined_call_operand.vmem [shape: f32[128,128], index: 17, kind: input, shape index: {}]
  %s18 = inlined_call_operand.vmem [shape: f32[1,128], index: 18, kind: input, shape index: {}]
  %s19 = inlined_call_operand.hbm [shape: f32[128,128], index: 19, kind: input, shape index: {}]
  %s20 = inlined_call_operand.vmem [shape: f32[1,128], index: 20, kind: input, shape index: {}]
  %s21 = inlined_call_operand.hbm [shape: f32[128,256], index: 21, kind: input, shape index: {}]
  %s22 = inlined_call_operand.vmem [shape: f32[1,256], index: 22, kind: input, shape index: {}]
  %s23 = inlined_call_operand.hbm [shape: f32[128,128], index: 23, kind: input, shape index: {}]
  %s24 = inlined_call_operand.vmem [shape: f32[1,128], index: 24, kind: input, shape index: {}]
  %s25 = inlined_call_operand.vmem [shape: f32[64,1], index: 25, kind: output, shape index: {}]
  %s26 = sld [smem:[#allocation0]]
  $region205: #{pinn_forward.1} parent=0
    _
  %s28 = ssub.s32 1, %s26
  %s29 = scalar_select 0, %s28, %s26
  $region1: #{pinn_forward.1} parent=0
    #allocation2 [shape = 'u8[1024]{0}', space=vmem, size = 0x400, scoped, tag = 'input window, operand 1, single buffered']
    #allocation3 [shape = 's32[2]{0}', space=sflag, size = 0x8, scoped, tag = 'scoped memory for pinn_forward.1']
    #allocation4 [shape = 'u8[1024]{0}', space=vmem, size = 0x400, scoped, tag = 'input window, operand 2, single buffered']
    #allocation5 [shape = 's32[1]{0}', space=sflag, size = 0x4, scoped, tag = 'scoped memory for pinn_forward.1']
    #allocation6 [shape = 'u8[65536]{0}', space=vmem, size = 0x10000, scoped, tag = 'input window, operand 3, single buffered']
    #allocation7 [shape = 'u8[131072]{0}', space=vmem, size = 0x20000, scoped, tag = 'input window, operand 5, single buffered']
    #allocation8 [shape = 's32[1]{0}', space=sflag, size = 0x4, scoped, tag = 'scoped memory for pinn_forward.1']
    #allocation9 [shape = 'u8[1024]{0}', space=vmem, size = 0x400, scoped, tag = 'input window, operand 6, single buffered']
    #allocation10 [shape = 'u8[65536]{0}', space=vmem, size = 0x10000, scoped, tag = 'input window, operand 7, single buffered']
    #allocation11 [shape = 's32[1]{0}', space=sflag, size = 0x4, scoped, tag = 'scoped memory for pinn_forward.1']
    #allocation12 [shape = 'u8[512]{0}', space=vmem, size = 0x400, scoped, tag = 'input window, operand 8, single buffered']
    #allocation13 [shape = 'u8[131072]{0}', space=vmem, size = 0x20000, scoped, tag = 'input window, operand 9, single buffered']
    #allocation14 [shape = 's32[1]{0}', space=sflag, size = 0x4, scoped, tag = 'scoped memory for pinn_forward.1']
    #allocation15 [shape = 'u8[1024]{0}', space=vmem, size = 0x400, scoped, tag = 'input window, operand 10, single buffered']
    #allocation16 [shape = 'u8[65536]{0}', space=vmem, size = 0x10000, scoped, tag = 'input window, operand 11, single buffered']
    #allocation17 [shape = 's32[1]{0}', space=sflag, size = 0x4, scoped, tag = 'scoped memory for pinn_forward.1']
    #allocation18 [shape = 'u8[512]{0}', space=vmem, size = 0x400, scoped, tag = 'input window, operand 12, single buffered']
    #allocation19 [shape = 'u8[131072]{0}', space=vmem, size = 0x20000, scoped, tag = 'input window, operand 13, single buffered']
    #allocation20 [shape = 's32[1]{0}', space=sflag, size = 0x4, scoped, tag = 'scoped memory for pinn_forward.1']
    #allocation21 [shape = 'u8[1024]{0}', space=vmem, size = 0x400, scoped, tag = 'input window, operand 14, single buffered']
    #allocation22 [shape = 'u8[65536]{0}', space=vmem, size = 0x10000, scoped, tag = 'input window, operand 15, single buffered']
    #allocation23 [shape = 's32[1]{0}', space=sflag, size = 0x4, scoped, tag = 'scoped memory for pinn_forward.1']
    #allocation24 [shape = 'u8[512]{0}', space=vmem, size = 0x400, scoped, tag = 'input window, operand 16, single buffered']
    #allocation25 [shape = 'u8[65536]{0}', space=vmem, size = 0x10000, scoped, tag = 'input window, operand 19, single buffered']
    #allocation26 [shape = 's32[1]{0}', space=sflag, size = 0x4, scoped, tag = 'scoped memory for pinn_forward.1']
    #allocation27 [shape = 'u8[131072]{0}', space=vmem, size = 0x20000, scoped, tag = 'input window, operand 21, single buffered']
    #allocation28 [shape = 'u8[65536]{0}', space=vmem, size = 0x10000, scoped, tag = 'input window, operand 23, single buffered']
    #allocation29 [shape = 's32[1]{0}', space=sflag, size = 0x4, scoped, tag = 'scoped memory for pinn_forward.1']
    %30 = vsyncpa [#allocation3], 0
    %31 = vsyncpa [#allocation5], 0
    %32 = vsyncpa [#allocation8], 0
    %33 = vsyncpa [#allocation11], 0
    %34 = vsyncpa [#allocation14], 0
    %35 = vsyncpa [#allocation17], 0
    %36 = vsyncpa [#allocation20], 0
    %37 = vsyncpa [#allocation23], 0
    %38 = vsyncpa [#allocation26], 0
    %39 = vsyncpa [#allocation29], 0
    loop: start=0, step=1, limit=4
    $region2: #{pinn_forward.1} parent=1 // loop_pre_header
      _
    $region3: #{pinn_forward.1} parent=1 // loop_header
      %s41 = sphi 0, %s45
      %p42 = scmp.ge.s32.totalorder %s41, 4
      %s51 = sphi 0, %s53
      %s54 = sphi 0, %s51
      %s55 = sphi 0, %s54
      %s71 = sphi 0, %s55
      %s75 = sphi 0, %s75
      %s77 = sphi 0, %s75
      %s78 = sphi 0, %s77
      %s92 = sphi 0, %s78
      %s96 = sphi 0, %s96
      %s98 = sphi 0, %s96
      %s99 = sphi 0, %s98
      %s113 = sphi 0, %s99
      %s117 = sphi 0, %s117
      %s119 = sphi 0, %s117
      %s120 = sphi 0, %s119
      %s134 = sphi 0, %s120
      %s138 = sphi 0, %s138
      %s140 = sphi 0, %s138
      %s141 = sphi 0, %s140
      %s155 = sphi 0, %s141
      %s159 = sphi 0, %s159
      %s161 = sphi 0, %s159
      %s162 = sphi 0, %s161
      %s176 = sphi 0, %s162
      %s180 = sphi 0, %s180
      %s182 = sphi 0, %s180
      %s183 = sphi 0, %s182
      %s197 = sphi 0, %s183
      %s201 = sphi 0, %s201
      %s203 = sphi 0, %s201
      %s204 = sphi 0, %s203
      %s218 = sphi 0, %s204
      %s222 = sphi 0, %s222
      %s224 = sphi 0, %s222
      %s225 = sphi 0, %s224
      %s239 = sphi 0, %s225
      %s243 = sphi 0, %s243
      %s245 = sphi 0, %s243
      %s246 = sphi 0, %s245
      %s260 = sphi 0, %s246
      %s264 = sphi 0, %s264
      %s266 = sphi 0, %s264
      %s267 = sphi 0, %s266
      %s281 = sphi 0, %s267
      %s285 = sphi 0, %s285
      %s287 = sphi 0, %s285
      %s288 = sphi 0, %s287
      %s302 = sphi 0, %s288
      %s306 = sphi 0, %s306
      %s308 = sphi 0, %s306
      %s309 = sphi 0, %s308
      %s323 = sphi 0, %s309
      %s327 = sphi 0, %s327
      %s329 = sphi 0, %s327
      %s330 = sphi 0, %s329
      %s344 = sphi 0, %s330
      %s348 = sphi 0, %s348
      %s350 = sphi 0, %s348
      %s351 = sphi 0, %s350
      %s365 = sphi 0, %s351
      %s369 = sphi 0, %s369
      %s371 = sphi 0, %s369
      %s372 = sphi 0, %s371
      %s386 = sphi 0, %s372
      %s390 = sphi 0, %s390
      %s392 = sphi 0, %s390
      %s393 = sphi 0, %s392
      %s407 = sphi 0, %s393
      %s411 = sphi 0, %s411
      %s413 = sphi 0, %s411
      %s414 = sphi 0, %s413
      %s428 = sphi 0, %s414
      %s432 = sphi 0, %s432
      %s434 = sphi 0, %s432
      %s435 = sphi 0, %s434
      %s449 = sphi 0, %s435
      %s453 = sphi 0, %s453
      %s455 = sphi 0, %s453
      %s456 = sphi 0, %s455
      %s470 = sphi 0, %s456
      %s474 = sphi 0, %s474
      %s476 = sphi 0, %s474
      %s477 = sphi 0, %s476
      %s491 = sphi 0, %s477
      %s495 = sphi 0, %s495
      %s497 = sphi 0, %s495
      %s498 = sphi 0, %s497
      %s512 = sphi 0, %s498
      %s516 = sphi 0, %s516
      %s518 = sphi 0, %s516
      %s519 = sphi 0, %s518
      %s533 = sphi 0, %s519
      %s537 = sphi 0, %s537
      %s539 = sphi 0, %s537
      %s540 = sphi 0, %s539
      %s554 = sphi 0, %s540
      %s558 = sphi 0, %s558
      %s560 = sphi 0, %s558
      %s561 = sphi 0, %s560
      %s575 = sphi 0, %s561
      %s581 = sphi 0, %s583
      %s584 = sphi 0, %s581
      %s585 = sphi 0, %s584
      %s601 = sphi 0, %s585
    $region4: #{pinn_forward.1} parent=1 // loop_header_branch
      %44 = sbr.rel (%p42) target = $region8
    $region5: #{pinn_forward.1} parent=1 // loop_body
      %s46 = ssub.s32 %s41, 1
      %s47 = ssub.s32 %s41, 2
      %s48 = sadd.s32 %s41, 1
      %s49 = ssub.s32 %s41, %s48
      %p50 = scmp.eq.s32.totalorder %s49, 0
      %s52 = sadd.s32 %s51, 1
      %s53 = scalar_select %p50, %s51, %s52
      %p56 = pneg %p50
      %p57 = scmp.eq.s32.totalorder %s41, 1
      %p58 = por %p56, %p57
      %p59 = scmp.ne.s32.totalorder %s51, %s54
      %p60 = scmp.eq.s32.totalorder %s41, 0
      %p61 = por %p59, %p60
      %p62 = scmp.ne.s32.totalorder %s51, %s54
      %p63 = scmp.eq.s32.totalorder %s46, 1
      %p64 = por %p62, %p63
      %p65 = scmp.ne.s32.totalorder %s54, %s55
      %p66 = scmp.eq.s32.totalorder %s46, 0
      %p67 = por %p65, %p66
      %p68 = scmp.ne.s32.totalorder %s54, %s55
      %p69 = scmp.eq.s32.totalorder %s47, 1
      %p70 = por %p68, %p69
      %p72 = scmp.ne.s32.totalorder %s55, %s71
      %p73 = scmp.eq.s32.totalorder %s47, 0
      %p74 = por %p72, %p73
      %s76 = sadd.s32 %s75, 1
      %p79 = scmp.eq.s32.totalorder %s41, 1
      %p80 = scmp.ne.s32.totalorder %s75, %s77
      %p81 = scmp.eq.s32.totalorder %s41, 0
      %p82 = por %p80, %p81
      %p83 = scmp.ne.s32.totalorder %s75, %s77
      %p84 = scmp.eq.s32.totalorder %s46, 1
      %p85 = por %p83, %p84
      %p86 = scmp.ne.s32.totalorder %s77, %s78
      %p87 = scmp.eq.s32.totalorder %s46, 0
      %p88 = por %p86, %p87
      %p89 = scmp.ne.s32.totalorder %s77, %s78
      %p90 = scmp.eq.s32.totalorder %s47, 1
      %p91 = por %p89, %p90
      %p93 = scmp.ne.s32.totalorder %s78, %s92
      %p94 = scmp.eq.s32.totalorder %s47, 0
      %p95 = por %p93, %p94
      %s97 = sadd.s32 %s96, 1
      %p100 = scmp.eq.s32.totalorder %s41, 1
      %p101 = scmp.ne.s32.totalorder %s96, %s98
      %p102 = scmp.eq.s32.totalorder %s41, 0
      %p103 = por %p101, %p102
      %p104 = scmp.ne.s32.totalorder %s96, %s98
      %p105 = scmp.eq.s32.totalorder %s46, 1
      %p106 = por %p104, %p105
      %p107 = scmp.ne.s32.totalorder %s98, %s99
      %p108 = scmp.eq.s32.totalorder %s46, 0
      %p109 = por %p107, %p108
      %p110 = scmp.ne.s32.totalorder %s98, %s99
      %p111 = scmp.eq.s32.totalorder %s47, 1
      %p112 = por %p110, %p111
      %p114 = scmp.ne.s32.totalorder %s99, %s113
      %p115 = scmp.eq.s32.totalorder %s47, 0
      %p116 = por %p114, %p115
      %s118 = sadd.s32 %s117, 1
      %p121 = scmp.eq.s32.totalorder %s41, 1
      %p122 = scmp.ne.s32.totalorder %s117, %s119
      %p123 = scmp.eq.s32.totalorder %s41, 0
      %p124 = por %p122, %p123
      %p125 = scmp.ne.s32.totalorder %s117, %s119
      %p126 = scmp.eq.s32.totalorder %s46, 1
      %p127 = por %p125, %p126
      %p128 = scmp.ne.s32.totalorder %s119, %s120
      %p129 = scmp.eq.s32.totalorder %s46, 0
      %p130 = por %p128, %p129
      %p131 = scmp.ne.s32.totalorder %s119, %s120
      %p132 = scmp.eq.s32.totalorder %s47, 1
      %p133 = por %p131, %p132
      %p135 = scmp.ne.s32.totalorder %s120, %s134
      %p136 = scmp.eq.s32.totalorder %s47, 0
      %p137 = por %p135, %p136
      %s139 = sadd.s32 %s138, 1
      %p142 = scmp.eq.s32.totalorder %s41, 1
      %p143 = scmp.ne.s32.totalorder %s138, %s140
      %p144 = scmp.eq.s32.totalorder %s41, 0
      %p145 = por %p143, %p144
      %p146 = scmp.ne.s32.totalorder %s138, %s140
      %p147 = scmp.eq.s32.totalorder %s46, 1
      %p148 = por %p146, %p147
      %p149 = scmp.ne.s32.totalorder %s140, %s141
      %p150 = scmp.eq.s32.totalorder %s46, 0
      %p151 = por %p149, %p150
      %p152 = scmp.ne.s32.totalorder %s140, %s141
      %p153 = scmp.eq.s32.totalorder %s47, 1
      %p154 = por %p152, %p153
      %p156 = scmp.ne.s32.totalorder %s141, %s155
      %p157 = scmp.eq.s32.totalorder %s47, 0
      %p158 = por %p156, %p157
      %s160 = sadd.s32 %s159, 1
      %p163 = scmp.eq.s32.totalorder %s41, 1
      %p164 = scmp.ne.s32.totalorder %s159, %s161
      %p165 = scmp.eq.s32.totalorder %s41, 0
      %p166 = por %p164, %p165
      %p167 = scmp.ne.s32.totalorder %s159, %s161
      %p168 = scmp.eq.s32.totalorder %s46, 1
      %p169 = por %p167, %p168
      %p170 = scmp.ne.s32.totalorder %s161, %s162
      %p171 = scmp.eq.s32.totalorder %s46, 0
      %p172 = por %p170, %p171
      %p173 = scmp.ne.s32.totalorder %s161, %s162
      %p174 = scmp.eq.s32.totalorder %s47, 1
      %p175 = por %p173, %p174
      %p177 = scmp.ne.s32.totalorder %s162, %s176
      %p178 = scmp.eq.s32.totalorder %s47, 0
      %p179 = por %p177, %p178
      %s181 = sadd.s32 %s180, 1
      %p184 = scmp.eq.s32.totalorder %s41, 1
      %p185 = scmp.ne.s32.totalorder %s180, %s182
      %p186 = scmp.eq.s32.totalorder %s41, 0
      %p187 = por %p185, %p186
      %p188 = scmp.ne.s32.totalorder %s180, %s182
      %p189 = scmp.eq.s32.totalorder %s46, 1
      %p190 = por %p188, %p189
      %p191 = scmp.ne.s32.totalorder %s182, %s183
      %p192 = scmp.eq.s32.totalorder %s46, 0
      %p193 = por %p191, %p192
      %p194 = scmp.ne.s32.totalorder %s182, %s183
      %p195 = scmp.eq.s32.totalorder %s47, 1
      %p196 = por %p194, %p195
      %p198 = scmp.ne.s32.totalorder %s183, %s197
      %p199 = scmp.eq.s32.totalorder %s47, 0
      %p200 = por %p198, %p199
      %s202 = sadd.s32 %s201, 1
      %p205 = scmp.eq.s32.totalorder %s41, 1
      %p206 = scmp.ne.s32.totalorder %s201, %s203
      %p207 = scmp.eq.s32.totalorder %s41, 0
      %p208 = por %p206, %p207
      %p209 = scmp.ne.s32.totalorder %s201, %s203
      %p210 = scmp.eq.s32.totalorder %s46, 1
      %p211 = por %p209, %p210
      %p212 = scmp.ne.s32.totalorder %s203, %s204
      %p213 = scmp.eq.s32.totalorder %s46, 0
      %p214 = por %p212, %p213
      %p215 = scmp.ne.s32.totalorder %s203, %s204
      %p216 = scmp.eq.s32.totalorder %s47, 1
      %p217 = por %p215, %p216
      %p219 = scmp.ne.s32.totalorder %s204, %s218
      %p220 = scmp.eq.s32.totalorder %s47, 0
      %p221 = por %p219, %p220
      %s223 = sadd.s32 %s222, 1
      %p226 = scmp.eq.s32.totalorder %s41, 1
      %p227 = scmp.ne.s32.totalorder %s222, %s224
      %p228 = scmp.eq.s32.totalorder %s41, 0
      %p229 = por %p227, %p228
      %p230 = scmp.ne.s32.totalorder %s222, %s224
      %p231 = scmp.eq.s32.totalorder %s46, 1
      %p232 = por %p230, %p231
      %p233 = scmp.ne.s32.totalorder %s224, %s225
      %p234 = scmp.eq.s32.totalorder %s46, 0
      %p235 = por %p233, %p234
      %p236 = scmp.ne.s32.totalorder %s224, %s225
      %p237 = scmp.eq.s32.totalorder %s47, 1
      %p238 = por %p236, %p237
      %p240 = scmp.ne.s32.totalorder %s225, %s239
      %p241 = scmp.eq.s32.totalorder %s47, 0
      %p242 = por %p240, %p241
      %s244 = sadd.s32 %s243, 1
      %p247 = scmp.eq.s32.totalorder %s41, 1
      %p248 = scmp.ne.s32.totalorder %s243, %s245
      %p249 = scmp.eq.s32.totalorder %s41, 0
      %p250 = por %p248, %p249
      %p251 = scmp.ne.s32.totalorder %s243, %s245
      %p252 = scmp.eq.s32.totalorder %s46, 1
      %p253 = por %p251, %p252
      %p254 = scmp.ne.s32.totalorder %s245, %s246
      %p255 = scmp.eq.s32.totalorder %s46, 0
      %p256 = por %p254, %p255
      %p257 = scmp.ne.s32.totalorder %s245, %s246
      %p258 = scmp.eq.s32.totalorder %s47, 1
      %p259 = por %p257, %p258
      %p261 = scmp.ne.s32.totalorder %s246, %s260
      %p262 = scmp.eq.s32.totalorder %s47, 0
      %p263 = por %p261, %p262
      %s265 = sadd.s32 %s264, 1
      %p268 = scmp.eq.s32.totalorder %s41, 1
      %p269 = scmp.ne.s32.totalorder %s264, %s266
      %p270 = scmp.eq.s32.totalorder %s41, 0
      %p271 = por %p269, %p270
      %p272 = scmp.ne.s32.totalorder %s264, %s266
      %p273 = scmp.eq.s32.totalorder %s46, 1
      %p274 = por %p272, %p273
      %p275 = scmp.ne.s32.totalorder %s266, %s267
      %p276 = scmp.eq.s32.totalorder %s46, 0
      %p277 = por %p275, %p276
      %p278 = scmp.ne.s32.totalorder %s266, %s267
      %p279 = scmp.eq.s32.totalorder %s47, 1
      %p280 = por %p278, %p279
      %p282 = scmp.ne.s32.totalorder %s267, %s281
      %p283 = scmp.eq.s32.totalorder %s47, 0
      %p284 = por %p282, %p283
      %s286 = sadd.s32 %s285, 1
      %p289 = scmp.eq.s32.totalorder %s41, 1
      %p290 = scmp.ne.s32.totalorder %s285, %s287
      %p291 = scmp.eq.s32.totalorder %s41, 0
      %p292 = por %p290, %p291
      %p293 = scmp.ne.s32.totalorder %s285, %s287
      %p294 = scmp.eq.s32.totalorder %s46, 1
      %p295 = por %p293, %p294
      %p296 = scmp.ne.s32.totalorder %s287, %s288
      %p297 = scmp.eq.s32.totalorder %s46, 0
      %p298 = por %p296, %p297
      %p299 = scmp.ne.s32.totalorder %s287, %s288
      %p300 = scmp.eq.s32.totalorder %s47, 1
      %p301 = por %p299, %p300
      %p303 = scmp.ne.s32.totalorder %s288, %s302
      %p304 = scmp.eq.s32.totalorder %s47, 0
      %p305 = por %p303, %p304
      %s307 = sadd.s32 %s306, 1
      %p310 = scmp.eq.s32.totalorder %s41, 1
      %p311 = scmp.ne.s32.totalorder %s306, %s308
      %p312 = scmp.eq.s32.totalorder %s41, 0
      %p313 = por %p311, %p312
      %p314 = scmp.ne.s32.totalorder %s306, %s308
      %p315 = scmp.eq.s32.totalorder %s46, 1
      %p316 = por %p314, %p315
      %p317 = scmp.ne.s32.totalorder %s308, %s309
      %p318 = scmp.eq.s32.totalorder %s46, 0
      %p319 = por %p317, %p318
      %p320 = scmp.ne.s32.totalorder %s308, %s309
      %p321 = scmp.eq.s32.totalorder %s47, 1
      %p322 = por %p320, %p321
      %p324 = scmp.ne.s32.totalorder %s309, %s323
      %p325 = scmp.eq.s32.totalorder %s47, 0
      %p326 = por %p324, %p325
      %s328 = sadd.s32 %s327, 1
      %p331 = scmp.eq.s32.totalorder %s41, 1
      %p332 = scmp.ne.s32.totalorder %s327, %s329
      %p333 = scmp.eq.s32.totalorder %s41, 0
      %p334 = por %p332, %p333
      %p335 = scmp.ne.s32.totalorder %s327, %s329
      %p336 = scmp.eq.s32.totalorder %s46, 1
      %p337 = por %p335, %p336
      %p338 = scmp.ne.s32.totalorder %s329, %s330
      %p339 = scmp.eq.s32.totalorder %s46, 0
      %p340 = por %p338, %p339
      %p341 = scmp.ne.s32.totalorder %s329, %s330
      %p342 = scmp.eq.s32.totalorder %s47, 1
      %p343 = por %p341, %p342
      %p345 = scmp.ne.s32.totalorder %s330, %s344
      %p346 = scmp.eq.s32.totalorder %s47, 0
      %p347 = por %p345, %p346
      %s349 = sadd.s32 %s348, 1
      %p352 = scmp.eq.s32.totalorder %s41, 1
      %p353 = scmp.ne.s32.totalorder %s348, %s350
      %p354 = scmp.eq.s32.totalorder %s41, 0
      %p355 = por %p353, %p354
      %p356 = scmp.ne.s32.totalorder %s348, %s350
      %p357 = scmp.eq.s32.totalorder %s46, 1
      %p358 = por %p356, %p357
      %p359 = scmp.ne.s32.totalorder %s350, %s351
      %p360 = scmp.eq.s32.totalorder %s46, 0
      %p361 = por %p359, %p360
      %p362 = scmp.ne.s32.totalorder %s350, %s351
      %p363 = scmp.eq.s32.totalorder %s47, 1
      %p364 = por %p362, %p363
      %p366 = scmp.ne.s32.totalorder %s351, %s365
      %p367 = scmp.eq.s32.totalorder %s47, 0
      %p368 = por %p366, %p367
      %s370 = sadd.s32 %s369, 1
      %p373 = scmp.eq.s32.totalorder %s41, 1
      %p374 = scmp.ne.s32.totalorder %s369, %s371
      %p375 = scmp.eq.s32.totalorder %s41, 0
      %p376 = por %p374, %p375
      %p377 = scmp.ne.s32.totalorder %s369, %s371
      %p378 = scmp.eq.s32.totalorder %s46, 1
      %p379 = por %p377, %p378
      %p380 = scmp.ne.s32.totalorder %s371, %s372
      %p381 = scmp.eq.s32.totalorder %s46, 0
      %p382 = por %p380, %p381
      %p383 = scmp.ne.s32.totalorder %s371, %s372
      %p384 = scmp.eq.s32.totalorder %s47, 1
      %p385 = por %p383, %p384
      %p387 = scmp.ne.s32.totalorder %s372, %s386
      %p388 = scmp.eq.s32.totalorder %s47, 0
      %p389 = por %p387, %p388
      %s391 = sadd.s32 %s390, 1
      %p394 = scmp.eq.s32.totalorder %s41, 1
      %p395 = scmp.ne.s32.totalorder %s390, %s392
      %p396 = scmp.eq.s32.totalorder %s41, 0
      %p397 = por %p395, %p396
      %p398 = scmp.ne.s32.totalorder %s390, %s392
      %p399 = scmp.eq.s32.totalorder %s46, 1
      %p400 = por %p398, %p399
      %p401 = scmp.ne.s32.totalorder %s392, %s393
      %p402 = scmp.eq.s32.totalorder %s46, 0
      %p403 = por %p401, %p402
      %p404 = scmp.ne.s32.totalorder %s392, %s393
      %p405 = scmp.eq.s32.totalorder %s47, 1
      %p406 = por %p404, %p405
      %p408 = scmp.ne.s32.totalorder %s393, %s407
      %p409 = scmp.eq.s32.totalorder %s47, 0
      %p410 = por %p408, %p409
      %s412 = sadd.s32 %s411, 1
      %p415 = scmp.eq.s32.totalorder %s41, 1
      %p416 = scmp.ne.s32.totalorder %s411, %s413
      %p417 = scmp.eq.s32.totalorder %s41, 0
      %p418 = por %p416, %p417
      %p419 = scmp.ne.s32.totalorder %s411, %s413
      %p420 = scmp.eq.s32.totalorder %s46, 1
      %p421 = por %p419, %p420
      %p422 = scmp.ne.s32.totalorder %s413, %s414
      %p423 = scmp.eq.s32.totalorder %s46, 0
      %p424 = por %p422, %p423
      %p425 = scmp.ne.s32.totalorder %s413, %s414
      %p426 = scmp.eq.s32.totalorder %s47, 1
      %p427 = por %p425, %p426
      %p429 = scmp.ne.s32.totalorder %s414, %s428
      %p430 = scmp.eq.s32.totalorder %s47, 0
      %p431 = por %p429, %p430
      %s433 = sadd.s32 %s432, 1
      %p436 = scmp.eq.s32.totalorder %s41, 1
      %p437 = scmp.ne.s32.totalorder %s432, %s434
      %p438 = scmp.eq.s32.totalorder %s41, 0
      %p439 = por %p437, %p438
      %p440 = scmp.ne.s32.totalorder %s432, %s434
      %p441 = scmp.eq.s32.totalorder %s46, 1
      %p442 = por %p440, %p441
      %p443 = scmp.ne.s32.totalorder %s434, %s435
      %p444 = scmp.eq.s32.totalorder %s46, 0
      %p445 = por %p443, %p444
      %p446 = scmp.ne.s32.totalorder %s434, %s435
      %p447 = scmp.eq.s32.totalorder %s47, 1
      %p448 = por %p446, %p447
      %p450 = scmp.ne.s32.totalorder %s435, %s449
      %p451 = scmp.eq.s32.totalorder %s47, 0
      %p452 = por %p450, %p451
      %s454 = sadd.s32 %s453, 1
      %p457 = scmp.eq.s32.totalorder %s41, 1
      %p458 = scmp.ne.s32.totalorder %s453, %s455
      %p459 = scmp.eq.s32.totalorder %s41, 0
      %p460 = por %p458, %p459
      %p461 = scmp.ne.s32.totalorder %s453, %s455
      %p462 = scmp.eq.s32.totalorder %s46, 1
      %p463 = por %p461, %p462
      %p464 = scmp.ne.s32.totalorder %s455, %s456
      %p465 = scmp.eq.s32.totalorder %s46, 0
      %p466 = por %p464, %p465
      %p467 = scmp.ne.s32.totalorder %s455, %s456
      %p468 = scmp.eq.s32.totalorder %s47, 1
      %p469 = por %p467, %p468
      %p471 = scmp.ne.s32.totalorder %s456, %s470
      %p472 = scmp.eq.s32.totalorder %s47, 0
      %p473 = por %p471, %p472
      %s475 = sadd.s32 %s474, 1
      %p478 = scmp.eq.s32.totalorder %s41, 1
      %p479 = scmp.ne.s32.totalorder %s474, %s476
      %p480 = scmp.eq.s32.totalorder %s41, 0
      %p481 = por %p479, %p480
      %p482 = scmp.ne.s32.totalorder %s474, %s476
      %p483 = scmp.eq.s32.totalorder %s46, 1
      %p484 = por %p482, %p483
      %p485 = scmp.ne.s32.totalorder %s476, %s477
      %p486 = scmp.eq.s32.totalorder %s46, 0
      %p487 = por %p485, %p486
      %p488 = scmp.ne.s32.totalorder %s476, %s477
      %p489 = scmp.eq.s32.totalorder %s47, 1
      %p490 = por %p488, %p489
      %p492 = scmp.ne.s32.totalorder %s477, %s491
      %p493 = scmp.eq.s32.totalorder %s47, 0
      %p494 = por %p492, %p493
      %s496 = sadd.s32 %s495, 1
      %p499 = scmp.eq.s32.totalorder %s41, 1
      %p500 = scmp.ne.s32.totalorder %s495, %s497
      %p501 = scmp.eq.s32.totalorder %s41, 0
      %p502 = por %p500, %p501
      %p503 = scmp.ne.s32.totalorder %s495, %s497
      %p504 = scmp.eq.s32.totalorder %s46, 1
      %p505 = por %p503, %p504
      %p506 = scmp.ne.s32.totalorder %s497, %s498
      %p507 = scmp.eq.s32.totalorder %s46, 0
      %p508 = por %p506, %p507
      %p509 = scmp.ne.s32.totalorder %s497, %s498
      %p510 = scmp.eq.s32.totalorder %s47, 1
      %p511 = por %p509, %p510
      %p513 = scmp.ne.s32.totalorder %s498, %s512
      %p514 = scmp.eq.s32.totalorder %s47, 0
      %p515 = por %p513, %p514
      %s517 = sadd.s32 %s516, 1
      %p520 = scmp.eq.s32.totalorder %s41, 1
      %p521 = scmp.ne.s32.totalorder %s516, %s518
      %p522 = scmp.eq.s32.totalorder %s41, 0
      %p523 = por %p521, %p522
      %p524 = scmp.ne.s32.totalorder %s516, %s518
      %p525 = scmp.eq.s32.totalorder %s46, 1
      %p526 = por %p524, %p525
      %p527 = scmp.ne.s32.totalorder %s518, %s519
      %p528 = scmp.eq.s32.totalorder %s46, 0
      %p529 = por %p527, %p528
      %p530 = scmp.ne.s32.totalorder %s518, %s519
      %p531 = scmp.eq.s32.totalorder %s47, 1
      %p532 = por %p530, %p531
      %p534 = scmp.ne.s32.totalorder %s519, %s533
      %p535 = scmp.eq.s32.totalorder %s47, 0
      %p536 = por %p534, %p535
      %s538 = sadd.s32 %s537, 1
      %p541 = scmp.eq.s32.totalorder %s41, 1
      %p542 = scmp.ne.s32.totalorder %s537, %s539
      %p543 = scmp.eq.s32.totalorder %s41, 0
      %p544 = por %p542, %p543
      %p545 = scmp.ne.s32.totalorder %s537, %s539
      %p546 = scmp.eq.s32.totalorder %s46, 1
      %p547 = por %p545, %p546
      %p548 = scmp.ne.s32.totalorder %s539, %s540
      %p549 = scmp.eq.s32.totalorder %s46, 0
      %p550 = por %p548, %p549
      %p551 = scmp.ne.s32.totalorder %s539, %s540
      %p552 = scmp.eq.s32.totalorder %s47, 1
      %p553 = por %p551, %p552
      %p555 = scmp.ne.s32.totalorder %s540, %s554
      %p556 = scmp.eq.s32.totalorder %s47, 0
      %p557 = por %p555, %p556
      %s559 = sadd.s32 %s558, 1
      %p562 = scmp.eq.s32.totalorder %s41, 1
      %p563 = scmp.ne.s32.totalorder %s558, %s560
      %p564 = scmp.eq.s32.totalorder %s41, 0
      %p565 = por %p563, %p564
      %p566 = scmp.ne.s32.totalorder %s558, %s560
      %p567 = scmp.eq.s32.totalorder %s46, 1
      %p568 = por %p566, %p567
      %p569 = scmp.ne.s32.totalorder %s560, %s561
      %p570 = scmp.eq.s32.totalorder %s46, 0
      %p571 = por %p569, %p570
      %p572 = scmp.ne.s32.totalorder %s560, %s561
      %p573 = scmp.eq.s32.totalorder %s47, 1
      %p574 = por %p572, %p573
      %p576 = scmp.ne.s32.totalorder %s561, %s575
      %p577 = scmp.eq.s32.totalorder %s47, 0
      %p578 = por %p576, %p577
      %s579 = ssub.s32 %s41, %s48
      %p580 = scmp.eq.s32.totalorder %s579, 0
      %s582 = sadd.s32 %s581, 1
      %s583 = scalar_select %p580, %s581, %s582
      %p586 = pneg %p580
      %p587 = scmp.eq.s32.totalorder %s41, 1
      %p588 = por %p586, %p587
      %p589 = scmp.ne.s32.totalorder %s581, %s584
      %p590 = scmp.eq.s32.totalorder %s41, 0
      %p591 = por %p589, %p590
      %p592 = scmp.ne.s32.totalorder %s581, %s584
      %p593 = scmp.eq.s32.totalorder %s46, 1
      %p594 = por %p592, %p593
      %p595 = scmp.ne.s32.totalorder %s584, %s585
      %p596 = scmp.eq.s32.totalorder %s46, 0
      %p597 = por %p595, %p596
      %p598 = scmp.ne.s32.totalorder %s584, %s585
      %p599 = scmp.eq.s32.totalorder %s47, 1
      %p600 = por %p598, %p599
      %p602 = scmp.ne.s32.totalorder %s585, %s601
      %p603 = scmp.eq.s32.totalorder %s47, 0
      %p604 = por %p602, %p603
      %p605 = scmp.le.s32.totalorder 1, %s41
      %p606 = scmp.lt.s32.totalorder %s41, 3
      %p607 = pnand %p605, %p606
      %p608 = pneg %p607
      // Predicated region
      $region9: #{pinn_forward.1} parent=5 // pred_check
        _
      $region10: #{pinn_forward.1} parent=5 // pred_check_branch
        %610 = sbr.rel (%p607) target = $region12
      $region11: #{pinn_forward.1} parent=5 // pred_region
        %s611 = ssub.s32 %s41, 1
        // Predicated region
        $region13: #{pinn_forward.1} parent=11 // pred_check
          %p612 = pneg %p88
        $region14: #{pinn_forward.1} parent=11 // pred_check_branch
          %614 = sbr.rel (%p612) target = $region16
        $region15: #{pinn_forward.1} parent=11 // pred_region
          %s616 = ssub.s32 32, 32
          %617 = vsyncadd [#allocation3], %s616
          %s619 = sshll.u32 [#allocation2], 4
          %s620 = int_to_ptr.vmem [resolvable:$true] %s619
          %622 = dma.hbm_to_vmem [thread:$0]  %s1, 32, %s620, [#allocation3]
        $region16: #{pinn_forward.1} parent=11 // pred_fallthru
          _
        // Predicated region
        $region17: #{pinn_forward.1} parent=11 // pred_check
          %p623 = pneg %p109
        $region18: #{pinn_forward.1} parent=11 // pred_check_branch
          %625 = sbr.rel (%p623) target = $region20
        $region19: #{pinn_forward.1} parent=11 // pred_region
          %s627 = ssub.s32 32, 32
          %628 = vsyncadd [#allocation5], %s627
          %s630 = sshll.u32 [#allocation4], 4
          %s631 = int_to_ptr.vmem [resolvable:$true] %s630
          %633 = dma.hbm_to_vmem [thread:$0]  %s2, 32, %s631, [#allocation5]
        $region20: #{pinn_forward.1} parent=11 // pred_fallthru
          _
        // Predicated region
        $region21: #{pinn_forward.1} parent=11 // pred_check
          %p634 = pneg %p130
        $region22: #{pinn_forward.1} parent=11 // pred_check_branch
          %636 = sbr.rel (%p634) target = $region24
        $region23: #{pinn_forward.1} parent=11 // pred_region
          %s638 = ssub.s32 2048, 2048
          %639 = vsyncadd [#allocation5], %s638
          %s640 = sshll.u32 [#allocation6], 4
          %s641 = int_to_ptr.vmem [resolvable:$true] %s640
          %646 = dma.hbm_to_vmem [thread:$0]  %s3, 2048, %s641, [#allocation5], 128, 128, 8
        $region24: #{pinn_forward.1} parent=11 // pred_fallthru
          _
        // Predicated region
        $region25: #{pinn_forward.1} parent=11 // pred_check
          %p647 = pneg %p151
        $region26: #{pinn_forward.1} parent=11 // pred_check_branch
          %649 = sbr.rel (%p647) target = $region28
        $region27: #{pinn_forward.1} parent=11 // pred_region
          _
        $region28: #{pinn_forward.1} parent=11 // pred_fallthru
          _
        // Predicated region
        $region29: #{pinn_forward.1} parent=11 // pred_check
          %p650 = pneg %p172
        $region30: #{pinn_forward.1} parent=11 // pred_check_branch
          %652 = sbr.rel (%p650) target = $region32
        $region31: #{pinn_forward.1} parent=11 // pred_region
          %s654 = ssub.s32 4096, 4096
          %655 = vsyncadd [#allocation8], %s654
          %s656 = sshll.u32 [#allocation7], 4
          %s657 = int_to_ptr.vmem [resolvable:$true] %s656
          %662 = dma.hbm_to_vmem [thread:$0]  %s5, 4096, %s657, [#allocation8], 256, 256, 16
        $region32: #{pinn_forward.1} parent=11 // pred_fallthru
          _
        // Predicated region
        $region33: #{pinn_forward.1} parent=11 // pred_check
          %p663 = pneg %p193
        $region34: #{pinn_forward.1} parent=11 // pred_check_branch
          %665 = sbr.rel (%p663) target = $region36
        $region35: #{pinn_forward.1} parent=11 // pred_region
          %s667 = ssub.s32 32, 32
          %668 = vsyncadd [#allocation8], %s667
          %s670 = sshll.u32 [#allocation9], 4
          %s671 = int_to_ptr.vmem [resolvable:$true] %s670
          %673 = dma.hbm_to_vmem [thread:$0]  %s6, 32, %s671, [#allocation8]
        $region36: #{pinn_forward.1} parent=11 // pred_fallthru
          _
        // Predicated region
        $region37: #{pinn_forward.1} parent=11 // pred_check
          %p674 = pneg %p214
        $region38: #{pinn_forward.1} parent=11 // pred_check_branch
          %676 = sbr.rel (%p674) target = $region40
        $region39: #{pinn_forward.1} parent=11 // pred_region
          %s678 = ssub.s32 2048, 2048
          %679 = vsyncadd [#allocation11], %s678
          %s680 = sshll.u32 [#allocation10], 4
          %s681 = int_to_ptr.vmem [resolvable:$true] %s680
          %686 = dma.hbm_to_vmem [thread:$0]  %s7, 2048, %s681, [#allocation11], 128, 128, 8
        $region40: #{pinn_forward.1} parent=11 // pred_fallthru
          _
        // Predicated region
        $region41: #{pinn_forward.1} parent=11 // pred_check
          %p687 = pneg %p235
        $region42: #{pinn_forward.1} parent=11 // pred_check_branch
          %689 = sbr.rel (%p687) target = $region44
        $region43: #{pinn_forward.1} parent=11 // pred_region
          %s691 = ssub.s32 16, 16
          %692 = vsyncadd [#allocation11], %s691
          %s694 = sshll.u32 [#allocation12], 4
          %s695 = int_to_ptr.vmem [resolvable:$true] %s694
          %697 = dma.hbm_to_vmem [thread:$0]  %s8, 16, %s695, [#allocation11]
        $region44: #{pinn_forward.1} parent=11 // pred_fallthru
          _
        // Predicated region
        $region45: #{pinn_forward.1} parent=11 // pred_check
          %p698 = pneg %p256
        $region46: #{pinn_forward.1} parent=11 // pred_check_branch
          %700 = sbr.rel (%p698) target = $region48
        $region47: #{pinn_forward.1} parent=11 // pred_region
          %s702 = ssub.s32 4096, 4096
          %703 = vsyncadd [#allocation14], %s702
          %s704 = sshll.u32 [#allocation13], 4
          %s705 = int_to_ptr.vmem [resolvable:$true] %s704
          %710 = dma.hbm_to_vmem [thread:$0]  %s9, 4096, %s705, [#allocation14], 256, 256, 16
        $region48: #{pinn_forward.1} parent=11 // pred_fallthru
          _
        // Predicated region
        $region49: #{pinn_forward.1} parent=11 // pred_check
          %p711 = pneg %p277
        $region50: #{pinn_forward.1} parent=11 // pred_check_branch
          %713 = sbr.rel (%p711) target = $region52
        $region51: #{pinn_forward.1} parent=11 // pred_region
          %s715 = ssub.s32 32, 32
          %716 = vsyncadd [#allocation14], %s715
          %s718 = sshll.u32 [#allocation15], 4
          %s719 = int_to_ptr.vmem [resolvable:$true] %s718
          %721 = dma.hbm_to_vmem [thread:$0]  %s10, 32, %s719, [#allocation14]
        $region52: #{pinn_forward.1} parent=11 // pred_fallthru
          _
        // Predicated region
        $region53: #{pinn_forward.1} parent=11 // pred_check
          %p722 = pneg %p298
        $region54: #{pinn_forward.1} parent=11 // pred_check_branch
          %724 = sbr.rel (%p722) target = $region56
        $region55: #{pinn_forward.1} parent=11 // pred_region
          %s726 = ssub.s32 2048, 2048
          %727 = vsyncadd [#allocation17], %s726
          %s728 = sshll.u32 [#allocation16], 4
          %s729 = int_to_ptr.vmem [resolvable:$true] %s728
          %734 = dma.hbm_to_vmem [thread:$0]  %s11, 2048, %s729, [#allocation17], 128, 128, 8
        $region56: #{pinn_forward.1} parent=11 // pred_fallthru
          _
        // Predicated region
        $region57: #{pinn_forward.1} parent=11 // pred_check
          %p735 = pneg %p319
        $region58: #{pinn_forward.1} parent=11 // pred_check_branch
          %737 = sbr.rel (%p735) target = $region60
        $region59: #{pinn_forward.1} parent=11 // pred_region
          %s739 = ssub.s32 16, 16
          %740 = vsyncadd [#allocation17], %s739
          %s742 = sshll.u32 [#allocation18], 4
          %s743 = int_to_ptr.vmem [resolvable:$true] %s742
          %745 = dma.hbm_to_vmem [thread:$0]  %s12, 16, %s743, [#allocation17]
        $region60: #{pinn_forward.1} parent=11 // pred_fallthru
          _
        // Predicated region
        $region61: #{pinn_forward.1} parent=11 // pred_check
          %p746 = pneg %p340
        $region62: #{pinn_forward.1} parent=11 // pred_check_branch
          %748 = sbr.rel (%p746) target = $region64
        $region63: #{pinn_forward.1} parent=11 // pred_region
          %s750 = ssub.s32 4096, 4096
          %751 = vsyncadd [#allocation20], %s750
          %s752 = sshll.u32 [#allocation19], 4
          %s753 = int_to_ptr.vmem [resolvable:$true] %s752
          %758 = dma.hbm_to_vmem [thread:$0]  %s13, 4096, %s753, [#allocation20], 256, 256, 16
        $region64: #{pinn_forward.1} parent=11 // pred_fallthru
          _
        // Predicated region
        $region65: #{pinn_forward.1} parent=11 // pred_check
          %p759 = pneg %p361
        $region66: #{pinn_forward.1} parent=11 // pred_check_branch
          %761 = sbr.rel (%p759) target = $region68
        $region67: #{pinn_forward.1} parent=11 // pred_region
          %s763 = ssub.s32 32, 32
          %764 = vsyncadd [#allocation20], %s763
          %s766 = sshll.u32 [#allocation21], 4
          %s767 = int_to_ptr.vmem [resolvable:$true] %s766
          %769 = dma.hbm_to_vmem [thread:$0]  %s14, 32, %s767, [#allocation20]
        $region68: #{pinn_forward.1} parent=11 // pred_fallthru
          _
        // Predicated region
        $region69: #{pinn_forward.1} parent=11 // pred_check
          %p770 = pneg %p382
        $region70: #{pinn_forward.1} parent=11 // pred_check_branch
          %772 = sbr.rel (%p770) target = $region72
        $region71: #{pinn_forward.1} parent=11 // pred_region
          %s774 = ssub.s32 2048, 2048
          %775 = vsyncadd [#allocation23], %s774
          %s776 = sshll.u32 [#allocation22], 4
          %s777 = int_to_ptr.vmem [resolvable:$true] %s776
          %782 = dma.hbm_to_vmem [thread:$0]  %s15, 2048, %s777, [#allocation23], 128, 128, 8
        $region72: #{pinn_forward.1} parent=11 // pred_fallthru
          _
        // Predicated region
        $region73: #{pinn_forward.1} parent=11 // pred_check
          %p783 = pneg %p403
        $region74: #{pinn_forward.1} parent=11 // pred_check_branch
          %785 = sbr.rel (%p783) target = $region76
        $region75: #{pinn_forward.1} parent=11 // pred_region
          %s787 = ssub.s32 16, 16
          %788 = vsyncadd [#allocation23], %s787
          %s790 = sshll.u32 [#allocation24], 4
          %s791 = int_to_ptr.vmem [resolvable:$true] %s790
          %793 = dma.hbm_to_vmem [thread:$0]  %s16, 16, %s791, [#allocation23]
        $region76: #{pinn_forward.1} parent=11 // pred_fallthru
          _
        // Predicated region
        $region77: #{pinn_forward.1} parent=11 // pred_check
          %p794 = pneg %p424
        $region78: #{pinn_forward.1} parent=11 // pred_check_branch
          %796 = sbr.rel (%p794) target = $region80
        $region79: #{pinn_forward.1} parent=11 // pred_region
          _
        $region80: #{pinn_forward.1} parent=11 // pred_fallthru
          _
        // Predicated region
        $region81: #{pinn_forward.1} parent=11 // pred_check
          %p797 = pneg %p445
        $region82: #{pinn_forward.1} parent=11 // pred_check_branch
          %799 = sbr.rel (%p797) target = $region84
        $region83: #{pinn_forward.1} parent=11 // pred_region
          _
        $region84: #{pinn_forward.1} parent=11 // pred_fallthru
          _
        // Predicated region
        $region85: #{pinn_forward.1} parent=11 // pred_check
          %p800 = pneg %p466
        $region86: #{pinn_forward.1} parent=11 // pred_check_branch
          %802 = sbr.rel (%p800) target = $region88
        $region87: #{pinn_forward.1} parent=11 // pred_region
          %s804 = ssub.s32 2048, 2048
          %805 = vsyncadd [#allocation26], %s804
          %s806 = sshll.u32 [#allocation25], 4
          %s807 = int_to_ptr.vmem [resolvable:$true] %s806
          %812 = dma.hbm_to_vmem [thread:$0]  %s19, 2048, %s807, [#allocation26], 128, 128, 8
        $region88: #{pinn_forward.1} parent=11 // pred_fallthru
          _
        // Predicated region
        $region89: #{pinn_forward.1} parent=11 // pred_check
          %p813 = pneg %p487
        $region90: #{pinn_forward.1} parent=11 // pred_check_branch
          %815 = sbr.rel (%p813) target = $region92
        $region91: #{pinn_forward.1} parent=11 // pred_region
          _
        $region92: #{pinn_forward.1} parent=11 // pred_fallthru
          _
        // Predicated region
        $region93: #{pinn_forward.1} parent=11 // pred_check
          %p816 = pneg %p508
        $region94: #{pinn_forward.1} parent=11 // pred_check_branch
          %818 = sbr.rel (%p816) target = $region96
        $region95: #{pinn_forward.1} parent=11 // pred_region
          %s820 = ssub.s32 4096, 4096
          %821 = vsyncadd [#allocation26], %s820
          %s822 = sshll.u32 [#allocation27], 4
          %s823 = int_to_ptr.vmem [resolvable:$true] %s822
          %828 = dma.hbm_to_vmem [thread:$0]  %s21, 4096, %s823, [#allocation26], 256, 256, 16
        $region96: #{pinn_forward.1} parent=11 // pred_fallthru
          _
        // Predicated region
        $region97: #{pinn_forward.1} parent=11 // pred_check
          %p829 = pneg %p529
        $region98: #{pinn_forward.1} parent=11 // pred_check_branch
          %831 = sbr.rel (%p829) target = $region100
        $region99: #{pinn_forward.1} parent=11 // pred_region
          _
        $region100: #{pinn_forward.1} parent=11 // pred_fallthru
          _
        // Predicated region
        $region101: #{pinn_forward.1} parent=11 // pred_check
          %p832 = pneg %p550
        $region102: #{pinn_forward.1} parent=11 // pred_check_branch
          %834 = sbr.rel (%p832) target = $region104
        $region103: #{pinn_forward.1} parent=11 // pred_region
          %s836 = ssub.s32 2048, 2048
          %837 = vsyncadd [#allocation29], %s836
          %s838 = sshll.u32 [#allocation28], 4
          %s839 = int_to_ptr.vmem [resolvable:$true] %s838
          %844 = dma.hbm_to_vmem [thread:$0]  %s23, 2048, %s839, [#allocation29], 128, 128, 8
        $region104: #{pinn_forward.1} parent=11 // pred_fallthru
          _
        // Predicated region
        $region105: #{pinn_forward.1} parent=11 // pred_check
          %p845 = pneg %p571
        $region106: #{pinn_forward.1} parent=11 // pred_check_branch
          %847 = sbr.rel (%p845) target = $region108
        $region107: #{pinn_forward.1} parent=11 // pred_region
          _
        $region108: #{pinn_forward.1} parent=11 // pred_fallthru
          _
      $region12: #{pinn_forward.1} parent=5 // pred_fallthru
        _
      %p848 = scmp.lt.s32.totalorder %s41, 2
      // Predicated region
      $region109: #{pinn_forward.1} parent=5 // pred_check
        %p849 = pneg %p848
      $region110: #{pinn_forward.1} parent=5 // pred_check_branch
        %851 = sbr.rel (%p849) target = $region112
      $region111: #{pinn_forward.1} parent=5 // pred_region
        // Predicated region
        $region113: #{pinn_forward.1} parent=111 // pred_check
          %p852 = pneg %p61
        $region114: #{pinn_forward.1} parent=111 // pred_check_branch
          %854 = sbr.rel (%p852) target = $region116
        $region115: #{pinn_forward.1} parent=111 // pred_region
          %s855 = smul.u32 4, %s41
          %p856 = scmp.lt.s32.totalorder %s855, 7
          %s857 = scalar_select %p856, %s855, 7
          %s858 = smul.addr %s857, 8
          %s859 = scalar_lea.vmem %s0, %s858
          %s860 = smul.u32 4, %s41
        $region116: #{pinn_forward.1} parent=111 // pred_fallthru
          _
      $region112: #{pinn_forward.1} parent=5 // pred_fallthru
        _
      %p861 = scmp.le.s32.totalorder 1, %s41
      %p862 = scmp.lt.s32.totalorder %s41, 3
      %p863 = pnand %p861, %p862
      %p864 = pneg %p863
      // Predicated region
      $region117: #{pinn_forward.1} parent=5 // pred_check
        _
      $region118: #{pinn_forward.1} parent=5 // pred_check_branch
        %866 = sbr.rel (%p863) target = $region120
      $region119: #{pinn_forward.1} parent=5 // pred_region
        %s867 = ssub.s32 %s41, 1
        // Predicated region
        $region121: #{pinn_forward.1} parent=119 // pred_check
          %p868 = pneg %p88
        $region122: #{pinn_forward.1} parent=119 // pred_check_branch
          %870 = sbr.rel (%p868) target = $region124
        $region123: #{pinn_forward.1} parent=119 // pred_region
          %871 = dma.done [#allocation3], 32
        $region124: #{pinn_forward.1} parent=119 // pred_fallthru
          _
        // Predicated region
        $region125: #{pinn_forward.1} parent=119 // pred_check
          %p872 = pneg %p109
        $region126: #{pinn_forward.1} parent=119 // pred_check_branch
          %874 = sbr.rel (%p872) target = $region128
        $region127: #{pinn_forward.1} parent=119 // pred_region
          %875 = dma.done [#allocation5], 32
        $region128: #{pinn_forward.1} parent=119 // pred_fallthru
          _
        // Predicated region
        $region129: #{pinn_forward.1} parent=119 // pred_check
          %p876 = pneg %p130
        $region130: #{pinn_forward.1} parent=119 // pred_check_branch
          %878 = sbr.rel (%p876) target = $region132
        $region131: #{pinn_forward.1} parent=119 // pred_region
          %879 = dma.done [#allocation5], 2048
        $region132: #{pinn_forward.1} parent=119 // pred_fallthru
          _
        // Predicated region
        $region133: #{pinn_forward.1} parent=119 // pred_check
          %p880 = pneg %p172
        $region134: #{pinn_forward.1} parent=119 // pred_check_branch
          %882 = sbr.rel (%p880) target = $region136
        $region135: #{pinn_forward.1} parent=119 // pred_region
          %883 = dma.done [#allocation8], 4096
        $region136: #{pinn_forward.1} parent=119 // pred_fallthru
          _
        // Predicated region
        $region137: #{pinn_forward.1} parent=119 // pred_check
          %p884 = pneg %p193
        $region138: #{pinn_forward.1} parent=119 // pred_check_branch
          %886 = sbr.rel (%p884) target = $region140
        $region139: #{pinn_forward.1} parent=119 // pred_region
          %887 = dma.done [#allocation8], 32
        $region140: #{pinn_forward.1} parent=119 // pred_fallthru
          _
        // Predicated region
        $region141: #{pinn_forward.1} parent=119 // pred_check
          %p888 = pneg %p214
        $region142: #{pinn_forward.1} parent=119 // pred_check_branch
          %890 = sbr.rel (%p888) target = $region144
        $region143: #{pinn_forward.1} parent=119 // pred_region
          %891 = dma.done [#allocation11], 2048
        $region144: #{pinn_forward.1} parent=119 // pred_fallthru
          _
        // Predicated region
        $region145: #{pinn_forward.1} parent=119 // pred_check
          %p892 = pneg %p235
        $region146: #{pinn_forward.1} parent=119 // pred_check_branch
          %894 = sbr.rel (%p892) target = $region148
        $region147: #{pinn_forward.1} parent=119 // pred_region
          %895 = dma.done [#allocation11], 16
        $region148: #{pinn_forward.1} parent=119 // pred_fallthru
          _
        // Predicated region
        $region149: #{pinn_forward.1} parent=119 // pred_check
          %p896 = pneg %p256
        $region150: #{pinn_forward.1} parent=119 // pred_check_branch
          %898 = sbr.rel (%p896) target = $region152
        $region151: #{pinn_forward.1} parent=119 // pred_region
          %899 = dma.done [#allocation14], 4096
        $region152: #{pinn_forward.1} parent=119 // pred_fallthru
          _
        // Predicated region
        $region153: #{pinn_forward.1} parent=119 // pred_check
          %p900 = pneg %p277
        $region154: #{pinn_forward.1} parent=119 // pred_check_branch
          %902 = sbr.rel (%p900) target = $region156
        $region155: #{pinn_forward.1} parent=119 // pred_region
          %903 = dma.done [#allocation14], 32
        $region156: #{pinn_forward.1} parent=119 // pred_fallthru
          _
        // Predicated region
        $region157: #{pinn_forward.1} parent=119 // pred_check
          %p904 = pneg %p298
        $region158: #{pinn_forward.1} parent=119 // pred_check_branch
          %906 = sbr.rel (%p904) target = $region160
        $region159: #{pinn_forward.1} parent=119 // pred_region
          %907 = dma.done [#allocation17], 2048
        $region160: #{pinn_forward.1} parent=119 // pred_fallthru
          _
        // Predicated region
        $region161: #{pinn_forward.1} parent=119 // pred_check
          %p908 = pneg %p319
        $region162: #{pinn_forward.1} parent=119 // pred_check_branch
          %910 = sbr.rel (%p908) target = $region164
        $region163: #{pinn_forward.1} parent=119 // pred_region
          %911 = dma.done [#allocation17], 16
        $region164: #{pinn_forward.1} parent=119 // pred_fallthru
          _
        // Predicated region
        $region165: #{pinn_forward.1} parent=119 // pred_check
          %p912 = pneg %p340
        $region166: #{pinn_forward.1} parent=119 // pred_check_branch
          %914 = sbr.rel (%p912) target = $region168
        $region167: #{pinn_forward.1} parent=119 // pred_region
          %915 = dma.done [#allocation20], 4096
        $region168: #{pinn_forward.1} parent=119 // pred_fallthru
          _
        // Predicated region
        $region169: #{pinn_forward.1} parent=119 // pred_check
          %p916 = pneg %p361
        $region170: #{pinn_forward.1} parent=119 // pred_check_branch
          %918 = sbr.rel (%p916) target = $region172
        $region171: #{pinn_forward.1} parent=119 // pred_region
          %919 = dma.done [#allocation20], 32
        $region172: #{pinn_forward.1} parent=119 // pred_fallthru
          _
        // Predicated region
        $region173: #{pinn_forward.1} parent=119 // pred_check
          %p920 = pneg %p382
        $region174: #{pinn_forward.1} parent=119 // pred_check_branch
          %922 = sbr.rel (%p920) target = $region176
        $region175: #{pinn_forward.1} parent=119 // pred_region
          %923 = dma.done [#allocation23], 2048
        $region176: #{pinn_forward.1} parent=119 // pred_fallthru
          _
        // Predicated region
        $region177: #{pinn_forward.1} parent=119 // pred_check
          %p924 = pneg %p403
        $region178: #{pinn_forward.1} parent=119 // pred_check_branch
          %926 = sbr.rel (%p924) target = $region180
        $region179: #{pinn_forward.1} parent=119 // pred_region
          %927 = dma.done [#allocation23], 16
        $region180: #{pinn_forward.1} parent=119 // pred_fallthru
          _
        // Predicated region
        $region181: #{pinn_forward.1} parent=119 // pred_check
          %p928 = pneg %p466
        $region182: #{pinn_forward.1} parent=119 // pred_check_branch
          %930 = sbr.rel (%p928) target = $region184
        $region183: #{pinn_forward.1} parent=119 // pred_region
          %931 = dma.done [#allocation26], 2048
        $region184: #{pinn_forward.1} parent=119 // pred_fallthru
          _
        // Predicated region
        $region185: #{pinn_forward.1} parent=119 // pred_check
          %p932 = pneg %p508
        $region186: #{pinn_forward.1} parent=119 // pred_check_branch
          %934 = sbr.rel (%p932) target = $region188
        $region187: #{pinn_forward.1} parent=119 // pred_region
          %935 = dma.done [#allocation26], 4096
        $region188: #{pinn_forward.1} parent=119 // pred_fallthru
          _
        // Predicated region
        $region189: #{pinn_forward.1} parent=119 // pred_check
          %p936 = pneg %p550
        $region190: #{pinn_forward.1} parent=119 // pred_check_branch
          %938 = sbr.rel (%p936) target = $region192
        $region191: #{pinn_forward.1} parent=119 // pred_region
          %939 = dma.done [#allocation29], 2048
        $region192: #{pinn_forward.1} parent=119 // pred_fallthru
          _
        %s940 = smul.u32 4, %s46
        %p941 = scmp.lt.s32.totalorder %s940, 7
        %s942 = scalar_select %p941, %s940, 7
        %s943 = smul.addr %s942, 8
        %s944 = scalar_lea.vmem %s0, %s943
        %p945 = pneg %p67
        %p946 = pneg %p64
        %p947 = pneg %p88
        %p948 = pneg %p85
        %p949 = pneg %p109
        %p950 = pneg %p106
        %p951 = pneg %p130
        %p952 = pneg %p127
        %p953 = pneg %p151
        %p954 = pneg %p148
        %p955 = pneg %p172
        %p956 = pneg %p169
        %p957 = pneg %p193
        %p958 = pneg %p190
        %p959 = pneg %p214
        %p960 = pneg %p211
        %p961 = pneg %p235
        %p962 = pneg %p232
        %p963 = pneg %p256
        %p964 = pneg %p253
        %p965 = pneg %p277
        %p966 = pneg %p274
        %p967 = pneg %p298
        %p968 = pneg %p295
        %p969 = pneg %p319
        %p970 = pneg %p316
        %p971 = pneg %p340
        %p972 = pneg %p337
        %p973 = pneg %p361
        %p974 = pneg %p358
        %p975 = pneg %p382
        %p976 = pneg %p379
        %p977 = pneg %p403
        %p978 = pneg %p400
        %p979 = pneg %p424
        %p980 = pneg %p421
        %p981 = pneg %p445
        %p982 = pneg %p442
        %p983 = pneg %p466
        %p984 = pneg %p463
        %p985 = pneg %p487
        %p986 = pneg %p484
        %p987 = pneg %p508
        %p988 = pneg %p505
        %p989 = pneg %p529
        %p990 = pneg %p526
        %p991 = pneg %p550
        %p992 = pneg %p547
        %p993 = pneg %p571
        %p994 = pneg %p568
        %p995 = pneg %p597
        %p996 = pneg %p594
        %s997 = smul.u32 4, %s46
        %p998 = scmp.lt.s32.totalorder %s997, 7
        %s999 = scalar_select %p998, %s997, 7
        %s1000 = smul.addr %s999, 8
        %s1001 = scalar_lea.vmem %s25, %s1000
        %s1002 = smul.u32 4, %s46
        %p1003 = scmp.lt.s32.totalorder %s1002, 7
        %s1004 = scalar_select %p1003, %s1002, 7
        %s1005 = smul.addr %s1004, 8
        %s1006 = scalar_lea.vmem %s0, %s1005
        %s1007 = smul.u32 4, %s46
        %s1008 = smul.u32 4, %s46
        %p1009 = scmp.lt.s32.totalorder %s1008, 7
        %s1010 = scalar_select %p1009, %s1008, 7
        %s1011 = smul.addr %s1010, 8
        %s1012 = scalar_lea.vmem %s25, %s1011
        %s1013 = smul.u32 4, %s46
        %v1014 = vld [vmem:[%s1006] sm:$0xff]
        %v1015 = vld [vmem:[%s1006 + $0x8] sm:$0xff]
        %v1016 = vld [vmem:[%s1006 + $0x10] sm:$0xff]
        %v1017 = vld [vmem:[%s1006 + $0x18] sm:$0xff]
        %v1018 = vld [vmem:[#allocation2] sm:$0x3]
        %v1019 = vld [vmem:[#allocation4] sm:$0x3]
        %v1020 = vld [vmem:[#allocation6] sm:$0xff]
        %v1021 = vld [vmem:[#allocation6 + $0x8] sm:$0xff]
        %v1022 = vld [vmem:[#allocation6 + $0x10] sm:$0xff]
        %v1023 = vld [vmem:[#allocation6 + $0x18] sm:$0xff]
        %v1024 = vld [vmem:[#allocation6 + $0x20] sm:$0xff]
        %v1025 = vld [vmem:[#allocation6 + $0x28] sm:$0xff]
        %v1026 = vld [vmem:[#allocation6 + $0x30] sm:$0xff]
        %v1027 = vld [vmem:[#allocation6 + $0x38] sm:$0xff]
        %v1028 = vld [vmem:[#allocation6 + $0x40] sm:$0xff]
        %v1029 = vld [vmem:[#allocation6 + $0x48] sm:$0xff]
        %v1030 = vld [vmem:[#allocation6 + $0x50] sm:$0xff]
        %v1031 = vld [vmem:[#allocation6 + $0x58] sm:$0xff]
        %v1032 = vld [vmem:[#allocation6 + $0x60] sm:$0xff]
        %v1033 = vld [vmem:[#allocation6 + $0x68] sm:$0xff]
        %v1034 = vld [vmem:[#allocation6 + $0x70] sm:$0xff]
        %v1035 = vld [vmem:[#allocation6 + $0x78] sm:$0xff]
        %v1036 = vld [vmem:[%s4] sm:$0x1]
        %1038 = vset.pattern.permute.xlu0 0
        %1039 = vperm.xlu0 %1038, %v1014
        %v1040 = vpop.permute.xlu0 %1039
        %1043 = vset.pattern.permute.xlu0 0
        %1044 = vperm.xlu0 %1043, %v1015
        %v1045 = vpop.permute.xlu0 %1044
        %1048 = vset.pattern.permute.xlu0 0
        %1049 = vperm.xlu0 %1048, %v1016
        %v1050 = vpop.permute.xlu0 %1049
        %1053 = vset.pattern.permute.xlu0 0
        %1054 = vperm.xlu0 %1053, %v1017
        %v1055 = vpop.permute.xlu0 %1054
        %v1058 = vlaneseq
        %v1059 = vshrl.u32 %v1058, 7
        %v1060 = vsub.s32 0, %v1059
        %v1061 = vrot.slane %v1018, %v1060
        %v1062 = vlaneseq
        %v1063 = vshrl.u32 %v1062, 7
        %v1064 = vsub.s32 1, %v1063
        %v1065 = vrot.slane %v1018, %v1064
        %v1068 = vmul.f32 %v1040, %v1061
        %v1069 = vmul.f32 %v1040, %v1065
        %v1070 = vmul.f32 %v1045, %v1061
        %v1071 = vmul.f32 %v1045, %v1065
        %v1072 = vmul.f32 %v1050, %v1061
        %v1073 = vmul.f32 %v1050, %v1065
        %v1074 = vmul.f32 %v1055, %v1061
        %v1075 = vmul.f32 %v1055, %v1065
        %v1077 = vlaneseq
        %v1078 = vshrl.u32 %v1077, 7
        %v1079 = vsub.s32 0, %v1078
        %v1080 = vrot.slane %v1019, %v1079
        %v1081 = vlaneseq
        %v1082 = vshrl.u32 %v1081, 7
        %v1083 = vsub.s32 1, %v1082
        %v1084 = vrot.slane %v1019, %v1083
        %v1087 = vadd.f32 %v1068, %v1080
        %v1088 = vadd.f32 %v1069, %v1084
        %v1089 = vadd.f32 %v1070, %v1080
        %v1090 = vadd.f32 %v1071, %v1084
        %v1091 = vadd.f32 %v1072, %v1080
        %v1092 = vadd.f32 %v1073, %v1084
        %v1093 = vadd.f32 %v1074, %v1080
        %v1094 = vadd.f32 %v1075, %v1084
        %v1095 = vand.u32 2147483647, %v1087
        %vm1096 = vcmp.le.f32.partialorder %v1095, 0.7853982
        %vm1097 = vcmp.lt.s32.totalorder %v1087, 0
        %v1098 = vand.u32 %v1087, 2139095040
        %v1099 = vshrl.u32 %v1098, 23
        %v1100 = vsub.s32 %v1099, 127
        %v1101 = vand.u32 2147483647, %v1087
        %v1102 = vand.u32 %v1101, 8388607
        %v1103 = vor.u32 %v1102, 8388608
        %v1104 = vsub.s32 0, %v1103
        %v1105 = vadd.s32 %v1100, 1
        %vm1106 = vcmp.gt.s32.totalorder %v1105, 0
        %v1107 = vsel %vm1106, %v1105, 0
        %v1108 = vshrl.u32 %v1107, 5
        %v1109 = vand.u32 %v1107, 31
        %v1110 = vsub.s32 32, %v1109
        %v1111 = vshrl.u32 683565275, %v1110
        %v1112 = vshll.u32 683565275, %v1109
        %v1113 = vshrl.u32 2475754826, %v1110
        %v1114 = vor.u32 %v1112, %v1113
        %v1115 = vshll.u32 2475754826, %v1109
        %v1116 = vshrl.u32 2131351028, %v1110
        %v1117 = vor.u32 %v1115, %v1116
        %v1118 = vshll.u32 2131351028, %v1109
        %v1119 = vshrl.u32 2102212464, %v1110
        %v1120 = vor.u32 %v1118, %v1119
        %v1121 = vshll.u32 2102212464, %v1109
        %v1122 = vshrl.u32 920167782, %v1110
        %v1123 = vor.u32 %v1121, %v1122
        %v1124 = vshll.u32 920167782, %v1109
        %v1125 = vshrl.u32 1326507024, %v1110
        %v1126 = vor.u32 %v1124, %v1125
        %vm1127 = vcmp.lt.s32.totalorder %v1108, 1
        %vm1128 = vcmp.lt.s32.totalorder %v1108, 2
        %vm1129 = vcmp.lt.s32.totalorder %v1108, 3
        %vm1130 = vcmp.lt.s32.totalorder %v1108, 4
        %v1131 = vsel %vm1127, %v1111, %v1114
        %v1132 = vsel %vm1130, %v1120, 2102212464
        %v1133 = vsel %vm1129, %v1117, %v1132
        %v1134 = vsel %vm1128, %v1131, %v1133
        %v1135 = vsel %vm1127, %v1114, %v1117
        %v1136 = vsel %vm1130, %v1123, 920167782
        %v1137 = vsel %vm1129, %v1120, %v1136
        %v1138 = vsel %vm1128, %v1135, %v1137
        %v1139 = vsel %vm1127, %v1117, %v1120
        %v1140 = vsel %vm1130, %v1126, 1326507024
        %v1141 = vsel %vm1129, %v1123, %v1140
        %v1142 = vsel %vm1128, %v1139, %v1141
        %v1143 = vshll.u32 %v1103, 8
        %v1144 = vmul.u32.u64.compose %v1143, %v1142
        %v1145 = vextract.low.u32 %v1144
        %v1146 = vextract.high.u32 %v1144
        %v1147 = vmul.u32.u64.compose %v1143, %v1138
        %v1148 = vextract.low.u32 %v1147
        %v1149 = vextract.high.u32 %v1147
        %v1150 = vmul.u32 %v1143, %v1134
        %v1151 = vadd.s32 %v1146, %v1148
        %vm1152 = vc.u32 %v1146, %v1148
        %v1153 = vadd.s32 %v1149, 1
        %v1154 = vsel %vm1152, %v1153, %v1149
        %v1155 = vadd.s32 %v1150, %v1154
        %v1156 = vadd.s32 %v1155, 536870912
        %v1157 = vshrl.u32 %v1156, 30
        %v1158 = vshll.u32 %v1157, 30
        %v1159 = vsub.s32 %v1155, %v1158
        %vm1160 = vcmp.lt.s32.totalorder %v1159, 0
        %v1161 = vsub.s32 0, %v1159
        %v1162 = vsel %vm1160, %v1161, %v1159
        %v1163 = vclz %v1162
        %v1164 = vsub.s32 %v1163, 2
        %vm1165 = vcmp.gt.s32.totalorder 0, %v1164
        %v1166 = vsel %vm1165, 0, %v1164
        %v1167 = vsub.s32 32, %v1166
        %v1168 = vshll.u32 %v1159, %v1166
        %v1169 = vshrl.u32 %v1151, %v1167
        %v1170 = vor.u32 %v1168, %v1169
        %v1171 = vsub.s32 4294967266, %v1166
        %v1172 = vadd.s32 %v1171, 127
        %v1173 = vshll.u32 %v1172, 23
        %v1174 = vor.u32 4788187, %v1173
        %v1175 = vand.u32 2147483647, %v1174
        %v1177 = vcvt.s32.f32 %v1170
        %v1178 = vmul.f32 %v1177, %v1175
        %v1179 = vxor.u32 %v1178, 2147483648
        %v1180 = vsel %vm1097, %v1179, %v1178
        %v1181 = vsub.s32 4, %v1157
        %v1182 = vsel %vm1097, %v1181, %v1157
        %v1183 = vsel %vm1096, %v1087, %v1180
        %v1184 = vsel %vm1096, 0, %v1182
        %v1185 = vcosq.f32.pop %v1183
        %v1186 = vsinq.f32.pop %v1183
        %vm1187 = vweird.f32 %v1087
        %v1188 = vadd.s32 %v1184, 3
        %v1189 = vand.u32 %v1188, 3
        %vm1190 = vcmp.lt.s32.totalorder %v1189, 2
        %vm1191 = vcmp.eq.s32.totalorder %v1189, 0
        %v1192 = vxor.u32 %v1186, 2147483648
        %v1193 = vsel %vm1191, %v1185, %v1192
        %vm1194 = vcmp.eq.s32.totalorder %v1189, 2
        %v1195 = vxor.u32 %v1185, 2147483648
        %v1196 = vsel %vm1194, %v1195, %v1186
        %v1197 = vsel %vm1190, %v1193, %v1196
        %v1198 = vsel %vm1187, nan, %v1197
        %v1199 = vand.u32 2147483647, %v1089
        %vm1200 = vcmp.le.f32.partialorder %v1199, 0.7853982
        %vm1201 = vcmp.lt.s32.totalorder %v1089, 0
        %v1202 = vand.u32 %v1089, 2139095040
        %v1203 = vshrl.u32 %v1202, 23
        %v1204 = vsub.s32 %v1203, 127
        %v1205 = vand.u32 2147483647, %v1089
        %v1206 = vand.u32 %v1205, 8388607
        %v1207 = vor.u32 %v1206, 8388608
        %v1208 = vsub.s32 0, %v1207
        %v1209 = vadd.s32 %v1204, 1
        %vm1210 = vcmp.gt.s32.totalorder %v1209, 0
        %v1211 = vsel %vm1210, %v1209, 0
        %v1212 = vshrl.u32 %v1211, 5
        %v1213 = vand.u32 %v1211, 31
        %v1214 = vsub.s32 32, %v1213
        %v1215 = vshrl.u32 683565275, %v1214
        %v1216 = vshll.u32 683565275, %v1213
        %v1217 = vshrl.u32 2475754826, %v1214
        %v1218 = vor.u32 %v1216, %v1217
        %v1219 = vshll.u32 2475754826, %v1213
        %v1220 = vshrl.u32 2131351028, %v1214
        %v1221 = vor.u32 %v1219, %v1220
        %v1222 = vshll.u32 2131351028, %v1213
        %v1223 = vshrl.u32 2102212464, %v1214
        %v1224 = vor.u32 %v1222, %v1223
        %v1225 = vshll.u32 2102212464, %v1213
        %v1226 = vshrl.u32 920167782, %v1214
        %v1227 = vor.u32 %v1225, %v1226
        %v1228 = vshll.u32 920167782, %v1213
        %v1229 = vshrl.u32 1326507024, %v1214
        %v1230 = vor.u32 %v1228, %v1229
        %vm1231 = vcmp.lt.s32.totalorder %v1212, 1
        %vm1232 = vcmp.lt.s32.totalorder %v1212, 2
        %vm1233 = vcmp.lt.s32.totalorder %v1212, 3
        %vm1234 = vcmp.lt.s32.totalorder %v1212, 4
        %v1235 = vsel %vm1231, %v1215, %v1218
        %v1236 = vsel %vm1234, %v1224, 2102212464
        %v1237 = vsel %vm1233, %v1221, %v1236
        %v1238 = vsel %vm1232, %v1235, %v1237
        %v1239 = vsel %vm1231, %v1218, %v1221
        %v1240 = vsel %vm1234, %v1227, 920167782
        %v1241 = vsel %vm1233, %v1224, %v1240
        %v1242 = vsel %vm1232, %v1239, %v1241
        %v1243 = vsel %vm1231, %v1221, %v1224
        %v1244 = vsel %vm1234, %v1230, 1326507024
        %v1245 = vsel %vm1233, %v1227, %v1244
        %v1246 = vsel %vm1232, %v1243, %v1245
        %v1247 = vshll.u32 %v1207, 8
        %v1248 = vmul.u32.u64.compose %v1247, %v1246
        %v1249 = vextract.low.u32 %v1248
        %v1250 = vextract.high.u32 %v1248
        %v1251 = vmul.u32.u64.compose %v1247, %v1242
        %v1252 = vextract.low.u32 %v1251
        %v1253 = vextract.high.u32 %v1251
        %v1254 = vmul.u32 %v1247, %v1238
        %v1255 = vadd.s32 %v1250, %v1252
        %vm1256 = vc.u32 %v1250, %v1252
        %v1257 = vadd.s32 %v1253, 1
        %v1258 = vsel %vm1256, %v1257, %v1253
        %v1259 = vadd.s32 %v1254, %v1258
        %v1260 = vadd.s32 %v1259, 536870912
        %v1261 = vshrl.u32 %v1260, 30
        %v1262 = vshll.u32 %v1261, 30
        %v1263 = vsub.s32 %v1259, %v1262
        %vm1264 = vcmp.lt.s32.totalorder %v1263, 0
        %v1265 = vsub.s32 0, %v1263
        %v1266 = vsel %vm1264, %v1265, %v1263
        %v1267 = vclz %v1266
        %v1268 = vsub.s32 %v1267, 2
        %vm1269 = vcmp.gt.s32.totalorder 0, %v1268
        %v1270 = vsel %vm1269, 0, %v1268
        %v1271 = vsub.s32 32, %v1270
        %v1272 = vshll.u32 %v1263, %v1270
        %v1273 = vshrl.u32 %v1255, %v1271
        %v1274 = vor.u32 %v1272, %v1273
        %v1275 = vsub.s32 4294967266, %v1270
        %v1276 = vadd.s32 %v1275, 127
        %v1277 = vshll.u32 %v1276, 23
        %v1278 = vor.u32 4788187, %v1277
        %v1279 = vand.u32 2147483647, %v1278
        %v1281 = vcvt.s32.f32 %v1274
        %v1282 = vmul.f32 %v1281, %v1279
        %v1283 = vxor.u32 %v1282, 2147483648
        %v1284 = vsel %vm1201, %v1283, %v1282
        %v1285 = vsub.s32 4, %v1261
        %v1286 = vsel %vm1201, %v1285, %v1261
        %v1287 = vsel %vm1200, %v1089, %v1284
        %v1288 = vsel %vm1200, 0, %v1286
        %v1289 = vcosq.f32.pop %v1287
        %v1290 = vsinq.f32.pop %v1287
        %vm1291 = vweird.f32 %v1089
        %v1292 = vadd.s32 %v1288, 3
        %v1293 = vand.u32 %v1292, 3
        %vm1294 = vcmp.lt.s32.totalorder %v1293, 2
        %vm1295 = vcmp.eq.s32.totalorder %v1293, 0
        %v1296 = vxor.u32 %v1290, 2147483648
        %v1297 = vsel %vm1295, %v1289, %v1296
        %vm1298 = vcmp.eq.s32.totalorder %v1293, 2
        %v1299 = vxor.u32 %v1289, 2147483648
        %v1300 = vsel %vm1298, %v1299, %v1290
        %v1301 = vsel %vm1294, %v1297, %v1300
        %v1302 = vsel %vm1291, nan, %v1301
        %v1303 = vand.u32 2147483647, %v1091
        %vm1304 = vcmp.le.f32.partialorder %v1303, 0.7853982
        %vm1305 = vcmp.lt.s32.totalorder %v1091, 0
        %v1306 = vand.u32 %v1091, 2139095040
        %v1307 = vshrl.u32 %v1306, 23
        %v1308 = vsub.s32 %v1307, 127
        %v1309 = vand.u32 2147483647, %v1091
        %v1310 = vand.u32 %v1309, 8388607
        %v1311 = vor.u32 %v1310, 8388608
        %v1312 = vsub.s32 0, %v1311
        %v1313 = vadd.s32 %v1308, 1
        %vm1314 = vcmp.gt.s32.totalorder %v1313, 0
        %v1315 = vsel %vm1314, %v1313, 0
        %v1316 = vshrl.u32 %v1315, 5
        %v1317 = vand.u32 %v1315, 31
        %v1318 = vsub.s32 32, %v1317
        %v1319 = vshrl.u32 683565275, %v1318
        %v1320 = vshll.u32 683565275, %v1317
        %v1321 = vshrl.u32 2475754826, %v1318
        %v1322 = vor.u32 %v1320, %v1321
        %v1323 = vshll.u32 2475754826, %v1317
        %v1324 = vshrl.u32 2131351028, %v1318
        %v1325 = vor.u32 %v1323, %v1324
        %v1326 = vshll.u32 2131351028, %v1317
        %v1327 = vshrl.u32 2102212464, %v1318
        %v1328 = vor.u32 %v1326, %v1327
        %v1329 = vshll.u32 2102212464, %v1317
        %v1330 = vshrl.u32 920167782, %v1318
        %v1331 = vor.u32 %v1329, %v1330
        %v1332 = vshll.u32 920167782, %v1317
        %v1333 = vshrl.u32 1326507024, %v1318
        %v1334 = vor.u32 %v1332, %v1333
        %vm1335 = vcmp.lt.s32.totalorder %v1316, 1
        %vm1336 = vcmp.lt.s32.totalorder %v1316, 2
        %vm1337 = vcmp.lt.s32.totalorder %v1316, 3
        %vm1338 = vcmp.lt.s32.totalorder %v1316, 4
        %v1339 = vsel %vm1335, %v1319, %v1322
        %v1340 = vsel %vm1338, %v1328, 2102212464
        %v1341 = vsel %vm1337, %v1325, %v1340
        %v1342 = vsel %vm1336, %v1339, %v1341
        %v1343 = vsel %vm1335, %v1322, %v1325
        %v1344 = vsel %vm1338, %v1331, 920167782
        %v1345 = vsel %vm1337, %v1328, %v1344
        %v1346 = vsel %vm1336, %v1343, %v1345
        %v1347 = vsel %vm1335, %v1325, %v1328
        %v1348 = vsel %vm1338, %v1334, 1326507024
        %v1349 = vsel %vm1337, %v1331, %v1348
        %v1350 = vsel %vm1336, %v1347, %v1349
        %v1351 = vshll.u32 %v1311, 8
        %v1352 = vmul.u32.u64.compose %v1351, %v1350
        %v1353 = vextract.low.u32 %v1352
        %v1354 = vextract.high.u32 %v1352
        %v1355 = vmul.u32.u64.compose %v1351, %v1346
        %v1356 = vextract.low.u32 %v1355
        %v1357 = vextract.high.u32 %v1355
        %v1358 = vmul.u32 %v1351, %v1342
        %v1359 = vadd.s32 %v1354, %v1356
        %vm1360 = vc.u32 %v1354, %v1356
        %v1361 = vadd.s32 %v1357, 1
        %v1362 = vsel %vm1360, %v1361, %v1357
        %v1363 = vadd.s32 %v1358, %v1362
        %v1364 = vadd.s32 %v1363, 536870912
        %v1365 = vshrl.u32 %v1364, 30
        %v1366 = vshll.u32 %v1365, 30
        %v1367 = vsub.s32 %v1363, %v1366
        %vm1368 = vcmp.lt.s32.totalorder %v1367, 0
        %v1369 = vsub.s32 0, %v1367
        %v1370 = vsel %vm1368, %v1369, %v1367
        %v1371 = vclz %v1370
        %v1372 = vsub.s32 %v1371, 2
        %vm1373 = vcmp.gt.s32.totalorder 0, %v1372
        %v1374 = vsel %vm1373, 0, %v1372
        %v1375 = vsub.s32 32, %v1374
        %v1376 = vshll.u32 %v1367, %v1374
        %v1377 = vshrl.u32 %v1359, %v1375
        %v1378 = vor.u32 %v1376, %v1377
        %v1379 = vsub.s32 4294967266, %v1374
        %v1380 = vadd.s32 %v1379, 127
        %v1381 = vshll.u32 %v1380, 23
        %v1382 = vor.u32 4788187, %v1381
        %v1383 = vand.u32 2147483647, %v1382
        %v1385 = vcvt.s32.f32 %v1378
        %v1386 = vmul.f32 %v1385, %v1383
        %v1387 = vxor.u32 %v1386, 2147483648
        %v1388 = vsel %vm1305, %v1387, %v1386
        %v1389 = vsub.s32 4, %v1365
        %v1390 = vsel %vm1305, %v1389, %v1365
        %v1391 = vsel %vm1304, %v1091, %v1388
        %v1392 = vsel %vm1304, 0, %v1390
        %v1393 = vcosq.f32.pop %v1391
        %v1394 = vsinq.f32.pop %v1391
        %vm1395 = vweird.f32 %v1091
        %v1396 = vadd.s32 %v1392, 3
        %v1397 = vand.u32 %v1396, 3
        %vm1398 = vcmp.lt.s32.totalorder %v1397, 2
        %vm1399 = vcmp.eq.s32.totalorder %v1397, 0
        %v1400 = vxor.u32 %v1394, 2147483648
        %v1401 = vsel %vm1399, %v1393, %v1400
        %vm1402 = vcmp.eq.s32.totalorder %v1397, 2
        %v1403 = vxor.u32 %v1393, 2147483648
        %v1404 = vsel %vm1402, %v1403, %v1394
        %v1405 = vsel %vm1398, %v1401, %v1404
        %v1406 = vsel %vm1395, nan, %v1405
        %v1407 = vand.u32 2147483647, %v1093
        %vm1408 = vcmp.le.f32.partialorder %v1407, 0.7853982
        %vm1409 = vcmp.lt.s32.totalorder %v1093, 0
        %v1410 = vand.u32 %v1093, 2139095040
        %v1411 = vshrl.u32 %v1410, 23
        %v1412 = vsub.s32 %v1411, 127
        %v1413 = vand.u32 2147483647, %v1093
        %v1414 = vand.u32 %v1413, 8388607
        %v1415 = vor.u32 %v1414, 8388608
        %v1416 = vsub.s32 0, %v1415
        %v1417 = vadd.s32 %v1412, 1
        %vm1418 = vcmp.gt.s32.totalorder %v1417, 0
        %v1419 = vsel %vm1418, %v1417, 0
        %v1420 = vshrl.u32 %v1419, 5
        %v1421 = vand.u32 %v1419, 31
        %v1422 = vsub.s32 32, %v1421
        %v1423 = vshrl.u32 683565275, %v1422
        %v1424 = vshll.u32 683565275, %v1421
        %v1425 = vshrl.u32 2475754826, %v1422
        %v1426 = vor.u32 %v1424, %v1425
        %v1427 = vshll.u32 2475754826, %v1421
        %v1428 = vshrl.u32 2131351028, %v1422
        %v1429 = vor.u32 %v1427, %v1428
        %v1430 = vshll.u32 2131351028, %v1421
        %v1431 = vshrl.u32 2102212464, %v1422
        %v1432 = vor.u32 %v1430, %v1431
        %v1433 = vshll.u32 2102212464, %v1421
        %v1434 = vshrl.u32 920167782, %v1422
        %v1435 = vor.u32 %v1433, %v1434
        %v1436 = vshll.u32 920167782, %v1421
        %v1437 = vshrl.u32 1326507024, %v1422
        %v1438 = vor.u32 %v1436, %v1437
        %vm1439 = vcmp.lt.s32.totalorder %v1420, 1
        %vm1440 = vcmp.lt.s32.totalorder %v1420, 2
        %vm1441 = vcmp.lt.s32.totalorder %v1420, 3
        %vm1442 = vcmp.lt.s32.totalorder %v1420, 4
        %v1443 = vsel %vm1439, %v1423, %v1426
        %v1444 = vsel %vm1442, %v1432, 2102212464
        %v1445 = vsel %vm1441, %v1429, %v1444
        %v1446 = vsel %vm1440, %v1443, %v1445
        %v1447 = vsel %vm1439, %v1426, %v1429
        %v1448 = vsel %vm1442, %v1435, 920167782
        %v1449 = vsel %vm1441, %v1432, %v1448
        %v1450 = vsel %vm1440, %v1447, %v1449
        %v1451 = vsel %vm1439, %v1429, %v1432
        %v1452 = vsel %vm1442, %v1438, 1326507024
        %v1453 = vsel %vm1441, %v1435, %v1452
        %v1454 = vsel %vm1440, %v1451, %v1453
        %v1455 = vshll.u32 %v1415, 8
        %v1456 = vmul.u32.u64.compose %v1455, %v1454
        %v1457 = vextract.low.u32 %v1456
        %v1458 = vextract.high.u32 %v1456
        %v1459 = vmul.u32.u64.compose %v1455, %v1450
        %v1460 = vextract.low.u32 %v1459
        %v1461 = vextract.high.u32 %v1459
        %v1462 = vmul.u32 %v1455, %v1446
        %v1463 = vadd.s32 %v1458, %v1460
        %vm1464 = vc.u32 %v1458, %v1460
        %v1465 = vadd.s32 %v1461, 1
        %v1466 = vsel %vm1464, %v1465, %v1461
        %v1467 = vadd.s32 %v1462, %v1466
        %v1468 = vadd.s32 %v1467, 536870912
        %v1469 = vshrl.u32 %v1468, 30
        %v1470 = vshll.u32 %v1469, 30
        %v1471 = vsub.s32 %v1467, %v1470
        %vm1472 = vcmp.lt.s32.totalorder %v1471, 0
        %v1473 = vsub.s32 0, %v1471
        %v1474 = vsel %vm1472, %v1473, %v1471
        %v1475 = vclz %v1474
        %v1476 = vsub.s32 %v1475, 2
        %vm1477 = vcmp.gt.s32.totalorder 0, %v1476
        %v1478 = vsel %vm1477, 0, %v1476
        %v1479 = vsub.s32 32, %v1478
        %v1480 = vshll.u32 %v1471, %v1478
        %v1481 = vshrl.u32 %v1463, %v1479
        %v1482 = vor.u32 %v1480, %v1481
        %v1483 = vsub.s32 4294967266, %v1478
        %v1484 = vadd.s32 %v1483, 127
        %v1485 = vshll.u32 %v1484, 23
        %v1486 = vor.u32 4788187, %v1485
        %v1487 = vand.u32 2147483647, %v1486
        %v1489 = vcvt.s32.f32 %v1482
        %v1490 = vmul.f32 %v1489, %v1487
        %v1491 = vxor.u32 %v1490, 2147483648
        %v1492 = vsel %vm1409, %v1491, %v1490
        %v1493 = vsub.s32 4, %v1469
        %v1494 = vsel %vm1409, %v1493, %v1469
        %v1495 = vsel %vm1408, %v1093, %v1492
        %v1496 = vsel %vm1408, 0, %v1494
        %v1497 = vcosq.f32.pop %v1495
        %v1498 = vsinq.f32.pop %v1495
        %vm1499 = vweird.f32 %v1093
        %v1500 = vadd.s32 %v1496, 3
        %v1501 = vand.u32 %v1500, 3
        %vm1502 = vcmp.lt.s32.totalorder %v1501, 2
        %vm1503 = vcmp.eq.s32.totalorder %v1501, 0
        %v1504 = vxor.u32 %v1498, 2147483648
        %v1505 = vsel %vm1503, %v1497, %v1504
        %vm1506 = vcmp.eq.s32.totalorder %v1501, 2
        %v1507 = vxor.u32 %v1497, 2147483648
        %v1508 = vsel %vm1506, %v1507, %v1498
        %v1509 = vsel %vm1502, %v1505, %v1508
        %v1510 = vsel %vm1499, nan, %v1509
        %v1512 = vlaneseq
        %v1513 = vshrl.u32 %v1512, 7
        %v1514 = vsub.s32 0, %v1513
        %v1515 = vrot.slane %v1036, %v1514
        %1517 = vmatprep.subr.mxu0 0.0
        %1518 = vmatpush1.msra.mxu0 %v1020
        %1519 = vmatprep.subr.mxu0 0.0
        %1520 = vmatpush1.msra.mxu0 %v1021
        %1521 = vmatprep.subr.mxu0 0.0
        %1522 = vmatpush1.msra.mxu0 %v1022
        %1523 = vmatprep.subr.mxu0 0.0
        %1524 = vmatpush1.msra.mxu0 %v1023
        %1525 = vmatprep.subr.mxu0 0.0
        %1526 = vmatpush1.msra.mxu0 %v1024
        %1527 = vmatprep.subr.mxu0 0.0
        %1528 = vmatpush1.msra.mxu0 %v1025
        %1529 = vmatprep.subr.mxu0 0.0
        %1530 = vmatpush1.msra.mxu0 %v1026
        %1531 = vmatprep.subr.mxu0 0.0
        %1532 = vmatpush1.msra.mxu0 %v1027
        %1533 = vmatprep.subr.mxu0 0.0
        %1534 = vmatpush1.msra.mxu0 %v1028
        %1535 = vmatprep.subr.mxu0 0.0
        %1536 = vmatpush1.msra.mxu0 %v1029
        %1537 = vmatprep.subr.mxu0 0.0
        %1538 = vmatpush1.msra.mxu0 %v1030
        %1539 = vmatprep.subr.mxu0 0.0
        %1540 = vmatpush1.msra.mxu0 %v1031
        %1541 = vmatprep.subr.mxu0 0.0
        %1542 = vmatpush1.msra.mxu0 %v1032
        %1543 = vmatprep.subr.mxu0 0.0
        %1544 = vmatpush1.msra.mxu0 %v1033
        %1545 = vmatprep.subr.mxu0 0.0
        %1546 = vmatpush1.msra.mxu0 %v1034
        %1547 = vmatprep.subr.mxu0 0.0
        %1548 = vmatpush1.msra.mxu0 %v1035
        %1549 = vmatprep.subr.mxu0 0.0
        %1550 = vmatpush1.msra.mxu0 0.0
        %1551 = vmatprep.subr.mxu0 0.0
        %1552 = vmatpush1.msra.mxu0 0.0
        %1553 = vmatprep.subr.mxu0 0.0
        %1554 = vmatpush1.msra.mxu0 0.0
        %1555 = vmatprep.subr.mxu0 0.0
        %1556 = vmatpush1.msra.mxu0 0.0
        %1557 = vmatprep.subr.mxu0 0.0
        %1558 = vmatpush1.msra.mxu0 0.0
        %1559 = vmatprep.subr.mxu0 0.0
        %1560 = vmatpush1.msra.mxu0 0.0
        %1561 = vmatprep.subr.mxu0 0.0
        %1562 = vmatpush1.msra.mxu0 0.0
        %1563 = vmatprep.subr.mxu0 0.0
        %1564 = vmatpush1.msra.mxu0 0.0
        %1565 = vmatprep.subr.mxu0 0.0
        %1566 = vmatpush1.msra.mxu0 0.0
        %1567 = vmatprep.subr.mxu0 0.0
        %1568 = vmatpush1.msra.mxu0 0.0
        %1569 = vmatprep.subr.mxu0 0.0
        %1570 = vmatpush1.msra.mxu0 0.0
        %1571 = vmatprep.subr.mxu0 0.0
        %1572 = vmatpush1.msra.mxu0 0.0
        %1573 = vmatprep.subr.mxu0 0.0
        %1574 = vmatpush1.msra.mxu0 0.0
        %1575 = vmatprep.subr.mxu0 0.0
        %1576 = vmatpush1.msra.mxu0 0.0
        %1577 = vmatprep.subr.mxu0 0.0
        %1578 = vmatpush1.msra.mxu0 0.0
        %1579 = vmatprep.subr.mxu0 0.0
        %1580 = vmatpush1.msra.mxu0 0.0
        %1581 = vmatprep.mubr.f32.mxu0 0.0
        %1582 = vmatmul.mubr.f32.gmra.mrb[0].mxu0 %v1198
        %v1583 = vpop.f32.mrb[0].mxu0
        %v1584 = vadd.f32 %v1515, %v1583
        %v1585 = vpop.f32.mrb[0].mxu0
        %1586 = vmatprep.mubr.f32.mxu0 0.0
        %1587 = vmatmul.mubr.f32.gmra.mrb[0].mxu0 %v1302
        %v1588 = vpop.f32.mrb[0].mxu0
        %v1589 = vadd.f32 %v1515, %v1588
        %v1590 = vpop.f32.mrb[0].mxu0
        %1591 = vmatprep.mubr.f32.mxu0 0.0
        %1592 = vmatmul.mubr.f32.gmra.mrb[0].mxu0 %v1406
        %v1593 = vpop.f32.mrb[0].mxu0
        %v1594 = vadd.f32 %v1515, %v1593
        %v1595 = vpop.f32.mrb[0].mxu0
        %1596 = vmatprep.mubr.f32.mxu0 0.0
        %1597 = vmatmul.mubr.f32.gmra.mrb[0].mxu0 %v1510
        %v1598 = vpop.f32.mrb[0].mxu0
        %v1599 = vadd.f32 %v1515, %v1598
        %v1600 = vpop.f32.mrb[0].mxu0
        %1601 = vdwg.mxu0
        %v1602 = vtanh.pop %v1584
        %v1603 = vtanh.pop %v1589
        %v1604 = vtanh.pop %v1594
        %v1605 = vtanh.pop %v1599
        %v1606 = vmul.f32 %v1602, 0.1
        %v1607 = vmul.f32 %v1603, 0.1
        %v1608 = vmul.f32 %v1604, 0.1
        %v1609 = vmul.f32 %v1605, 0.1
        %v1610 = vadd.f32 %v1606, %v1088
        %v1611 = vadd.f32 %v1607, %v1090
        %v1612 = vadd.f32 %v1608, %v1092
        %v1613 = vadd.f32 %v1609, %v1094
        %v1614 = vld [vmem:[#allocation7] sm:$0xff]
        %v1615 = vld [vmem:[#allocation7 + $0x8] sm:$0xff]
        %v1616 = vld [vmem:[#allocation7 + $0x10] sm:$0xff]
        %v1617 = vld [vmem:[#allocation7 + $0x18] sm:$0xff]
        %v1618 = vld [vmem:[#allocation7 + $0x20] sm:$0xff]
        %v1619 = vld [vmem:[#allocation7 + $0x28] sm:$0xff]
        %v1620 = vld [vmem:[#allocation7 + $0x30] sm:$0xff]
        %v1621 = vld [vmem:[#allocation7 + $0x38] sm:$0xff]
        %v1622 = vld [vmem:[#allocation7 + $0x40] sm:$0xff]
        %v1623 = vld [vmem:[#allocation7 + $0x48] sm:$0xff]
        %v1624 = vld [vmem:[#allocation7 + $0x50] sm:$0xff]
        %v1625 = vld [vmem:[#allocation7 + $0x58] sm:$0xff]
        %v1626 = vld [vmem:[#allocation7 + $0x60] sm:$0xff]
        %v1627 = vld [vmem:[#allocation7 + $0x68] sm:$0xff]
        %v1628 = vld [vmem:[#allocation7 + $0x70] sm:$0xff]
        %v1629 = vld [vmem:[#allocation7 + $0x78] sm:$0xff]
        %v1630 = vld [vmem:[#allocation7 + $0x80] sm:$0xff]
        %v1631 = vld [vmem:[#allocation7 + $0x88] sm:$0xff]
        %v1632 = vld [vmem:[#allocation7 + $0x90] sm:$0xff]
        %v1633 = vld [vmem:[#allocation7 + $0x98] sm:$0xff]
        %v1634 = vld [vmem:[#allocation7 + $0xa0] sm:$0xff]
        %v1635 = vld [vmem:[#allocation7 + $0xa8] sm:$0xff]
        %v1636 = vld [vmem:[#allocation7 + $0xb0] sm:$0xff]
        %v1637 = vld [vmem:[#allocation7 + $0xb8] sm:$0xff]
        %v1638 = vld [vmem:[#allocation7 + $0xc0] sm:$0xff]
        %v1639 = vld [vmem:[#allocation7 + $0xc8] sm:$0xff]
        %v1640 = vld [vmem:[#allocation7 + $0xd0] sm:$0xff]
        %v1641 = vld [vmem:[#allocation7 + $0xd8] sm:$0xff]
        %v1642 = vld [vmem:[#allocation7 + $0xe0] sm:$0xff]
        %v1643 = vld [vmem:[#allocation7 + $0xe8] sm:$0xff]
        %v1644 = vld [vmem:[#allocation7 + $0xf0] sm:$0xff]
        %v1645 = vld [vmem:[#allocation7 + $0xf8] sm:$0xff]
        %v1646 = vld [vmem:[#allocation9] sm:$0x3]
        %v1647 = vld [vmem:[#allocation10] sm:$0xff]
        %v1648 = vld [vmem:[#allocation10 + $0x8] sm:$0xff]
        %v1649 = vld [vmem:[#allocation10 + $0x10] sm:$0xff]
        %v1650 = vld [vmem:[#allocation10 + $0x18] sm:$0xff]
        %v1651 = vld [vmem:[#allocation10 + $0x20] sm:$0xff]
        %v1652 = vld [vmem:[#allocation10 + $0x28] sm:$0xff]
        %v1653 = vld [vmem:[#allocation10 + $0x30] sm:$0xff]
        %v1654 = vld [vmem:[#allocation10 + $0x38] sm:$0xff]
        %v1655 = vld [vmem:[#allocation10 + $0x40] sm:$0xff]
        %v1656 = vld [vmem:[#allocation10 + $0x48] sm:$0xff]
        %v1657 = vld [vmem:[#allocation10 + $0x50] sm:$0xff]
        %v1658 = vld [vmem:[#allocation10 + $0x58] sm:$0xff]
        %v1659 = vld [vmem:[#allocation10 + $0x60] sm:$0xff]
        %v1660 = vld [vmem:[#allocation10 + $0x68] sm:$0xff]
        %v1661 = vld [vmem:[#allocation10 + $0x70] sm:$0xff]
        %v1662 = vld [vmem:[#allocation10 + $0x78] sm:$0xff]
        %v1663 = vld [vmem:[#allocation12] sm:$0x1]
        %v1665 = vlaneseq
        %v1666 = vshrl.u32 %v1665, 7
        %v1667 = vsub.s32 0, %v1666
        %v1668 = vrot.slane %v1646, %v1667
        %v1669 = vlaneseq
        %v1670 = vshrl.u32 %v1669, 7
        %v1671 = vsub.s32 1, %v1670
        %v1672 = vrot.slane %v1646, %v1671
        %1675 = vmatprep.subr.mxu0 %v1615
        %1676 = vmatpush1.msra.mxu0 %v1614
        %1677 = vmatprep.subr.mxu0 %v1617
        %1678 = vmatpush1.msra.mxu0 %v1616
        %1679 = vmatprep.subr.mxu0 %v1619
        %1680 = vmatpush1.msra.mxu0 %v1618
        %1681 = vmatprep.subr.mxu0 %v1621
        %1682 = vmatpush1.msra.mxu0 %v1620
        %1683 = vmatprep.subr.mxu0 %v1623
        %1684 = vmatpush1.msra.mxu0 %v1622
        %1685 = vmatprep.subr.mxu0 %v1625
        %1686 = vmatpush1.msra.mxu0 %v1624
        %1687 = vmatprep.subr.mxu0 %v1627
        %1688 = vmatpush1.msra.mxu0 %v1626
        %1689 = vmatprep.subr.mxu0 %v1629
        %1690 = vmatpush1.msra.mxu0 %v1628
        %1691 = vmatprep.subr.mxu0 %v1631
        %1692 = vmatpush1.msra.mxu0 %v1630
        %1693 = vmatprep.subr.mxu0 %v1633
        %1694 = vmatpush1.msra.mxu0 %v1632
        %1695 = vmatprep.subr.mxu0 %v1635
        %1696 = vmatpush1.msra.mxu0 %v1634
        %1697 = vmatprep.subr.mxu0 %v1637
        %1698 = vmatpush1.msra.mxu0 %v1636
        %1699 = vmatprep.subr.mxu0 %v1639
        %1700 = vmatpush1.msra.mxu0 %v1638
        %1701 = vmatprep.subr.mxu0 %v1641
        %1702 = vmatpush1.msra.mxu0 %v1640
        %1703 = vmatprep.subr.mxu0 %v1643
        %1704 = vmatpush1.msra.mxu0 %v1642
        %1705 = vmatprep.subr.mxu0 %v1645
        %1706 = vmatpush1.msra.mxu0 %v1644
        %1707 = vmatprep.subr.mxu0 0.0
        %1708 = vmatpush1.msra.mxu0 0.0
        %1709 = vmatprep.subr.mxu0 0.0
        %1710 = vmatpush1.msra.mxu0 0.0
        %1711 = vmatprep.subr.mxu0 0.0
        %1712 = vmatpush1.msra.mxu0 0.0
        %1713 = vmatprep.subr.mxu0 0.0
        %1714 = vmatpush1.msra.mxu0 0.0
        %1715 = vmatprep.subr.mxu0 0.0
        %1716 = vmatpush1.msra.mxu0 0.0
        %1717 = vmatprep.subr.mxu0 0.0
        %1718 = vmatpush1.msra.mxu0 0.0
        %1719 = vmatprep.subr.mxu0 0.0
        %1720 = vmatpush1.msra.mxu0 0.0
        %1721 = vmatprep.subr.mxu0 0.0
        %1722 = vmatpush1.msra.mxu0 0.0
        %1723 = vmatprep.subr.mxu0 0.0
        %1724 = vmatpush1.msra.mxu0 0.0
        %1725 = vmatprep.subr.mxu0 0.0
        %1726 = vmatpush1.msra.mxu0 0.0
        %1727 = vmatprep.subr.mxu0 0.0
        %1728 = vmatpush1.msra.mxu0 0.0
        %1729 = vmatprep.subr.mxu0 0.0
        %1730 = vmatpush1.msra.mxu0 0.0
        %1731 = vmatprep.subr.mxu0 0.0
        %1732 = vmatpush1.msra.mxu0 0.0
        %1733 = vmatprep.subr.mxu0 0.0
        %1734 = vmatpush1.msra.mxu0 0.0
        %1735 = vmatprep.subr.mxu0 0.0
        %1736 = vmatpush1.msra.mxu0 0.0
        %1737 = vmatprep.subr.mxu0 0.0
        %1738 = vmatpush1.msra.mxu0 0.0
        %1739 = vmatprep.mubr.f32.mxu0 0.0
        %1740 = vmatmul.mubr.f32.gmra.mrb[0].mxu0 %v1610
        %v1741 = vpop.f32.mrb[0].mxu0
        %v1742 = vadd.f32 %v1668, %v1741
        %v1743 = vpop.f32.mrb[0].mxu0
        %v1744 = vadd.f32 %v1672, %v1743
        %1745 = vmatprep.mubr.f32.mxu0 0.0
        %1746 = vmatmul.mubr.f32.gmra.mrb[0].mxu0 %v1611
        %v1747 = vpop.f32.mrb[0].mxu0
        %v1748 = vadd.f32 %v1668, %v1747
        %v1749 = vpop.f32.mrb[0].mxu0
        %v1750 = vadd.f32 %v1672, %v1749
        %1751 = vmatprep.mubr.f32.mxu0 0.0
        %1752 = vmatmul.mubr.f32.gmra.mrb[0].mxu0 %v1612
        %v1753 = vpop.f32.mrb[0].mxu0
        %v1754 = vadd.f32 %v1668, %v1753
        %v1755 = vpop.f32.mrb[0].mxu0
        %v1756 = vadd.f32 %v1672, %v1755
        %1757 = vmatprep.mubr.f32.mxu0 0.0
        %1758 = vmatmul.mubr.f32.gmra.mrb[0].mxu0 %v1613
        %v1759 = vpop.f32.mrb[0].mxu0
        %v1760 = vadd.f32 %v1668, %v1759
        %v1761 = vpop.f32.mrb[0].mxu0
        %v1762 = vadd.f32 %v1672, %v1761
        %1763 = vdwg.mxu0
        %v1764 = vand.u32 2147483647, %v1742
        %vm1765 = vcmp.le.f32.partialorder %v1764, 0.7853982
        %vm1766 = vcmp.lt.s32.totalorder %v1742, 0
        %v1767 = vand.u32 %v1742, 2139095040
        %v1768 = vshrl.u32 %v1767, 23
        %v1769 = vsub.s32 %v1768, 127
        %v1770 = vand.u32 2147483647, %v1742
        %v1771 = vand.u32 %v1770, 8388607
        %v1772 = vor.u32 %v1771, 8388608
        %v1773 = vsub.s32 0, %v1772
        %v1774 = vadd.s32 %v1769, 1
        %vm1775 = vcmp.gt.s32.totalorder %v1774, 0
        %v1776 = vsel %vm1775, %v1774, 0
        %v1777 = vshrl.u32 %v1776, 5
        %v1778 = vand.u32 %v1776, 31
        %v1779 = vsub.s32 32, %v1778
        %v1780 = vshrl.u32 683565275, %v1779
        %v1781 = vshll.u32 683565275, %v1778
        %v1782 = vshrl.u32 2475754826, %v1779
        %v1783 = vor.u32 %v1781, %v1782
        %v1784 = vshll.u32 2475754826, %v1778
        %v1785 = vshrl.u32 2131351028, %v1779
        %v1786 = vor.u32 %v1784, %v1785
        %v1787 = vshll.u32 2131351028, %v1778
        %v1788 = vshrl.u32 2102212464, %v1779
        %v1789 = vor.u32 %v1787, %v1788
        %v1790 = vshll.u32 2102212464, %v1778
        %v1791 = vshrl.u32 920167782, %v1779
        %v1792 = vor.u32 %v1790, %v1791
        %v1793 = vshll.u32 920167782, %v1778
        %v1794 = vshrl.u32 1326507024, %v1779
        %v1795 = vor.u32 %v1793, %v1794
        %vm1796 = vcmp.lt.s32.totalorder %v1777, 1
        %vm1797 = vcmp.lt.s32.totalorder %v1777, 2
        %vm1798 = vcmp.lt.s32.totalorder %v1777, 3
        %vm1799 = vcmp.lt.s32.totalorder %v1777, 4
        %v1800 = vsel %vm1796, %v1780, %v1783
        %v1801 = vsel %vm1799, %v1789, 2102212464
        %v1802 = vsel %vm1798, %v1786, %v1801
        %v1803 = vsel %vm1797, %v1800, %v1802
        %v1804 = vsel %vm1796, %v1783, %v1786
        %v1805 = vsel %vm1799, %v1792, 920167782
        %v1806 = vsel %vm1798, %v1789, %v1805
        %v1807 = vsel %vm1797, %v1804, %v1806
        %v1808 = vsel %vm1796, %v1786, %v1789
        %v1809 = vsel %vm1799, %v1795, 1326507024
        %v1810 = vsel %vm1798, %v1792, %v1809
        %v1811 = vsel %vm1797, %v1808, %v1810
        %v1812 = vshll.u32 %v1772, 8
        %v1813 = vmul.u32.u64.compose %v1812, %v1811
        %v1814 = vextract.low.u32 %v1813
        %v1815 = vextract.high.u32 %v1813
        %v1816 = vmul.u32.u64.compose %v1812, %v1807
        %v1817 = vextract.low.u32 %v1816
        %v1818 = vextract.high.u32 %v1816
        %v1819 = vmul.u32 %v1812, %v1803
        %v1820 = vadd.s32 %v1815, %v1817
        %vm1821 = vc.u32 %v1815, %v1817
        %v1822 = vadd.s32 %v1818, 1
        %v1823 = vsel %vm1821, %v1822, %v1818
        %v1824 = vadd.s32 %v1819, %v1823
        %v1825 = vadd.s32 %v1824, 536870912
        %v1826 = vshrl.u32 %v1825, 30
        %v1827 = vshll.u32 %v1826, 30
        %v1828 = vsub.s32 %v1824, %v1827
        %vm1829 = vcmp.lt.s32.totalorder %v1828, 0
        %v1830 = vsub.s32 0, %v1828
        %v1831 = vsel %vm1829, %v1830, %v1828
        %v1832 = vclz %v1831
        %v1833 = vsub.s32 %v1832, 2
        %vm1834 = vcmp.gt.s32.totalorder 0, %v1833
        %v1835 = vsel %vm1834, 0, %v1833
        %v1836 = vsub.s32 32, %v1835
        %v1837 = vshll.u32 %v1828, %v1835
        %v1838 = vshrl.u32 %v1820, %v1836
        %v1839 = vor.u32 %v1837, %v1838
        %v1840 = vsub.s32 4294967266, %v1835
        %v1841 = vadd.s32 %v1840, 127
        %v1842 = vshll.u32 %v1841, 23
        %v1843 = vor.u32 4788187, %v1842
        %v1844 = vand.u32 2147483647, %v1843
        %v1846 = vcvt.s32.f32 %v1839
        %v1847 = vmul.f32 %v1846, %v1844
        %v1848 = vxor.u32 %v1847, 2147483648
        %v1849 = vsel %vm1766, %v1848, %v1847
        %v1850 = vsub.s32 4, %v1826
        %v1851 = vsel %vm1766, %v1850, %v1826
        %v1852 = vsel %vm1765, %v1742, %v1849
        %v1853 = vsel %vm1765, 0, %v1851
        %v1854 = vcosq.f32.pop %v1852
        %v1855 = vsinq.f32.pop %v1852
        %vm1856 = vweird.f32 %v1742
        %v1857 = vadd.s32 %v1853, 3
        %v1858 = vand.u32 %v1857, 3
        %vm1859 = vcmp.lt.s32.totalorder %v1858, 2
        %vm1860 = vcmp.eq.s32.totalorder %v1858, 0
        %v1861 = vxor.u32 %v1855, 2147483648
        %v1862 = vsel %vm1860, %v1854, %v1861
        %vm1863 = vcmp.eq.s32.totalorder %v1858, 2
        %v1864 = vxor.u32 %v1854, 2147483648
        %v1865 = vsel %vm1863, %v1864, %v1855
        %v1866 = vsel %vm1859, %v1862, %v1865
        %v1867 = vsel %vm1856, nan, %v1866
        %v1868 = vand.u32 2147483647, %v1748
        %vm1869 = vcmp.le.f32.partialorder %v1868, 0.7853982
        %vm1870 = vcmp.lt.s32.totalorder %v1748, 0
        %v1871 = vand.u32 %v1748, 2139095040
        %v1872 = vshrl.u32 %v1871, 23
        %v1873 = vsub.s32 %v1872, 127
        %v1874 = vand.u32 2147483647, %v1748
        %v1875 = vand.u32 %v1874, 8388607
        %v1876 = vor.u32 %v1875, 8388608
        %v1877 = vsub.s32 0, %v1876
        %v1878 = vadd.s32 %v1873, 1
        %vm1879 = vcmp.gt.s32.totalorder %v1878, 0
        %v1880 = vsel %vm1879, %v1878, 0
        %v1881 = vshrl.u32 %v1880, 5
        %v1882 = vand.u32 %v1880, 31
        %v1883 = vsub.s32 32, %v1882
        %v1884 = vshrl.u32 683565275, %v1883
        %v1885 = vshll.u32 683565275, %v1882
        %v1886 = vshrl.u32 2475754826, %v1883
        %v1887 = vor.u32 %v1885, %v1886
        %v1888 = vshll.u32 2475754826, %v1882
        %v1889 = vshrl.u32 2131351028, %v1883
        %v1890 = vor.u32 %v1888, %v1889
        %v1891 = vshll.u32 2131351028, %v1882
        %v1892 = vshrl.u32 2102212464, %v1883
        %v1893 = vor.u32 %v1891, %v1892
        %v1894 = vshll.u32 2102212464, %v1882
        %v1895 = vshrl.u32 920167782, %v1883
        %v1896 = vor.u32 %v1894, %v1895
        %v1897 = vshll.u32 920167782, %v1882
        %v1898 = vshrl.u32 1326507024, %v1883
        %v1899 = vor.u32 %v1897, %v1898
        %vm1900 = vcmp.lt.s32.totalorder %v1881, 1
        %vm1901 = vcmp.lt.s32.totalorder %v1881, 2
        %vm1902 = vcmp.lt.s32.totalorder %v1881, 3
        %vm1903 = vcmp.lt.s32.totalorder %v1881, 4
        %v1904 = vsel %vm1900, %v1884, %v1887
        %v1905 = vsel %vm1903, %v1893, 2102212464
        %v1906 = vsel %vm1902, %v1890, %v1905
        %v1907 = vsel %vm1901, %v1904, %v1906
        %v1908 = vsel %vm1900, %v1887, %v1890
        %v1909 = vsel %vm1903, %v1896, 920167782
        %v1910 = vsel %vm1902, %v1893, %v1909
        %v1911 = vsel %vm1901, %v1908, %v1910
        %v1912 = vsel %vm1900, %v1890, %v1893
        %v1913 = vsel %vm1903, %v1899, 1326507024
        %v1914 = vsel %vm1902, %v1896, %v1913
        %v1915 = vsel %vm1901, %v1912, %v1914
        %v1916 = vshll.u32 %v1876, 8
        %v1917 = vmul.u32.u64.compose %v1916, %v1915
        %v1918 = vextract.low.u32 %v1917
        %v1919 = vextract.high.u32 %v1917
        %v1920 = vmul.u32.u64.compose %v1916, %v1911
        %v1921 = vextract.low.u32 %v1920
        %v1922 = vextract.high.u32 %v1920
        %v1923 = vmul.u32 %v1916, %v1907
        %v1924 = vadd.s32 %v1919, %v1921
        %vm1925 = vc.u32 %v1919, %v1921
        %v1926 = vadd.s32 %v1922, 1
        %v1927 = vsel %vm1925, %v1926, %v1922
        %v1928 = vadd.s32 %v1923, %v1927
        %v1929 = vadd.s32 %v1928, 536870912
        %v1930 = vshrl.u32 %v1929, 30
        %v1931 = vshll.u32 %v1930, 30
        %v1932 = vsub.s32 %v1928, %v1931
        %vm1933 = vcmp.lt.s32.totalorder %v1932, 0
        %v1934 = vsub.s32 0, %v1932
        %v1935 = vsel %vm1933, %v1934, %v1932
        %v1936 = vclz %v1935
        %v1937 = vsub.s32 %v1936, 2
        %vm1938 = vcmp.gt.s32.totalorder 0, %v1937
        %v1939 = vsel %vm1938, 0, %v1937
        %v1940 = vsub.s32 32, %v1939
        %v1941 = vshll.u32 %v1932, %v1939
        %v1942 = vshrl.u32 %v1924, %v1940
        %v1943 = vor.u32 %v1941, %v1942
        %v1944 = vsub.s32 4294967266, %v1939
        %v1945 = vadd.s32 %v1944, 127
        %v1946 = vshll.u32 %v1945, 23
        %v1947 = vor.u32 4788187, %v1946
        %v1948 = vand.u32 2147483647, %v1947
        %v1950 = vcvt.s32.f32 %v1943
        %v1951 = vmul.f32 %v1950, %v1948
        %v1952 = vxor.u32 %v1951, 2147483648
        %v1953 = vsel %vm1870, %v1952, %v1951
        %v1954 = vsub.s32 4, %v1930
        %v1955 = vsel %vm1870, %v1954, %v1930
        %v1956 = vsel %vm1869, %v1748, %v1953
        %v1957 = vsel %vm1869, 0, %v1955
        %v1958 = vcosq.f32.pop %v1956
        %v1959 = vsinq.f32.pop %v1956
        %vm1960 = vweird.f32 %v1748
        %v1961 = vadd.s32 %v1957, 3
        %v1962 = vand.u32 %v1961, 3
        %vm1963 = vcmp.lt.s32.totalorder %v1962, 2
        %vm1964 = vcmp.eq.s32.totalorder %v1962, 0
        %v1965 = vxor.u32 %v1959, 2147483648
        %v1966 = vsel %vm1964, %v1958, %v1965
        %vm1967 = vcmp.eq.s32.totalorder %v1962, 2
        %v1968 = vxor.u32 %v1958, 2147483648
        %v1969 = vsel %vm1967, %v1968, %v1959
        %v1970 = vsel %vm1963, %v1966, %v1969
        %v1971 = vsel %vm1960, nan, %v1970
        %v1972 = vand.u32 2147483647, %v1754
        %vm1973 = vcmp.le.f32.partialorder %v1972, 0.7853982
        %vm1974 = vcmp.lt.s32.totalorder %v1754, 0
        %v1975 = vand.u32 %v1754, 2139095040
        %v1976 = vshrl.u32 %v1975, 23
        %v1977 = vsub.s32 %v1976, 127
        %v1978 = vand.u32 2147483647, %v1754
        %v1979 = vand.u32 %v1978, 8388607
        %v1980 = vor.u32 %v1979, 8388608
        %v1981 = vsub.s32 0, %v1980
        %v1982 = vadd.s32 %v1977, 1
        %vm1983 = vcmp.gt.s32.totalorder %v1982, 0
        %v1984 = vsel %vm1983, %v1982, 0
        %v1985 = vshrl.u32 %v1984, 5
        %v1986 = vand.u32 %v1984, 31
        %v1987 = vsub.s32 32, %v1986
        %v1988 = vshrl.u32 683565275, %v1987
        %v1989 = vshll.u32 683565275, %v1986
        %v1990 = vshrl.u32 2475754826, %v1987
        %v1991 = vor.u32 %v1989, %v1990
        %v1992 = vshll.u32 2475754826, %v1986
        %v1993 = vshrl.u32 2131351028, %v1987
        %v1994 = vor.u32 %v1992, %v1993
        %v1995 = vshll.u32 2131351028, %v1986
        %v1996 = vshrl.u32 2102212464, %v1987
        %v1997 = vor.u32 %v1995, %v1996
        %v1998 = vshll.u32 2102212464, %v1986
        %v1999 = vshrl.u32 920167782, %v1987
        %v2000 = vor.u32 %v1998, %v1999
        %v2001 = vshll.u32 920167782, %v1986
        %v2002 = vshrl.u32 1326507024, %v1987
        %v2003 = vor.u32 %v2001, %v2002
        %vm2004 = vcmp.lt.s32.totalorder %v1985, 1
        %vm2005 = vcmp.lt.s32.totalorder %v1985, 2
        %vm2006 = vcmp.lt.s32.totalorder %v1985, 3
        %vm2007 = vcmp.lt.s32.totalorder %v1985, 4
        %v2008 = vsel %vm2004, %v1988, %v1991
        %v2009 = vsel %vm2007, %v1997, 2102212464
        %v2010 = vsel %vm2006, %v1994, %v2009
        %v2011 = vsel %vm2005, %v2008, %v2010
        %v2012 = vsel %vm2004, %v1991, %v1994
        %v2013 = vsel %vm2007, %v2000, 920167782
        %v2014 = vsel %vm2006, %v1997, %v2013
        %v2015 = vsel %vm2005, %v2012, %v2014
        %v2016 = vsel %vm2004, %v1994, %v1997
        %v2017 = vsel %vm2007, %v2003, 1326507024
        %v2018 = vsel %vm2006, %v2000, %v2017
        %v2019 = vsel %vm2005, %v2016, %v2018
        %v2020 = vshll.u32 %v1980, 8
        %v2021 = vmul.u32.u64.compose %v2020, %v2019
        %v2022 = vextract.low.u32 %v2021
        %v2023 = vextract.high.u32 %v2021
        %v2024 = vmul.u32.u64.compose %v2020, %v2015
        %v2025 = vextract.low.u32 %v2024
        %v2026 = vextract.high.u32 %v2024
        %v2027 = vmul.u32 %v2020, %v2011
        %v2028 = vadd.s32 %v2023, %v2025
        %vm2029 = vc.u32 %v2023, %v2025
        %v2030 = vadd.s32 %v2026, 1
        %v2031 = vsel %vm2029, %v2030, %v2026
        %v2032 = vadd.s32 %v2027, %v2031
        %v2033 = vadd.s32 %v2032, 536870912
        %v2034 = vshrl.u32 %v2033, 30
        %v2035 = vshll.u32 %v2034, 30
        %v2036 = vsub.s32 %v2032, %v2035
        %vm2037 = vcmp.lt.s32.totalorder %v2036, 0
        %v2038 = vsub.s32 0, %v2036
        %v2039 = vsel %vm2037, %v2038, %v2036
        %v2040 = vclz %v2039
        %v2041 = vsub.s32 %v2040, 2
        %vm2042 = vcmp.gt.s32.totalorder 0, %v2041
        %v2043 = vsel %vm2042, 0, %v2041
        %v2044 = vsub.s32 32, %v2043
        %v2045 = vshll.u32 %v2036, %v2043
        %v2046 = vshrl.u32 %v2028, %v2044
        %v2047 = vor.u32 %v2045, %v2046
        %v2048 = vsub.s32 4294967266, %v2043
        %v2049 = vadd.s32 %v2048, 127
        %v2050 = vshll.u32 %v2049, 23
        %v2051 = vor.u32 4788187, %v2050
        %v2052 = vand.u32 2147483647, %v2051
        %v2054 = vcvt.s32.f32 %v2047
        %v2055 = vmul.f32 %v2054, %v2052
        %v2056 = vxor.u32 %v2055, 2147483648
        %v2057 = vsel %vm1974, %v2056, %v2055
        %v2058 = vsub.s32 4, %v2034
        %v2059 = vsel %vm1974, %v2058, %v2034
        %v2060 = vsel %vm1973, %v1754, %v2057
        %v2061 = vsel %vm1973, 0, %v2059
        %v2062 = vcosq.f32.pop %v2060
        %v2063 = vsinq.f32.pop %v2060
        %vm2064 = vweird.f32 %v1754
        %v2065 = vadd.s32 %v2061, 3
        %v2066 = vand.u32 %v2065, 3
        %vm2067 = vcmp.lt.s32.totalorder %v2066, 2
        %vm2068 = vcmp.eq.s32.totalorder %v2066, 0
        %v2069 = vxor.u32 %v2063, 2147483648
        %v2070 = vsel %vm2068, %v2062, %v2069
        %vm2071 = vcmp.eq.s32.totalorder %v2066, 2
        %v2072 = vxor.u32 %v2062, 2147483648
        %v2073 = vsel %vm2071, %v2072, %v2063
        %v2074 = vsel %vm2067, %v2070, %v2073
        %v2075 = vsel %vm2064, nan, %v2074
        %v2076 = vand.u32 2147483647, %v1760
        %vm2077 = vcmp.le.f32.partialorder %v2076, 0.7853982
        %vm2078 = vcmp.lt.s32.totalorder %v1760, 0
        %v2079 = vand.u32 %v1760, 2139095040
        %v2080 = vshrl.u32 %v2079, 23
        %v2081 = vsub.s32 %v2080, 127
        %v2082 = vand.u32 2147483647, %v1760
        %v2083 = vand.u32 %v2082, 8388607
        %v2084 = vor.u32 %v2083, 8388608
        %v2085 = vsub.s32 0, %v2084
        %v2086 = vadd.s32 %v2081, 1
        %vm2087 = vcmp.gt.s32.totalorder %v2086, 0
        %v2088 = vsel %vm2087, %v2086, 0
        %v2089 = vshrl.u32 %v2088, 5
        %v2090 = vand.u32 %v2088, 31
        %v2091 = vsub.s32 32, %v2090
        %v2092 = vshrl.u32 683565275, %v2091
        %v2093 = vshll.u32 683565275, %v2090
        %v2094 = vshrl.u32 2475754826, %v2091
        %v2095 = vor.u32 %v2093, %v2094
        %v2096 = vshll.u32 2475754826, %v2090
        %v2097 = vshrl.u32 2131351028, %v2091
        %v2098 = vor.u32 %v2096, %v2097
        %v2099 = vshll.u32 2131351028, %v2090
        %v2100 = vshrl.u32 2102212464, %v2091
        %v2101 = vor.u32 %v2099, %v2100
        %v2102 = vshll.u32 2102212464, %v2090
        %v2103 = vshrl.u32 920167782, %v2091
        %v2104 = vor.u32 %v2102, %v2103
        %v2105 = vshll.u32 920167782, %v2090
        %v2106 = vshrl.u32 1326507024, %v2091
        %v2107 = vor.u32 %v2105, %v2106
        %vm2108 = vcmp.lt.s32.totalorder %v2089, 1
        %vm2109 = vcmp.lt.s32.totalorder %v2089, 2
        %vm2110 = vcmp.lt.s32.totalorder %v2089, 3
        %vm2111 = vcmp.lt.s32.totalorder %v2089, 4
        %v2112 = vsel %vm2108, %v2092, %v2095
        %v2113 = vsel %vm2111, %v2101, 2102212464
        %v2114 = vsel %vm2110, %v2098, %v2113
        %v2115 = vsel %vm2109, %v2112, %v2114
        %v2116 = vsel %vm2108, %v2095, %v2098
        %v2117 = vsel %vm2111, %v2104, 920167782
        %v2118 = vsel %vm2110, %v2101, %v2117
        %v2119 = vsel %vm2109, %v2116, %v2118
        %v2120 = vsel %vm2108, %v2098, %v2101
        %v2121 = vsel %vm2111, %v2107, 1326507024
        %v2122 = vsel %vm2110, %v2104, %v2121
        %v2123 = vsel %vm2109, %v2120, %v2122
        %v2124 = vshll.u32 %v2084, 8
        %v2125 = vmul.u32.u64.compose %v2124, %v2123
        %v2126 = vextract.low.u32 %v2125
        %v2127 = vextract.high.u32 %v2125
        %v2128 = vmul.u32.u64.compose %v2124, %v2119
        %v2129 = vextract.low.u32 %v2128
        %v2130 = vextract.high.u32 %v2128
        %v2131 = vmul.u32 %v2124, %v2115
        %v2132 = vadd.s32 %v2127, %v2129
        %vm2133 = vc.u32 %v2127, %v2129
        %v2134 = vadd.s32 %v2130, 1
        %v2135 = vsel %vm2133, %v2134, %v2130
        %v2136 = vadd.s32 %v2131, %v2135
        %v2137 = vadd.s32 %v2136, 536870912
        %v2138 = vshrl.u32 %v2137, 30
        %v2139 = vshll.u32 %v2138, 30
        %v2140 = vsub.s32 %v2136, %v2139
        %vm2141 = vcmp.lt.s32.totalorder %v2140, 0
        %v2142 = vsub.s32 0, %v2140
        %v2143 = vsel %vm2141, %v2142, %v2140
        %v2144 = vclz %v2143
        %v2145 = vsub.s32 %v2144, 2
        %vm2146 = vcmp.gt.s32.totalorder 0, %v2145
        %v2147 = vsel %vm2146, 0, %v2145
        %v2148 = vsub.s32 32, %v2147
        %v2149 = vshll.u32 %v2140, %v2147
        %v2150 = vshrl.u32 %v2132, %v2148
        %v2151 = vor.u32 %v2149, %v2150
        %v2152 = vsub.s32 4294967266, %v2147
        %v2153 = vadd.s32 %v2152, 127
        %v2154 = vshll.u32 %v2153, 23
        %v2155 = vor.u32 4788187, %v2154
        %v2156 = vand.u32 2147483647, %v2155
        %v2158 = vcvt.s32.f32 %v2151
        %v2159 = vmul.f32 %v2158, %v2156
        %v2160 = vxor.u32 %v2159, 2147483648
        %v2161 = vsel %vm2078, %v2160, %v2159
        %v2162 = vsub.s32 4, %v2138
        %v2163 = vsel %vm2078, %v2162, %v2138
        %v2164 = vsel %vm2077, %v1760, %v2161
        %v2165 = vsel %vm2077, 0, %v2163
        %v2166 = vcosq.f32.pop %v2164
        %v2167 = vsinq.f32.pop %v2164
        %vm2168 = vweird.f32 %v1760
        %v2169 = vadd.s32 %v2165, 3
        %v2170 = vand.u32 %v2169, 3
        %vm2171 = vcmp.lt.s32.totalorder %v2170, 2
        %vm2172 = vcmp.eq.s32.totalorder %v2170, 0
        %v2173 = vxor.u32 %v2167, 2147483648
        %v2174 = vsel %vm2172, %v2166, %v2173
        %vm2175 = vcmp.eq.s32.totalorder %v2170, 2
        %v2176 = vxor.u32 %v2166, 2147483648
        %v2177 = vsel %vm2175, %v2176, %v2167
        %v2178 = vsel %vm2171, %v2174, %v2177
        %v2179 = vsel %vm2168, nan, %v2178
        %v2181 = vlaneseq
        %v2182 = vshrl.u32 %v2181, 7
        %v2183 = vsub.s32 0, %v2182
        %v2184 = vrot.slane %v1663, %v2183
        %2186 = vmatprep.subr.mxu0 0.0
        %2187 = vmatpush1.msra.mxu0 %v1647
        %2188 = vmatprep.subr.mxu0 0.0
        %2189 = vmatpush1.msra.mxu0 %v1648
        %2190 = vmatprep.subr.mxu0 0.0
        %2191 = vmatpush1.msra.mxu0 %v1649
        %2192 = vmatprep.subr.mxu0 0.0
        %2193 = vmatpush1.msra.mxu0 %v1650
        %2194 = vmatprep.subr.mxu0 0.0
        %2195 = vmatpush1.msra.mxu0 %v1651
        %2196 = vmatprep.subr.mxu0 0.0
        %2197 = vmatpush1.msra.mxu0 %v1652
        %2198 = vmatprep.subr.mxu0 0.0
        %2199 = vmatpush1.msra.mxu0 %v1653
        %2200 = vmatprep.subr.mxu0 0.0
        %2201 = vmatpush1.msra.mxu0 %v1654
        %2202 = vmatprep.subr.mxu0 0.0
        %2203 = vmatpush1.msra.mxu0 %v1655
        %2204 = vmatprep.subr.mxu0 0.0
        %2205 = vmatpush1.msra.mxu0 %v1656
        %2206 = vmatprep.subr.mxu0 0.0
        %2207 = vmatpush1.msra.mxu0 %v1657
        %2208 = vmatprep.subr.mxu0 0.0
        %2209 = vmatpush1.msra.mxu0 %v1658
        %2210 = vmatprep.subr.mxu0 0.0
        %2211 = vmatpush1.msra.mxu0 %v1659
        %2212 = vmatprep.subr.mxu0 0.0
        %2213 = vmatpush1.msra.mxu0 %v1660
        %2214 = vmatprep.subr.mxu0 0.0
        %2215 = vmatpush1.msra.mxu0 %v1661
        %2216 = vmatprep.subr.mxu0 0.0
        %2217 = vmatpush1.msra.mxu0 %v1662
        %2218 = vmatprep.subr.mxu0 0.0
        %2219 = vmatpush1.msra.mxu0 0.0
        %2220 = vmatprep.subr.mxu0 0.0
        %2221 = vmatpush1.msra.mxu0 0.0
        %2222 = vmatprep.subr.mxu0 0.0
        %2223 = vmatpush1.msra.mxu0 0.0
        %2224 = vmatprep.subr.mxu0 0.0
        %2225 = vmatpush1.msra.mxu0 0.0
        %2226 = vmatprep.subr.mxu0 0.0
        %2227 = vmatpush1.msra.mxu0 0.0
        %2228 = vmatprep.subr.mxu0 0.0
        %2229 = vmatpush1.msra.mxu0 0.0
        %2230 = vmatprep.subr.mxu0 0.0
        %2231 = vmatpush1.msra.mxu0 0.0
        %2232 = vmatprep.subr.mxu0 0.0
        %2233 = vmatpush1.msra.mxu0 0.0
        %2234 = vmatprep.subr.mxu0 0.0
        %2235 = vmatpush1.msra.mxu0 0.0
        %2236 = vmatprep.subr.mxu0 0.0
        %2237 = vmatpush1.msra.mxu0 0.0
        %2238 = vmatprep.subr.mxu0 0.0
        %2239 = vmatpush1.msra.mxu0 0.0
        %2240 = vmatprep.subr.mxu0 0.0
        %2241 = vmatpush1.msra.mxu0 0.0
        %2242 = vmatprep.subr.mxu0 0.0
        %2243 = vmatpush1.msra.mxu0 0.0
        %2244 = vmatprep.subr.mxu0 0.0
        %2245 = vmatpush1.msra.mxu0 0.0
        %2246 = vmatprep.subr.mxu0 0.0
        %2247 = vmatpush1.msra.mxu0 0.0
        %2248 = vmatprep.subr.mxu0 0.0
        %2249 = vmatpush1.msra.mxu0 0.0
        %2250 = vmatprep.mubr.f32.mxu0 0.0
        %2251 = vmatmul.mubr.f32.gmra.mrb[0].mxu0 %v1867
        %v2252 = vpop.f32.mrb[0].mxu0
        %v2253 = vadd.f32 %v2184, %v2252
        %v2254 = vpop.f32.mrb[0].mxu0
        %2255 = vmatprep.mubr.f32.mxu0 0.0
        %2256 = vmatmul.mubr.f32.gmra.mrb[0].mxu0 %v1971
        %v2257 = vpop.f32.mrb[0].mxu0
        %v2258 = vadd.f32 %v2184, %v2257
        %v2259 = vpop.f32.mrb[0].mxu0
        %2260 = vmatprep.mubr.f32.mxu0 0.0
        %2261 = vmatmul.mubr.f32.gmra.mrb[0].mxu0 %v2075
        %v2262 = vpop.f32.mrb[0].mxu0
        %v2263 = vadd.f32 %v2184, %v2262
        %v2264 = vpop.f32.mrb[0].mxu0
        %2265 = vmatprep.mubr.f32.mxu0 0.0
        %2266 = vmatmul.mubr.f32.gmra.mrb[0].mxu0 %v2179
        %v2267 = vpop.f32.mrb[0].mxu0
        %v2268 = vadd.f32 %v2184, %v2267
        %v2269 = vpop.f32.mrb[0].mxu0
        %2270 = vdwg.mxu0
        %v2271 = vtanh.pop %v2253
        %v2272 = vtanh.pop %v2258
        %v2273 = vtanh.pop %v2263
        %v2274 = vtanh.pop %v2268
        %v2275 = vmul.f32 %v2271, 0.1
        %v2276 = vmul.f32 %v2272, 0.1
        %v2277 = vmul.f32 %v2273, 0.1
        %v2278 = vmul.f32 %v2274, 0.1
        %v2279 = vadd.f32 %v2275, %v1744
        %v2280 = vadd.f32 %v2276, %v1750
        %v2281 = vadd.f32 %v2277, %v1756
        %v2282 = vadd.f32 %v2278, %v1762
        %v2283 = vld [vmem:[#allocation13] sm:$0xff]
        %v2284 = vld [vmem:[#allocation13 + $0x8] sm:$0xff]
        %v2285 = vld [vmem:[#allocation13 + $0x10] sm:$0xff]
        %v2286 = vld [vmem:[#allocation13 + $0x18] sm:$0xff]
        %v2287 = vld [vmem:[#allocation13 + $0x20] sm:$0xff]
        %v2288 = vld [vmem:[#allocation13 + $0x28] sm:$0xff]
        %v2289 = vld [vmem:[#allocation13 + $0x30] sm:$0xff]
        %v2290 = vld [vmem:[#allocation13 + $0x38] sm:$0xff]
        %v2291 = vld [vmem:[#allocation13 + $0x40] sm:$0xff]
        %v2292 = vld [vmem:[#allocation13 + $0x48] sm:$0xff]
        %v2293 = vld [vmem:[#allocation13 + $0x50] sm:$0xff]
        %v2294 = vld [vmem:[#allocation13 + $0x58] sm:$0xff]
        %v2295 = vld [vmem:[#allocation13 + $0x60] sm:$0xff]
        %v2296 = vld [vmem:[#allocation13 + $0x68] sm:$0xff]
        %v2297 = vld [vmem:[#allocation13 + $0x70] sm:$0xff]
        %v2298 = vld [vmem:[#allocation13 + $0x78] sm:$0xff]
        %v2299 = vld [vmem:[#allocation13 + $0x80] sm:$0xff]
        %v2300 = vld [vmem:[#allocation13 + $0x88] sm:$0xff]
        %v2301 = vld [vmem:[#allocation13 + $0x90] sm:$0xff]
        %v2302 = vld [vmem:[#allocation13 + $0x98] sm:$0xff]
        %v2303 = vld [vmem:[#allocation13 + $0xa0] sm:$0xff]
        %v2304 = vld [vmem:[#allocation13 + $0xa8] sm:$0xff]
        %v2305 = vld [vmem:[#allocation13 + $0xb0] sm:$0xff]
        %v2306 = vld [vmem:[#allocation13 + $0xb8] sm:$0xff]
        %v2307 = vld [vmem:[#allocation13 + $0xc0] sm:$0xff]
        %v2308 = vld [vmem:[#allocation13 + $0xc8] sm:$0xff]
        %v2309 = vld [vmem:[#allocation13 + $0xd0] sm:$0xff]
        %v2310 = vld [vmem:[#allocation13 + $0xd8] sm:$0xff]
        %v2311 = vld [vmem:[#allocation13 + $0xe0] sm:$0xff]
        %v2312 = vld [vmem:[#allocation13 + $0xe8] sm:$0xff]
        %v2313 = vld [vmem:[#allocation13 + $0xf0] sm:$0xff]
        %v2314 = vld [vmem:[#allocation13 + $0xf8] sm:$0xff]
        %v2315 = vld [vmem:[#allocation15] sm:$0x3]
        %v2316 = vld [vmem:[#allocation16] sm:$0xff]
        %v2317 = vld [vmem:[#allocation16 + $0x8] sm:$0xff]
        %v2318 = vld [vmem:[#allocation16 + $0x10] sm:$0xff]
        %v2319 = vld [vmem:[#allocation16 + $0x18] sm:$0xff]
        %v2320 = vld [vmem:[#allocation16 + $0x20] sm:$0xff]
        %v2321 = vld [vmem:[#allocation16 + $0x28] sm:$0xff]
        %v2322 = vld [vmem:[#allocation16 + $0x30] sm:$0xff]
        %v2323 = vld [vmem:[#allocation16 + $0x38] sm:$0xff]
        %v2324 = vld [vmem:[#allocation16 + $0x40] sm:$0xff]
        %v2325 = vld [vmem:[#allocation16 + $0x48] sm:$0xff]
        %v2326 = vld [vmem:[#allocation16 + $0x50] sm:$0xff]
        %v2327 = vld [vmem:[#allocation16 + $0x58] sm:$0xff]
        %v2328 = vld [vmem:[#allocation16 + $0x60] sm:$0xff]
        %v2329 = vld [vmem:[#allocation16 + $0x68] sm:$0xff]
        %v2330 = vld [vmem:[#allocation16 + $0x70] sm:$0xff]
        %v2331 = vld [vmem:[#allocation16 + $0x78] sm:$0xff]
        %v2332 = vld [vmem:[#allocation18] sm:$0x1]
        %v2334 = vlaneseq
        %v2335 = vshrl.u32 %v2334, 7
        %v2336 = vsub.s32 0, %v2335
        %v2337 = vrot.slane %v2315, %v2336
        %v2338 = vlaneseq
        %v2339 = vshrl.u32 %v2338, 7
        %v2340 = vsub.s32 1, %v2339
        %v2341 = vrot.slane %v2315, %v2340
        %2344 = vmatprep.subr.mxu0 %v2284
        %2345 = vmatpush1.msra.mxu0 %v2283
        %2346 = vmatprep.subr.mxu0 %v2286
        %2347 = vmatpush1.msra.mxu0 %v2285
        %2348 = vmatprep.subr.mxu0 %v2288
        %2349 = vmatpush1.msra.mxu0 %v2287
        %2350 = vmatprep.subr.mxu0 %v2290
        %2351 = vmatpush1.msra.mxu0 %v2289
        %2352 = vmatprep.subr.mxu0 %v2292
        %2353 = vmatpush1.msra.mxu0 %v2291
        %2354 = vmatprep.subr.mxu0 %v2294
        %2355 = vmatpush1.msra.mxu0 %v2293
        %2356 = vmatprep.subr.mxu0 %v2296
        %2357 = vmatpush1.msra.mxu0 %v2295
        %2358 = vmatprep.subr.mxu0 %v2298
        %2359 = vmatpush1.msra.mxu0 %v2297
        %2360 = vmatprep.subr.mxu0 %v2300
        %2361 = vmatpush1.msra.mxu0 %v2299
        %2362 = vmatprep.subr.mxu0 %v2302
        %2363 = vmatpush1.msra.mxu0 %v2301
        %2364 = vmatprep.subr.mxu0 %v2304
        %2365 = vmatpush1.msra.mxu0 %v2303
        %2366 = vmatprep.subr.mxu0 %v2306
        %2367 = vmatpush1.msra.mxu0 %v2305
        %2368 = vmatprep.subr.mxu0 %v2308
        %2369 = vmatpush1.msra.mxu0 %v2307
        %2370 = vmatprep.subr.mxu0 %v2310
        %2371 = vmatpush1.msra.mxu0 %v2309
        %2372 = vmatprep.subr.mxu0 %v2312
        %2373 = vmatpush1.msra.mxu0 %v2311
        %2374 = vmatprep.subr.mxu0 %v2314
        %2375 = vmatpush1.msra.mxu0 %v2313
        %2376 = vmatprep.subr.mxu0 0.0
        %2377 = vmatpush1.msra.mxu0 0.0
        %2378 = vmatprep.subr.mxu0 0.0
        %2379 = vmatpush1.msra.mxu0 0.0
        %2380 = vmatprep.subr.mxu0 0.0
        %2381 = vmatpush1.msra.mxu0 0.0
        %2382 = vmatprep.subr.mxu0 0.0
        %2383 = vmatpush1.msra.mxu0 0.0
        %2384 = vmatprep.subr.mxu0 0.0
        %2385 = vmatpush1.msra.mxu0 0.0
        %2386 = vmatprep.subr.mxu0 0.0
        %2387 = vmatpush1.msra.mxu0 0.0
        %2388 = vmatprep.subr.mxu0 0.0
        %2389 = vmatpush1.msra.mxu0 0.0
        %2390 = vmatprep.subr.mxu0 0.0
        %2391 = vmatpush1.msra.mxu0 0.0
        %2392 = vmatprep.subr.mxu0 0.0
        %2393 = vmatpush1.msra.mxu0 0.0
        %2394 = vmatprep.subr.mxu0 0.0
        %2395 = vmatpush1.msra.mxu0 0.0
        %2396 = vmatprep.subr.mxu0 0.0
        %2397 = vmatpush1.msra.mxu0 0.0
        %2398 = vmatprep.subr.mxu0 0.0
        %2399 = vmatpush1.msra.mxu0 0.0
        %2400 = vmatprep.subr.mxu0 0.0
        %2401 = vmatpush1.msra.mxu0 0.0
        %2402 = vmatprep.subr.mxu0 0.0
        %2403 = vmatpush1.msra.mxu0 0.0
        %2404 = vmatprep.subr.mxu0 0.0
        %2405 = vmatpush1.msra.mxu0 0.0
        %2406 = vmatprep.subr.mxu0 0.0
        %2407 = vmatpush1.msra.mxu0 0.0
        %2408 = vmatprep.mubr.f32.mxu0 0.0
        %2409 = vmatmul.mubr.f32.gmra.mrb[0].mxu0 %v2279
        %v2410 = vpop.f32.mrb[0].mxu0
        %v2411 = vadd.f32 %v2337, %v2410
        %v2412 = vpop.f32.mrb[0].mxu0
        %v2413 = vadd.f32 %v2341, %v2412
        %2414 = vmatprep.mubr.f32.mxu0 0.0
        %2415 = vmatmul.mubr.f32.gmra.mrb[0].mxu0 %v2280
        %v2416 = vpop.f32.mrb[0].mxu0
        %v2417 = vadd.f32 %v2337, %v2416
        %v2418 = vpop.f32.mrb[0].mxu0
        %v2419 = vadd.f32 %v2341, %v2418
        %2420 = vmatprep.mubr.f32.mxu0 0.0
        %2421 = vmatmul.mubr.f32.gmra.mrb[0].mxu0 %v2281
        %v2422 = vpop.f32.mrb[0].mxu0
        %v2423 = vadd.f32 %v2337, %v2422
        %v2424 = vpop.f32.mrb[0].mxu0
        %v2425 = vadd.f32 %v2341, %v2424
        %2426 = vmatprep.mubr.f32.mxu0 0.0
        %2427 = vmatmul.mubr.f32.gmra.mrb[0].mxu0 %v2282
        %v2428 = vpop.f32.mrb[0].mxu0
        %v2429 = vadd.f32 %v2337, %v2428
        %v2430 = vpop.f32.mrb[0].mxu0
        %v2431 = vadd.f32 %v2341, %v2430
        %2432 = vdwg.mxu0
        %v2433 = vand.u32 2147483647, %v2411
        %vm2434 = vcmp.le.f32.partialorder %v2433, 0.7853982
        %vm2435 = vcmp.lt.s32.totalorder %v2411, 0
        %v2436 = vand.u32 %v2411, 2139095040
        %v2437 = vshrl.u32 %v2436, 23
        %v2438 = vsub.s32 %v2437, 127
        %v2439 = vand.u32 2147483647, %v2411
        %v2440 = vand.u32 %v2439, 8388607
        %v2441 = vor.u32 %v2440, 8388608
        %v2442 = vsub.s32 0, %v2441
        %v2443 = vadd.s32 %v2438, 1
        %vm2444 = vcmp.gt.s32.totalorder %v2443, 0
        %v2445 = vsel %vm2444, %v2443, 0
        %v2446 = vshrl.u32 %v2445, 5
        %v2447 = vand.u32 %v2445, 31
        %v2448 = vsub.s32 32, %v2447
        %v2449 = vshrl.u32 683565275, %v2448
        %v2450 = vshll.u32 683565275, %v2447
        %v2451 = vshrl.u32 2475754826, %v2448
        %v2452 = vor.u32 %v2450, %v2451
        %v2453 = vshll.u32 2475754826, %v2447
        %v2454 = vshrl.u32 2131351028, %v2448
        %v2455 = vor.u32 %v2453, %v2454
        %v2456 = vshll.u32 2131351028, %v2447
        %v2457 = vshrl.u32 2102212464, %v2448
        %v2458 = vor.u32 %v2456, %v2457
        %v2459 = vshll.u32 2102212464, %v2447
        %v2460 = vshrl.u32 920167782, %v2448
        %v2461 = vor.u32 %v2459, %v2460
        %v2462 = vshll.u32 920167782, %v2447
        %v2463 = vshrl.u32 1326507024, %v2448
        %v2464 = vor.u32 %v2462, %v2463
        %vm2465 = vcmp.lt.s32.totalorder %v2446, 1
        %vm2466 = vcmp.lt.s32.totalorder %v2446, 2
        %vm2467 = vcmp.lt.s32.totalorder %v2446, 3
        %vm2468 = vcmp.lt.s32.totalorder %v2446, 4
        %v2469 = vsel %vm2465, %v2449, %v2452
        %v2470 = vsel %vm2468, %v2458, 2102212464
        %v2471 = vsel %vm2467, %v2455, %v2470
        %v2472 = vsel %vm2466, %v2469, %v2471
        %v2473 = vsel %vm2465, %v2452, %v2455
        %v2474 = vsel %vm2468, %v2461, 920167782
        %v2475 = vsel %vm2467, %v2458, %v2474
        %v2476 = vsel %vm2466, %v2473, %v2475
        %v2477 = vsel %vm2465, %v2455, %v2458
        %v2478 = vsel %vm2468, %v2464, 1326507024
        %v2479 = vsel %vm2467, %v2461, %v2478
        %v2480 = vsel %vm2466, %v2477, %v2479
        %v2481 = vshll.u32 %v2441, 8
        %v2482 = vmul.u32.u64.compose %v2481, %v2480
        %v2483 = vextract.low.u32 %v2482
        %v2484 = vextract.high.u32 %v2482
        %v2485 = vmul.u32.u64.compose %v2481, %v2476
        %v2486 = vextract.low.u32 %v2485
        %v2487 = vextract.high.u32 %v2485
        %v2488 = vmul.u32 %v2481, %v2472
        %v2489 = vadd.s32 %v2484, %v2486
        %vm2490 = vc.u32 %v2484, %v2486
        %v2491 = vadd.s32 %v2487, 1
        %v2492 = vsel %vm2490, %v2491, %v2487
        %v2493 = vadd.s32 %v2488, %v2492
        %v2494 = vadd.s32 %v2493, 536870912
        %v2495 = vshrl.u32 %v2494, 30
        %v2496 = vshll.u32 %v2495, 30
        %v2497 = vsub.s32 %v2493, %v2496
        %vm2498 = vcmp.lt.s32.totalorder %v2497, 0
        %v2499 = vsub.s32 0, %v2497
        %v2500 = vsel %vm2498, %v2499, %v2497
        %v2501 = vclz %v2500
        %v2502 = vsub.s32 %v2501, 2
        %vm2503 = vcmp.gt.s32.totalorder 0, %v2502
        %v2504 = vsel %vm2503, 0, %v2502
        %v2505 = vsub.s32 32, %v2504
        %v2506 = vshll.u32 %v2497, %v2504
        %v2507 = vshrl.u32 %v2489, %v2505
        %v2508 = vor.u32 %v2506, %v2507
        %v2509 = vsub.s32 4294967266, %v2504
        %v2510 = vadd.s32 %v2509, 127
        %v2511 = vshll.u32 %v2510, 23
        %v2512 = vor.u32 4788187, %v2511
        %v2513 = vand.u32 2147483647, %v2512
        %v2515 = vcvt.s32.f32 %v2508
        %v2516 = vmul.f32 %v2515, %v2513
        %v2517 = vxor.u32 %v2516, 2147483648
        %v2518 = vsel %vm2435, %v2517, %v2516
        %v2519 = vsub.s32 4, %v2495
        %v2520 = vsel %vm2435, %v2519, %v2495
        %v2521 = vsel %vm2434, %v2411, %v2518
        %v2522 = vsel %vm2434, 0, %v2520
        %v2523 = vcosq.f32.pop %v2521
        %v2524 = vsinq.f32.pop %v2521
        %vm2525 = vweird.f32 %v2411
        %v2526 = vadd.s32 %v2522, 3
        %v2527 = vand.u32 %v2526, 3
        %vm2528 = vcmp.lt.s32.totalorder %v2527, 2
        %vm2529 = vcmp.eq.s32.totalorder %v2527, 0
        %v2530 = vxor.u32 %v2524, 2147483648
        %v2531 = vsel %vm2529, %v2523, %v2530
        %vm2532 = vcmp.eq.s32.totalorder %v2527, 2
        %v2533 = vxor.u32 %v2523, 2147483648
        %v2534 = vsel %vm2532, %v2533, %v2524
        %v2535 = vsel %vm2528, %v2531, %v2534
        %v2536 = vsel %vm2525, nan, %v2535
        %v2537 = vand.u32 2147483647, %v2417
        %vm2538 = vcmp.le.f32.partialorder %v2537, 0.7853982
        %vm2539 = vcmp.lt.s32.totalorder %v2417, 0
        %v2540 = vand.u32 %v2417, 2139095040
        %v2541 = vshrl.u32 %v2540, 23
        %v2542 = vsub.s32 %v2541, 127
        %v2543 = vand.u32 2147483647, %v2417
        %v2544 = vand.u32 %v2543, 8388607
        %v2545 = vor.u32 %v2544, 8388608
        %v2546 = vsub.s32 0, %v2545
        %v2547 = vadd.s32 %v2542, 1
        %vm2548 = vcmp.gt.s32.totalorder %v2547, 0
        %v2549 = vsel %vm2548, %v2547, 0
        %v2550 = vshrl.u32 %v2549, 5
        %v2551 = vand.u32 %v2549, 31
        %v2552 = vsub.s32 32, %v2551
        %v2553 = vshrl.u32 683565275, %v2552
        %v2554 = vshll.u32 683565275, %v2551
        %v2555 = vshrl.u32 2475754826, %v2552
        %v2556 = vor.u32 %v2554, %v2555
        %v2557 = vshll.u32 2475754826, %v2551
        %v2558 = vshrl.u32 2131351028, %v2552
        %v2559 = vor.u32 %v2557, %v2558
        %v2560 = vshll.u32 2131351028, %v2551
        %v2561 = vshrl.u32 2102212464, %v2552
        %v2562 = vor.u32 %v2560, %v2561
        %v2563 = vshll.u32 2102212464, %v2551
        %v2564 = vshrl.u32 920167782, %v2552
        %v2565 = vor.u32 %v2563, %v2564
        %v2566 = vshll.u32 920167782, %v2551
        %v2567 = vshrl.u32 1326507024, %v2552
        %v2568 = vor.u32 %v2566, %v2567
        %vm2569 = vcmp.lt.s32.totalorder %v2550, 1
        %vm2570 = vcmp.lt.s32.totalorder %v2550, 2
        %vm2571 = vcmp.lt.s32.totalorder %v2550, 3
        %vm2572 = vcmp.lt.s32.totalorder %v2550, 4
        %v2573 = vsel %vm2569, %v2553, %v2556
        %v2574 = vsel %vm2572, %v2562, 2102212464
        %v2575 = vsel %vm2571, %v2559, %v2574
        %v2576 = vsel %vm2570, %v2573, %v2575
        %v2577 = vsel %vm2569, %v2556, %v2559
        %v2578 = vsel %vm2572, %v2565, 920167782
        %v2579 = vsel %vm2571, %v2562, %v2578
        %v2580 = vsel %vm2570, %v2577, %v2579
        %v2581 = vsel %vm2569, %v2559, %v2562
        %v2582 = vsel %vm2572, %v2568, 1326507024
        %v2583 = vsel %vm2571, %v2565, %v2582
        %v2584 = vsel %vm2570, %v2581, %v2583
        %v2585 = vshll.u32 %v2545, 8
        %v2586 = vmul.u32.u64.compose %v2585, %v2584
        %v2587 = vextract.low.u32 %v2586
        %v2588 = vextract.high.u32 %v2586
        %v2589 = vmul.u32.u64.compose %v2585, %v2580
        %v2590 = vextract.low.u32 %v2589
        %v2591 = vextract.high.u32 %v2589
        %v2592 = vmul.u32 %v2585, %v2576
        %v2593 = vadd.s32 %v2588, %v2590
        %vm2594 = vc.u32 %v2588, %v2590
        %v2595 = vadd.s32 %v2591, 1
        %v2596 = vsel %vm2594, %v2595, %v2591
        %v2597 = vadd.s32 %v2592, %v2596
        %v2598 = vadd.s32 %v2597, 536870912
        %v2599 = vshrl.u32 %v2598, 30
        %v2600 = vshll.u32 %v2599, 30
        %v2601 = vsub.s32 %v2597, %v2600
        %vm2602 = vcmp.lt.s32.totalorder %v2601, 0
        %v2603 = vsub.s32 0, %v2601
        %v2604 = vsel %vm2602, %v2603, %v2601
        %v2605 = vclz %v2604
        %v2606 = vsub.s32 %v2605, 2
        %vm2607 = vcmp.gt.s32.totalorder 0, %v2606
        %v2608 = vsel %vm2607, 0, %v2606
        %v2609 = vsub.s32 32, %v2608
        %v2610 = vshll.u32 %v2601, %v2608
        %v2611 = vshrl.u32 %v2593, %v2609
        %v2612 = vor.u32 %v2610, %v2611
        %v2613 = vsub.s32 4294967266, %v2608
        %v2614 = vadd.s32 %v2613, 127
        %v2615 = vshll.u32 %v2614, 23
        %v2616 = vor.u32 4788187, %v2615
        %v2617 = vand.u32 2147483647, %v2616
        %v2619 = vcvt.s32.f32 %v2612
        %v2620 = vmul.f32 %v2619, %v2617
        %v2621 = vxor.u32 %v2620, 2147483648
        %v2622 = vsel %vm2539, %v2621, %v2620
        %v2623 = vsub.s32 4, %v2599
        %v2624 = vsel %vm2539, %v2623, %v2599
        %v2625 = vsel %vm2538, %v2417, %v2622
        %v2626 = vsel %vm2538, 0, %v2624
        %v2627 = vcosq.f32.pop %v2625
        %v2628 = vsinq.f32.pop %v2625
        %vm2629 = vweird.f32 %v2417
        %v2630 = vadd.s32 %v2626, 3
        %v2631 = vand.u32 %v2630, 3
        %vm2632 = vcmp.lt.s32.totalorder %v2631, 2
        %vm2633 = vcmp.eq.s32.totalorder %v2631, 0
        %v2634 = vxor.u32 %v2628, 2147483648
        %v2635 = vsel %vm2633, %v2627, %v2634
        %vm2636 = vcmp.eq.s32.totalorder %v2631, 2
        %v2637 = vxor.u32 %v2627, 2147483648
        %v2638 = vsel %vm2636, %v2637, %v2628
        %v2639 = vsel %vm2632, %v2635, %v2638
        %v2640 = vsel %vm2629, nan, %v2639
        %v2641 = vand.u32 2147483647, %v2423
        %vm2642 = vcmp.le.f32.partialorder %v2641, 0.7853982
        %vm2643 = vcmp.lt.s32.totalorder %v2423, 0
        %v2644 = vand.u32 %v2423, 2139095040
        %v2645 = vshrl.u32 %v2644, 23
        %v2646 = vsub.s32 %v2645, 127
        %v2647 = vand.u32 2147483647, %v2423
        %v2648 = vand.u32 %v2647, 8388607
        %v2649 = vor.u32 %v2648, 8388608
        %v2650 = vsub.s32 0, %v2649
        %v2651 = vadd.s32 %v2646, 1
        %vm2652 = vcmp.gt.s32.totalorder %v2651, 0
        %v2653 = vsel %vm2652, %v2651, 0
        %v2654 = vshrl.u32 %v2653, 5
        %v2655 = vand.u32 %v2653, 31
        %v2656 = vsub.s32 32, %v2655
        %v2657 = vshrl.u32 683565275, %v2656
        %v2658 = vshll.u32 683565275, %v2655
        %v2659 = vshrl.u32 2475754826, %v2656
        %v2660 = vor.u32 %v2658, %v2659
        %v2661 = vshll.u32 2475754826, %v2655
        %v2662 = vshrl.u32 2131351028, %v2656
        %v2663 = vor.u32 %v2661, %v2662
        %v2664 = vshll.u32 2131351028, %v2655
        %v2665 = vshrl.u32 2102212464, %v2656
        %v2666 = vor.u32 %v2664, %v2665
        %v2667 = vshll.u32 2102212464, %v2655
        %v2668 = vshrl.u32 920167782, %v2656
        %v2669 = vor.u32 %v2667, %v2668
        %v2670 = vshll.u32 920167782, %v2655
        %v2671 = vshrl.u32 1326507024, %v2656
        %v2672 = vor.u32 %v2670, %v2671
        %vm2673 = vcmp.lt.s32.totalorder %v2654, 1
        %vm2674 = vcmp.lt.s32.totalorder %v2654, 2
        %vm2675 = vcmp.lt.s32.totalorder %v2654, 3
        %vm2676 = vcmp.lt.s32.totalorder %v2654, 4
        %v2677 = vsel %vm2673, %v2657, %v2660
        %v2678 = vsel %vm2676, %v2666, 2102212464
        %v2679 = vsel %vm2675, %v2663, %v2678
        %v2680 = vsel %vm2674, %v2677, %v2679
        %v2681 = vsel %vm2673, %v2660, %v2663
        %v2682 = vsel %vm2676, %v2669, 920167782
        %v2683 = vsel %vm2675, %v2666, %v2682
        %v2684 = vsel %vm2674, %v2681, %v2683
        %v2685 = vsel %vm2673, %v2663, %v2666
        %v2686 = vsel %vm2676, %v2672, 1326507024
        %v2687 = vsel %vm2675, %v2669, %v2686
        %v2688 = vsel %vm2674, %v2685, %v2687
        %v2689 = vshll.u32 %v2649, 8
        %v2690 = vmul.u32.u64.compose %v2689, %v2688
        %v2691 = vextract.low.u32 %v2690
        %v2692 = vextract.high.u32 %v2690
        %v2693 = vmul.u32.u64.compose %v2689, %v2684
        %v2694 = vextract.low.u32 %v2693
        %v2695 = vextract.high.u32 %v2693
        %v2696 = vmul.u32 %v2689, %v2680
        %v2697 = vadd.s32 %v2692, %v2694
        %vm2698 = vc.u32 %v2692, %v2694
        %v2699 = vadd.s32 %v2695, 1
        %v2700 = vsel %vm2698, %v2699, %v2695
        %v2701 = vadd.s32 %v2696, %v2700
        %v2702 = vadd.s32 %v2701, 536870912
        %v2703 = vshrl.u32 %v2702, 30
        %v2704 = vshll.u32 %v2703, 30
        %v2705 = vsub.s32 %v2701, %v2704
        %vm2706 = vcmp.lt.s32.totalorder %v2705, 0
        %v2707 = vsub.s32 0, %v2705
        %v2708 = vsel %vm2706, %v2707, %v2705
        %v2709 = vclz %v2708
        %v2710 = vsub.s32 %v2709, 2
        %vm2711 = vcmp.gt.s32.totalorder 0, %v2710
        %v2712 = vsel %vm2711, 0, %v2710
        %v2713 = vsub.s32 32, %v2712
        %v2714 = vshll.u32 %v2705, %v2712
        %v2715 = vshrl.u32 %v2697, %v2713
        %v2716 = vor.u32 %v2714, %v2715
        %v2717 = vsub.s32 4294967266, %v2712
        %v2718 = vadd.s32 %v2717, 127
        %v2719 = vshll.u32 %v2718, 23
        %v2720 = vor.u32 4788187, %v2719
        %v2721 = vand.u32 2147483647, %v2720
        %v2723 = vcvt.s32.f32 %v2716
        %v2724 = vmul.f32 %v2723, %v2721
        %v2725 = vxor.u32 %v2724, 2147483648
        %v2726 = vsel %vm2643, %v2725, %v2724
        %v2727 = vsub.s32 4, %v2703
        %v2728 = vsel %vm2643, %v2727, %v2703
        %v2729 = vsel %vm2642, %v2423, %v2726
        %v2730 = vsel %vm2642, 0, %v2728
        %v2731 = vcosq.f32.pop %v2729
        %v2732 = vsinq.f32.pop %v2729
        %vm2733 = vweird.f32 %v2423
        %v2734 = vadd.s32 %v2730, 3
        %v2735 = vand.u32 %v2734, 3
        %vm2736 = vcmp.lt.s32.totalorder %v2735, 2
        %vm2737 = vcmp.eq.s32.totalorder %v2735, 0
        %v2738 = vxor.u32 %v2732, 2147483648
        %v2739 = vsel %vm2737, %v2731, %v2738
        %vm2740 = vcmp.eq.s32.totalorder %v2735, 2
        %v2741 = vxor.u32 %v2731, 2147483648
        %v2742 = vsel %vm2740, %v2741, %v2732
        %v2743 = vsel %vm2736, %v2739, %v2742
        %v2744 = vsel %vm2733, nan, %v2743
        %v2745 = vand.u32 2147483647, %v2429
        %vm2746 = vcmp.le.f32.partialorder %v2745, 0.7853982
        %vm2747 = vcmp.lt.s32.totalorder %v2429, 0
        %v2748 = vand.u32 %v2429, 2139095040
        %v2749 = vshrl.u32 %v2748, 23
        %v2750 = vsub.s32 %v2749, 127
        %v2751 = vand.u32 2147483647, %v2429
        %v2752 = vand.u32 %v2751, 8388607
        %v2753 = vor.u32 %v2752, 8388608
        %v2754 = vsub.s32 0, %v2753
        %v2755 = vadd.s32 %v2750, 1
        %vm2756 = vcmp.gt.s32.totalorder %v2755, 0
        %v2757 = vsel %vm2756, %v2755, 0
        %v2758 = vshrl.u32 %v2757, 5
        %v2759 = vand.u32 %v2757, 31
        %v2760 = vsub.s32 32, %v2759
        %v2761 = vshrl.u32 683565275, %v2760
        %v2762 = vshll.u32 683565275, %v2759
        %v2763 = vshrl.u32 2475754826, %v2760
        %v2764 = vor.u32 %v2762, %v2763
        %v2765 = vshll.u32 2475754826, %v2759
        %v2766 = vshrl.u32 2131351028, %v2760
        %v2767 = vor.u32 %v2765, %v2766
        %v2768 = vshll.u32 2131351028, %v2759
        %v2769 = vshrl.u32 2102212464, %v2760
        %v2770 = vor.u32 %v2768, %v2769
        %v2771 = vshll.u32 2102212464, %v2759
        %v2772 = vshrl.u32 920167782, %v2760
        %v2773 = vor.u32 %v2771, %v2772
        %v2774 = vshll.u32 920167782, %v2759
        %v2775 = vshrl.u32 1326507024, %v2760
        %v2776 = vor.u32 %v2774, %v2775
        %vm2777 = vcmp.lt.s32.totalorder %v2758, 1
        %vm2778 = vcmp.lt.s32.totalorder %v2758, 2
        %vm2779 = vcmp.lt.s32.totalorder %v2758, 3
        %vm2780 = vcmp.lt.s32.totalorder %v2758, 4
        %v2781 = vsel %vm2777, %v2761, %v2764
        %v2782 = vsel %vm2780, %v2770, 2102212464
        %v2783 = vsel %vm2779, %v2767, %v2782
        %v2784 = vsel %vm2778, %v2781, %v2783
        %v2785 = vsel %vm2777, %v2764, %v2767
        %v2786 = vsel %vm2780, %v2773, 920167782
        %v2787 = vsel %vm2779, %v2770, %v2786
        %v2788 = vsel %vm2778, %v2785, %v2787
        %v2789 = vsel %vm2777, %v2767, %v2770
        %v2790 = vsel %vm2780, %v2776, 1326507024
        %v2791 = vsel %vm2779, %v2773, %v2790
        %v2792 = vsel %vm2778, %v2789, %v2791
        %v2793 = vshll.u32 %v2753, 8
        %v2794 = vmul.u32.u64.compose %v2793, %v2792
        %v2795 = vextract.low.u32 %v2794
        %v2796 = vextract.high.u32 %v2794
        %v2797 = vmul.u32.u64.compose %v2793, %v2788
        %v2798 = vextract.low.u32 %v2797
        %v2799 = vextract.high.u32 %v2797
        %v2800 = vmul.u32 %v2793, %v2784
        %v2801 = vadd.s32 %v2796, %v2798
        %vm2802 = vc.u32 %v2796, %v2798
        %v2803 = vadd.s32 %v2799, 1
        %v2804 = vsel %vm2802, %v2803, %v2799
        %v2805 = vadd.s32 %v2800, %v2804
        %v2806 = vadd.s32 %v2805, 536870912
        %v2807 = vshrl.u32 %v2806, 30
        %v2808 = vshll.u32 %v2807, 30
        %v2809 = vsub.s32 %v2805, %v2808
        %vm2810 = vcmp.lt.s32.totalorder %v2809, 0
        %v2811 = vsub.s32 0, %v2809
        %v2812 = vsel %vm2810, %v2811, %v2809
        %v2813 = vclz %v2812
        %v2814 = vsub.s32 %v2813, 2
        %vm2815 = vcmp.gt.s32.totalorder 0, %v2814
        %v2816 = vsel %vm2815, 0, %v2814
        %v2817 = vsub.s32 32, %v2816
        %v2818 = vshll.u32 %v2809, %v2816
        %v2819 = vshrl.u32 %v2801, %v2817
        %v2820 = vor.u32 %v2818, %v2819
        %v2821 = vsub.s32 4294967266, %v2816
        %v2822 = vadd.s32 %v2821, 127
        %v2823 = vshll.u32 %v2822, 23
        %v2824 = vor.u32 4788187, %v2823
        %v2825 = vand.u32 2147483647, %v2824
        %v2827 = vcvt.s32.f32 %v2820
        %v2828 = vmul.f32 %v2827, %v2825
        %v2829 = vxor.u32 %v2828, 2147483648
        %v2830 = vsel %vm2747, %v2829, %v2828
        %v2831 = vsub.s32 4, %v2807
        %v2832 = vsel %vm2747, %v2831, %v2807
        %v2833 = vsel %vm2746, %v2429, %v2830
        %v2834 = vsel %vm2746, 0, %v2832
        %v2835 = vcosq.f32.pop %v2833
        %v2836 = vsinq.f32.pop %v2833
        %vm2837 = vweird.f32 %v2429
        %v2838 = vadd.s32 %v2834, 3
        %v2839 = vand.u32 %v2838, 3
        %vm2840 = vcmp.lt.s32.totalorder %v2839, 2
        %vm2841 = vcmp.eq.s32.totalorder %v2839, 0
        %v2842 = vxor.u32 %v2836, 2147483648
        %v2843 = vsel %vm2841, %v2835, %v2842
        %vm2844 = vcmp.eq.s32.totalorder %v2839, 2
        %v2845 = vxor.u32 %v2835, 2147483648
        %v2846 = vsel %vm2844, %v2845, %v2836
        %v2847 = vsel %vm2840, %v2843, %v2846
        %v2848 = vsel %vm2837, nan, %v2847
        %v2850 = vlaneseq
        %v2851 = vshrl.u32 %v2850, 7
        %v2852 = vsub.s32 0, %v2851
        %v2853 = vrot.slane %v2332, %v2852
        %2855 = vmatprep.subr.mxu0 0.0
        %2856 = vmatpush1.msra.mxu0 %v2316
        %2857 = vmatprep.subr.mxu0 0.0
        %2858 = vmatpush1.msra.mxu0 %v2317
        %2859 = vmatprep.subr.mxu0 0.0
        %2860 = vmatpush1.msra.mxu0 %v2318
        %2861 = vmatprep.subr.mxu0 0.0
        %2862 = vmatpush1.msra.mxu0 %v2319
        %2863 = vmatprep.subr.mxu0 0.0
        %2864 = vmatpush1.msra.mxu0 %v2320
        %2865 = vmatprep.subr.mxu0 0.0
        %2866 = vmatpush1.msra.mxu0 %v2321
        %2867 = vmatprep.subr.mxu0 0.0
        %2868 = vmatpush1.msra.mxu0 %v2322
        %2869 = vmatprep.subr.mxu0 0.0
        %2870 = vmatpush1.msra.mxu0 %v2323
        %2871 = vmatprep.subr.mxu0 0.0
        %2872 = vmatpush1.msra.mxu0 %v2324
        %2873 = vmatprep.subr.mxu0 0.0
        %2874 = vmatpush1.msra.mxu0 %v2325
        %2875 = vmatprep.subr.mxu0 0.0
        %2876 = vmatpush1.msra.mxu0 %v2326
        %2877 = vmatprep.subr.mxu0 0.0
        %2878 = vmatpush1.msra.mxu0 %v2327
        %2879 = vmatprep.subr.mxu0 0.0
        %2880 = vmatpush1.msra.mxu0 %v2328
        %2881 = vmatprep.subr.mxu0 0.0
        %2882 = vmatpush1.msra.mxu0 %v2329
        %2883 = vmatprep.subr.mxu0 0.0
        %2884 = vmatpush1.msra.mxu0 %v2330
        %2885 = vmatprep.subr.mxu0 0.0
        %2886 = vmatpush1.msra.mxu0 %v2331
        %2887 = vmatprep.subr.mxu0 0.0
        %2888 = vmatpush1.msra.mxu0 0.0
        %2889 = vmatprep.subr.mxu0 0.0
        %2890 = vmatpush1.msra.mxu0 0.0
        %2891 = vmatprep.subr.mxu0 0.0
        %2892 = vmatpush1.msra.mxu0 0.0
        %2893 = vmatprep.subr.mxu0 0.0
        %2894 = vmatpush1.msra.mxu0 0.0
        %2895 = vmatprep.subr.mxu0 0.0
        %2896 = vmatpush1.msra.mxu0 0.0
        %2897 = vmatprep.subr.mxu0 0.0
        %2898 = vmatpush1.msra.mxu0 0.0
        %2899 = vmatprep.subr.mxu0 0.0
        %2900 = vmatpush1.msra.mxu0 0.0
        %2901 = vmatprep.subr.mxu0 0.0
        %2902 = vmatpush1.msra.mxu0 0.0
        %2903 = vmatprep.subr.mxu0 0.0
        %2904 = vmatpush1.msra.mxu0 0.0
        %2905 = vmatprep.subr.mxu0 0.0
        %2906 = vmatpush1.msra.mxu0 0.0
        %2907 = vmatprep.subr.mxu0 0.0
        %2908 = vmatpush1.msra.mxu0 0.0
        %2909 = vmatprep.subr.mxu0 0.0
        %2910 = vmatpush1.msra.mxu0 0.0
        %2911 = vmatprep.subr.mxu0 0.0
        %2912 = vmatpush1.msra.mxu0 0.0
        %2913 = vmatprep.subr.mxu0 0.0
        %2914 = vmatpush1.msra.mxu0 0.0
        %2915 = vmatprep.subr.mxu0 0.0
        %2916 = vmatpush1.msra.mxu0 0.0
        %2917 = vmatprep.subr.mxu0 0.0
        %2918 = vmatpush1.msra.mxu0 0.0
        %2919 = vmatprep.mubr.f32.mxu0 0.0
        %2920 = vmatmul.mubr.f32.gmra.mrb[0].mxu0 %v2536
        %v2921 = vpop.f32.mrb[0].mxu0
        %v2922 = vadd.f32 %v2853, %v2921
        %v2923 = vpop.f32.mrb[0].mxu0
        %2924 = vmatprep.mubr.f32.mxu0 0.0
        %2925 = vmatmul.mubr.f32.gmra.mrb[0].mxu0 %v2640
        %v2926 = vpop.f32.mrb[0].mxu0
        %v2927 = vadd.f32 %v2853, %v2926
        %v2928 = vpop.f32.mrb[0].mxu0
        %2929 = vmatprep.mubr.f32.mxu0 0.0
        %2930 = vmatmul.mubr.f32.gmra.mrb[0].mxu0 %v2744
        %v2931 = vpop.f32.mrb[0].mxu0
        %v2932 = vadd.f32 %v2853, %v2931
        %v2933 = vpop.f32.mrb[0].mxu0
        %2934 = vmatprep.mubr.f32.mxu0 0.0
        %2935 = vmatmul.mubr.f32.gmra.mrb[0].mxu0 %v2848
        %v2936 = vpop.f32.mrb[0].mxu0
        %v2937 = vadd.f32 %v2853, %v2936
        %v2938 = vpop.f32.mrb[0].mxu0
        %2939 = vdwg.mxu0
        %v2940 = vtanh.pop %v2922
        %v2941 = vtanh.pop %v2927
        %v2942 = vtanh.pop %v2932
        %v2943 = vtanh.pop %v2937
        %v2944 = vmul.f32 %v2940, 0.1
        %v2945 = vmul.f32 %v2941, 0.1
        %v2946 = vmul.f32 %v2942, 0.1
        %v2947 = vmul.f32 %v2943, 0.1
        %v2948 = vadd.f32 %v2944, %v2413
        %v2949 = vadd.f32 %v2945, %v2419
        %v2950 = vadd.f32 %v2946, %v2425
        %v2951 = vadd.f32 %v2947, %v2431
        %v2952 = vld [vmem:[#allocation19] sm:$0xff]
        %v2953 = vld [vmem:[#allocation19 + $0x8] sm:$0xff]
        %v2954 = vld [vmem:[#allocation19 + $0x10] sm:$0xff]
        %v2955 = vld [vmem:[#allocation19 + $0x18] sm:$0xff]
        %v2956 = vld [vmem:[#allocation19 + $0x20] sm:$0xff]
        %v2957 = vld [vmem:[#allocation19 + $0x28] sm:$0xff]
        %v2958 = vld [vmem:[#allocation19 + $0x30] sm:$0xff]
        %v2959 = vld [vmem:[#allocation19 + $0x38] sm:$0xff]
        %v2960 = vld [vmem:[#allocation19 + $0x40] sm:$0xff]
        %v2961 = vld [vmem:[#allocation19 + $0x48] sm:$0xff]
        %v2962 = vld [vmem:[#allocation19 + $0x50] sm:$0xff]
        %v2963 = vld [vmem:[#allocation19 + $0x58] sm:$0xff]
        %v2964 = vld [vmem:[#allocation19 + $0x60] sm:$0xff]
        %v2965 = vld [vmem:[#allocation19 + $0x68] sm:$0xff]
        %v2966 = vld [vmem:[#allocation19 + $0x70] sm:$0xff]
        %v2967 = vld [vmem:[#allocation19 + $0x78] sm:$0xff]
        %v2968 = vld [vmem:[#allocation19 + $0x80] sm:$0xff]
        %v2969 = vld [vmem:[#allocation19 + $0x88] sm:$0xff]
        %v2970 = vld [vmem:[#allocation19 + $0x90] sm:$0xff]
        %v2971 = vld [vmem:[#allocation19 + $0x98] sm:$0xff]
        %v2972 = vld [vmem:[#allocation19 + $0xa0] sm:$0xff]
        %v2973 = vld [vmem:[#allocation19 + $0xa8] sm:$0xff]
        %v2974 = vld [vmem:[#allocation19 + $0xb0] sm:$0xff]
        %v2975 = vld [vmem:[#allocation19 + $0xb8] sm:$0xff]
        %v2976 = vld [vmem:[#allocation19 + $0xc0] sm:$0xff]
        %v2977 = vld [vmem:[#allocation19 + $0xc8] sm:$0xff]
        %v2978 = vld [vmem:[#allocation19 + $0xd0] sm:$0xff]
        %v2979 = vld [vmem:[#allocation19 + $0xd8] sm:$0xff]
        %v2980 = vld [vmem:[#allocation19 + $0xe0] sm:$0xff]
        %v2981 = vld [vmem:[#allocation19 + $0xe8] sm:$0xff]
        %v2982 = vld [vmem:[#allocation19 + $0xf0] sm:$0xff]
        %v2983 = vld [vmem:[#allocation19 + $0xf8] sm:$0xff]
        %v2984 = vld [vmem:[#allocation21] sm:$0x3]
        %v2985 = vld [vmem:[#allocation22] sm:$0xff]
        %v2986 = vld [vmem:[#allocation22 + $0x8] sm:$0xff]
        %v2987 = vld [vmem:[#allocation22 + $0x10] sm:$0xff]
        %v2988 = vld [vmem:[#allocation22 + $0x18] sm:$0xff]
        %v2989 = vld [vmem:[#allocation22 + $0x20] sm:$0xff]
        %v2990 = vld [vmem:[#allocation22 + $0x28] sm:$0xff]
        %v2991 = vld [vmem:[#allocation22 + $0x30] sm:$0xff]
        %v2992 = vld [vmem:[#allocation22 + $0x38] sm:$0xff]
        %v2993 = vld [vmem:[#allocation22 + $0x40] sm:$0xff]
        %v2994 = vld [vmem:[#allocation22 + $0x48] sm:$0xff]
        %v2995 = vld [vmem:[#allocation22 + $0x50] sm:$0xff]
        %v2996 = vld [vmem:[#allocation22 + $0x58] sm:$0xff]
        %v2997 = vld [vmem:[#allocation22 + $0x60] sm:$0xff]
        %v2998 = vld [vmem:[#allocation22 + $0x68] sm:$0xff]
        %v2999 = vld [vmem:[#allocation22 + $0x70] sm:$0xff]
        %v3000 = vld [vmem:[#allocation22 + $0x78] sm:$0xff]
        %v3001 = vld [vmem:[#allocation24] sm:$0x1]
        %v3003 = vlaneseq
        %v3004 = vshrl.u32 %v3003, 7
        %v3005 = vsub.s32 0, %v3004
        %v3006 = vrot.slane %v2984, %v3005
        %v3007 = vlaneseq
        %v3008 = vshrl.u32 %v3007, 7
        %v3009 = vsub.s32 1, %v3008
        %v3010 = vrot.slane %v2984, %v3009
        %3013 = vmatprep.subr.mxu0 %v2953
        %3014 = vmatpush1.msra.mxu0 %v2952
        %3015 = vmatprep.subr.mxu0 %v2955
        %3016 = vmatpush1.msra.mxu0 %v2954
        %3017 = vmatprep.subr.mxu0 %v2957
        %3018 = vmatpush1.msra.mxu0 %v2956
        %3019 = vmatprep.subr.mxu0 %v2959
        %3020 = vmatpush1.msra.mxu0 %v2958
        %3021 = vmatprep.subr.mxu0 %v2961
        %3022 = vmatpush1.msra.mxu0 %v2960
        %3023 = vmatprep.subr.mxu0 %v2963
        %3024 = vmatpush1.msra.mxu0 %v2962
        %3025 = vmatprep.subr.mxu0 %v2965
        %3026 = vmatpush1.msra.mxu0 %v2964
        %3027 = vmatprep.subr.mxu0 %v2967
        %3028 = vmatpush1.msra.mxu0 %v2966
        %3029 = vmatprep.subr.mxu0 %v2969
        %3030 = vmatpush1.msra.mxu0 %v2968
        %3031 = vmatprep.subr.mxu0 %v2971
        %3032 = vmatpush1.msra.mxu0 %v2970
        %3033 = vmatprep.subr.mxu0 %v2973
        %3034 = vmatpush1.msra.mxu0 %v2972
        %3035 = vmatprep.subr.mxu0 %v2975
        %3036 = vmatpush1.msra.mxu0 %v2974
        %3037 = vmatprep.subr.mxu0 %v2977
        %3038 = vmatpush1.msra.mxu0 %v2976
        %3039 = vmatprep.subr.mxu0 %v2979
        %3040 = vmatpush1.msra.mxu0 %v2978
        %3041 = vmatprep.subr.mxu0 %v2981
        %3042 = vmatpush1.msra.mxu0 %v2980
        %3043 = vmatprep.subr.mxu0 %v2983
        %3044 = vmatpush1.msra.mxu0 %v2982
        %3045 = vmatprep.subr.mxu0 0.0
        %3046 = vmatpush1.msra.mxu0 0.0
        %3047 = vmatprep.subr.mxu0 0.0
        %3048 = vmatpush1.msra.mxu0 0.0
        %3049 = vmatprep.subr.mxu0 0.0
        %3050 = vmatpush1.msra.mxu0 0.0
        %3051 = vmatprep.subr.mxu0 0.0
        %3052 = vmatpush1.msra.mxu0 0.0
        %3053 = vmatprep.subr.mxu0 0.0
        %3054 = vmatpush1.msra.mxu0 0.0
        %3055 = vmatprep.subr.mxu0 0.0
        %3056 = vmatpush1.msra.mxu0 0.0
        %3057 = vmatprep.subr.mxu0 0.0
        %3058 = vmatpush1.msra.mxu0 0.0
        %3059 = vmatprep.subr.mxu0 0.0
        %3060 = vmatpush1.msra.mxu0 0.0
        %3061 = vmatprep.subr.mxu0 0.0
        %3062 = vmatpush1.msra.mxu0 0.0
        %3063 = vmatprep.subr.mxu0 0.0
        %3064 = vmatpush1.msra.mxu0 0.0
        %3065 = vmatprep.subr.mxu0 0.0
        %3066 = vmatpush1.msra.mxu0 0.0
        %3067 = vmatprep.subr.mxu0 0.0
        %3068 = vmatpush1.msra.mxu0 0.0
        %3069 = vmatprep.subr.mxu0 0.0
        %3070 = vmatpush1.msra.mxu0 0.0
        %3071 = vmatprep.subr.mxu0 0.0
        %3072 = vmatpush1.msra.mxu0 0.0
        %3073 = vmatprep.subr.mxu0 0.0
        %3074 = vmatpush1.msra.mxu0 0.0
        %3075 = vmatprep.subr.mxu0 0.0
        %3076 = vmatpush1.msra.mxu0 0.0
        %3077 = vmatprep.mubr.f32.mxu0 0.0
        %3078 = vmatmul.mubr.f32.gmra.mrb[0].mxu0 %v2948
        %v3079 = vpop.f32.mrb[0].mxu0
        %v3080 = vadd.f32 %v3006, %v3079
        %v3081 = vpop.f32.mrb[0].mxu0
        %v3082 = vadd.f32 %v3010, %v3081
        %3083 = vmatprep.mubr.f32.mxu0 0.0
        %3084 = vmatmul.mubr.f32.gmra.mrb[0].mxu0 %v2949
        %v3085 = vpop.f32.mrb[0].mxu0
        %v3086 = vadd.f32 %v3006, %v3085
        %v3087 = vpop.f32.mrb[0].mxu0
        %v3088 = vadd.f32 %v3010, %v3087
        %3089 = vmatprep.mubr.f32.mxu0 0.0
        %3090 = vmatmul.mubr.f32.gmra.mrb[0].mxu0 %v2950
        %v3091 = vpop.f32.mrb[0].mxu0
        %v3092 = vadd.f32 %v3006, %v3091
        %v3093 = vpop.f32.mrb[0].mxu0
        %v3094 = vadd.f32 %v3010, %v3093
        %3095 = vmatprep.mubr.f32.mxu0 0.0
        %3096 = vmatmul.mubr.f32.gmra.mrb[0].mxu0 %v2951
        %v3097 = vpop.f32.mrb[0].mxu0
        %v3098 = vadd.f32 %v3006, %v3097
        %v3099 = vpop.f32.mrb[0].mxu0
        %v3100 = vadd.f32 %v3010, %v3099
        %3101 = vdwg.mxu0
        %v3102 = vand.u32 2147483647, %v3080
        %vm3103 = vcmp.le.f32.partialorder %v3102, 0.7853982
        %vm3104 = vcmp.lt.s32.totalorder %v3080, 0
        %v3105 = vand.u32 %v3080, 2139095040
        %v3106 = vshrl.u32 %v3105, 23
        %v3107 = vsub.s32 %v3106, 127
        %v3108 = vand.u32 2147483647, %v3080
        %v3109 = vand.u32 %v3108, 8388607
        %v3110 = vor.u32 %v3109, 8388608
        %v3111 = vsub.s32 0, %v3110
        %v3112 = vadd.s32 %v3107, 1
        %vm3113 = vcmp.gt.s32.totalorder %v3112, 0
        %v3114 = vsel %vm3113, %v3112, 0
        %v3115 = vshrl.u32 %v3114, 5
        %v3116 = vand.u32 %v3114, 31
        %v3117 = vsub.s32 32, %v3116
        %v3118 = vshrl.u32 683565275, %v3117
        %v3119 = vshll.u32 683565275, %v3116
        %v3120 = vshrl.u32 2475754826, %v3117
        %v3121 = vor.u32 %v3119, %v3120
        %v3122 = vshll.u32 2475754826, %v3116
        %v3123 = vshrl.u32 2131351028, %v3117
        %v3124 = vor.u32 %v3122, %v3123
        %v3125 = vshll.u32 2131351028, %v3116
        %v3126 = vshrl.u32 2102212464, %v3117
        %v3127 = vor.u32 %v3125, %v3126
        %v3128 = vshll.u32 2102212464, %v3116
        %v3129 = vshrl.u32 920167782, %v3117
        %v3130 = vor.u32 %v3128, %v3129
        %v3131 = vshll.u32 920167782, %v3116
        %v3132 = vshrl.u32 1326507024, %v3117
        %v3133 = vor.u32 %v3131, %v3132
        %vm3134 = vcmp.lt.s32.totalorder %v3115, 1
        %vm3135 = vcmp.lt.s32.totalorder %v3115, 2
        %vm3136 = vcmp.lt.s32.totalorder %v3115, 3
        %vm3137 = vcmp.lt.s32.totalorder %v3115, 4
        %v3138 = vsel %vm3134, %v3118, %v3121
        %v3139 = vsel %vm3137, %v3127, 2102212464
        %v3140 = vsel %vm3136, %v3124, %v3139
        %v3141 = vsel %vm3135, %v3138, %v3140
        %v3142 = vsel %vm3134, %v3121, %v3124
        %v3143 = vsel %vm3137, %v3130, 920167782
        %v3144 = vsel %vm3136, %v3127, %v3143
        %v3145 = vsel %vm3135, %v3142, %v3144
        %v3146 = vsel %vm3134, %v3124, %v3127
        %v3147 = vsel %vm3137, %v3133, 1326507024
        %v3148 = vsel %vm3136, %v3130, %v3147
        %v3149 = vsel %vm3135, %v3146, %v3148
        %v3150 = vshll.u32 %v3110, 8
        %v3151 = vmul.u32.u64.compose %v3150, %v3149
        %v3152 = vextract.low.u32 %v3151
        %v3153 = vextract.high.u32 %v3151
        %v3154 = vmul.u32.u64.compose %v3150, %v3145
        %v3155 = vextract.low.u32 %v3154
        %v3156 = vextract.high.u32 %v3154
        %v3157 = vmul.u32 %v3150, %v3141
        %v3158 = vadd.s32 %v3153, %v3155
        %vm3159 = vc.u32 %v3153, %v3155
        %v3160 = vadd.s32 %v3156, 1
        %v3161 = vsel %vm3159, %v3160, %v3156
        %v3162 = vadd.s32 %v3157, %v3161
        %v3163 = vadd.s32 %v3162, 536870912
        %v3164 = vshrl.u32 %v3163, 30
        %v3165 = vshll.u32 %v3164, 30
        %v3166 = vsub.s32 %v3162, %v3165
        %vm3167 = vcmp.lt.s32.totalorder %v3166, 0
        %v3168 = vsub.s32 0, %v3166
        %v3169 = vsel %vm3167, %v3168, %v3166
        %v3170 = vclz %v3169
        %v3171 = vsub.s32 %v3170, 2
        %vm3172 = vcmp.gt.s32.totalorder 0, %v3171
        %v3173 = vsel %vm3172, 0, %v3171
        %v3174 = vsub.s32 32, %v3173
        %v3175 = vshll.u32 %v3166, %v3173
        %v3176 = vshrl.u32 %v3158, %v3174
        %v3177 = vor.u32 %v3175, %v3176
        %v3178 = vsub.s32 4294967266, %v3173
        %v3179 = vadd.s32 %v3178, 127
        %v3180 = vshll.u32 %v3179, 23
        %v3181 = vor.u32 4788187, %v3180
        %v3182 = vand.u32 2147483647, %v3181
        %v3184 = vcvt.s32.f32 %v3177
        %v3185 = vmul.f32 %v3184, %v3182
        %v3186 = vxor.u32 %v3185, 2147483648
        %v3187 = vsel %vm3104, %v3186, %v3185
        %v3188 = vsub.s32 4, %v3164
        %v3189 = vsel %vm3104, %v3188, %v3164
        %v3190 = vsel %vm3103, %v3080, %v3187
        %v3191 = vsel %vm3103, 0, %v3189
        %v3192 = vcosq.f32.pop %v3190
        %v3193 = vsinq.f32.pop %v3190
        %vm3194 = vweird.f32 %v3080
        %v3195 = vadd.s32 %v3191, 3
        %v3196 = vand.u32 %v3195, 3
        %vm3197 = vcmp.lt.s32.totalorder %v3196, 2
        %vm3198 = vcmp.eq.s32.totalorder %v3196, 0
        %v3199 = vxor.u32 %v3193, 2147483648
        %v3200 = vsel %vm3198, %v3192, %v3199
        %vm3201 = vcmp.eq.s32.totalorder %v3196, 2
        %v3202 = vxor.u32 %v3192, 2147483648
        %v3203 = vsel %vm3201, %v3202, %v3193
        %v3204 = vsel %vm3197, %v3200, %v3203
        %v3205 = vsel %vm3194, nan, %v3204
        %v3206 = vand.u32 2147483647, %v3086
        %vm3207 = vcmp.le.f32.partialorder %v3206, 0.7853982
        %vm3208 = vcmp.lt.s32.totalorder %v3086, 0
        %v3209 = vand.u32 %v3086, 2139095040
        %v3210 = vshrl.u32 %v3209, 23
        %v3211 = vsub.s32 %v3210, 127
        %v3212 = vand.u32 2147483647, %v3086
        %v3213 = vand.u32 %v3212, 8388607
        %v3214 = vor.u32 %v3213, 8388608
        %v3215 = vsub.s32 0, %v3214
        %v3216 = vadd.s32 %v3211, 1
        %vm3217 = vcmp.gt.s32.totalorder %v3216, 0
        %v3218 = vsel %vm3217, %v3216, 0
        %v3219 = vshrl.u32 %v3218, 5
        %v3220 = vand.u32 %v3218, 31
        %v3221 = vsub.s32 32, %v3220
        %v3222 = vshrl.u32 683565275, %v3221
        %v3223 = vshll.u32 683565275, %v3220
        %v3224 = vshrl.u32 2475754826, %v3221
        %v3225 = vor.u32 %v3223, %v3224
        %v3226 = vshll.u32 2475754826, %v3220
        %v3227 = vshrl.u32 2131351028, %v3221
        %v3228 = vor.u32 %v3226, %v3227
        %v3229 = vshll.u32 2131351028, %v3220
        %v3230 = vshrl.u32 2102212464, %v3221
        %v3231 = vor.u32 %v3229, %v3230
        %v3232 = vshll.u32 2102212464, %v3220
        %v3233 = vshrl.u32 920167782, %v3221
        %v3234 = vor.u32 %v3232, %v3233
        %v3235 = vshll.u32 920167782, %v3220
        %v3236 = vshrl.u32 1326507024, %v3221
        %v3237 = vor.u32 %v3235, %v3236
        %vm3238 = vcmp.lt.s32.totalorder %v3219, 1
        %vm3239 = vcmp.lt.s32.totalorder %v3219, 2
        %vm3240 = vcmp.lt.s32.totalorder %v3219, 3
        %vm3241 = vcmp.lt.s32.totalorder %v3219, 4
        %v3242 = vsel %vm3238, %v3222, %v3225
        %v3243 = vsel %vm3241, %v3231, 2102212464
        %v3244 = vsel %vm3240, %v3228, %v3243
        %v3245 = vsel %vm3239, %v3242, %v3244
        %v3246 = vsel %vm3238, %v3225, %v3228
        %v3247 = vsel %vm3241, %v3234, 920167782
        %v3248 = vsel %vm3240, %v3231, %v3247
        %v3249 = vsel %vm3239, %v3246, %v3248
        %v3250 = vsel %vm3238, %v3228, %v3231
        %v3251 = vsel %vm3241, %v3237, 1326507024
        %v3252 = vsel %vm3240, %v3234, %v3251
        %v3253 = vsel %vm3239, %v3250, %v3252
        %v3254 = vshll.u32 %v3214, 8
        %v3255 = vmul.u32.u64.compose %v3254, %v3253
        %v3256 = vextract.low.u32 %v3255
        %v3257 = vextract.high.u32 %v3255
        %v3258 = vmul.u32.u64.compose %v3254, %v3249
        %v3259 = vextract.low.u32 %v3258
        %v3260 = vextract.high.u32 %v3258
        %v3261 = vmul.u32 %v3254, %v3245
        %v3262 = vadd.s32 %v3257, %v3259
        %vm3263 = vc.u32 %v3257, %v3259
        %v3264 = vadd.s32 %v3260, 1
        %v3265 = vsel %vm3263, %v3264, %v3260
        %v3266 = vadd.s32 %v3261, %v3265
        %v3267 = vadd.s32 %v3266, 536870912
        %v3268 = vshrl.u32 %v3267, 30
        %v3269 = vshll.u32 %v3268, 30
        %v3270 = vsub.s32 %v3266, %v3269
        %vm3271 = vcmp.lt.s32.totalorder %v3270, 0
        %v3272 = vsub.s32 0, %v3270
        %v3273 = vsel %vm3271, %v3272, %v3270
        %v3274 = vclz %v3273
        %v3275 = vsub.s32 %v3274, 2
        %vm3276 = vcmp.gt.s32.totalorder 0, %v3275
        %v3277 = vsel %vm3276, 0, %v3275
        %v3278 = vsub.s32 32, %v3277
        %v3279 = vshll.u32 %v3270, %v3277
        %v3280 = vshrl.u32 %v3262, %v3278
        %v3281 = vor.u32 %v3279, %v3280
        %v3282 = vsub.s32 4294967266, %v3277
        %v3283 = vadd.s32 %v3282, 127
        %v3284 = vshll.u32 %v3283, 23
        %v3285 = vor.u32 4788187, %v3284
        %v3286 = vand.u32 2147483647, %v3285
        %v3288 = vcvt.s32.f32 %v3281
        %v3289 = vmul.f32 %v3288, %v3286
        %v3290 = vxor.u32 %v3289, 2147483648
        %v3291 = vsel %vm3208, %v3290, %v3289
        %v3292 = vsub.s32 4, %v3268
        %v3293 = vsel %vm3208, %v3292, %v3268
        %v3294 = vsel %vm3207, %v3086, %v3291
        %v3295 = vsel %vm3207, 0, %v3293
        %v3296 = vcosq.f32.pop %v3294
        %v3297 = vsinq.f32.pop %v3294
        %vm3298 = vweird.f32 %v3086
        %v3299 = vadd.s32 %v3295, 3
        %v3300 = vand.u32 %v3299, 3
        %vm3301 = vcmp.lt.s32.totalorder %v3300, 2
        %vm3302 = vcmp.eq.s32.totalorder %v3300, 0
        %v3303 = vxor.u32 %v3297, 2147483648
        %v3304 = vsel %vm3302, %v3296, %v3303
        %vm3305 = vcmp.eq.s32.totalorder %v3300, 2
        %v3306 = vxor.u32 %v3296, 2147483648
        %v3307 = vsel %vm3305, %v3306, %v3297
        %v3308 = vsel %vm3301, %v3304, %v3307
        %v3309 = vsel %vm3298, nan, %v3308
        %v3310 = vand.u32 2147483647, %v3092
        %vm3311 = vcmp.le.f32.partialorder %v3310, 0.7853982
        %vm3312 = vcmp.lt.s32.totalorder %v3092, 0
        %v3313 = vand.u32 %v3092, 2139095040
        %v3314 = vshrl.u32 %v3313, 23
        %v3315 = vsub.s32 %v3314, 127
        %v3316 = vand.u32 2147483647, %v3092
        %v3317 = vand.u32 %v3316, 8388607
        %v3318 = vor.u32 %v3317, 8388608
        %v3319 = vsub.s32 0, %v3318
        %v3320 = vadd.s32 %v3315, 1
        %vm3321 = vcmp.gt.s32.totalorder %v3320, 0
        %v3322 = vsel %vm3321, %v3320, 0
        %v3323 = vshrl.u32 %v3322, 5
        %v3324 = vand.u32 %v3322, 31
        %v3325 = vsub.s32 32, %v3324
        %v3326 = vshrl.u32 683565275, %v3325
        %v3327 = vshll.u32 683565275, %v3324
        %v3328 = vshrl.u32 2475754826, %v3325
        %v3329 = vor.u32 %v3327, %v3328
        %v3330 = vshll.u32 2475754826, %v3324
        %v3331 = vshrl.u32 2131351028, %v3325
        %v3332 = vor.u32 %v3330, %v3331
        %v3333 = vshll.u32 2131351028, %v3324
        %v3334 = vshrl.u32 2102212464, %v3325
        %v3335 = vor.u32 %v3333, %v3334
        %v3336 = vshll.u32 2102212464, %v3324
        %v3337 = vshrl.u32 920167782, %v3325
        %v3338 = vor.u32 %v3336, %v3337
        %v3339 = vshll.u32 920167782, %v3324
        %v3340 = vshrl.u32 1326507024, %v3325
        %v3341 = vor.u32 %v3339, %v3340
        %vm3342 = vcmp.lt.s32.totalorder %v3323, 1
        %vm3343 = vcmp.lt.s32.totalorder %v3323, 2
        %vm3344 = vcmp.lt.s32.totalorder %v3323, 3
        %vm3345 = vcmp.lt.s32.totalorder %v3323, 4
        %v3346 = vsel %vm3342, %v3326, %v3329
        %v3347 = vsel %vm3345, %v3335, 2102212464
        %v3348 = vsel %vm3344, %v3332, %v3347
        %v3349 = vsel %vm3343, %v3346, %v3348
        %v3350 = vsel %vm3342, %v3329, %v3332
        %v3351 = vsel %vm3345, %v3338, 920167782
        %v3352 = vsel %vm3344, %v3335, %v3351
        %v3353 = vsel %vm3343, %v3350, %v3352
        %v3354 = vsel %vm3342, %v3332, %v3335
        %v3355 = vsel %vm3345, %v3341, 1326507024
        %v3356 = vsel %vm3344, %v3338, %v3355
        %v3357 = vsel %vm3343, %v3354, %v3356
        %v3358 = vshll.u32 %v3318, 8
        %v3359 = vmul.u32.u64.compose %v3358, %v3357
        %v3360 = vextract.low.u32 %v3359
        %v3361 = vextract.high.u32 %v3359
        %v3362 = vmul.u32.u64.compose %v3358, %v3353
        %v3363 = vextract.low.u32 %v3362
        %v3364 = vextract.high.u32 %v3362
        %v3365 = vmul.u32 %v3358, %v3349
        %v3366 = vadd.s32 %v3361, %v3363
        %vm3367 = vc.u32 %v3361, %v3363
        %v3368 = vadd.s32 %v3364, 1
        %v3369 = vsel %vm3367, %v3368, %v3364
        %v3370 = vadd.s32 %v3365, %v3369
        %v3371 = vadd.s32 %v3370, 536870912
        %v3372 = vshrl.u32 %v3371, 30
        %v3373 = vshll.u32 %v3372, 30
        %v3374 = vsub.s32 %v3370, %v3373
        %vm3375 = vcmp.lt.s32.totalorder %v3374, 0
        %v3376 = vsub.s32 0, %v3374
        %v3377 = vsel %vm3375, %v3376, %v3374
        %v3378 = vclz %v3377
        %v3379 = vsub.s32 %v3378, 2
        %vm3380 = vcmp.gt.s32.totalorder 0, %v3379
        %v3381 = vsel %vm3380, 0, %v3379
        %v3382 = vsub.s32 32, %v3381
        %v3383 = vshll.u32 %v3374, %v3381
        %v3384 = vshrl.u32 %v3366, %v3382
        %v3385 = vor.u32 %v3383, %v3384
        %v3386 = vsub.s32 4294967266, %v3381
        %v3387 = vadd.s32 %v3386, 127
        %v3388 = vshll.u32 %v3387, 23
        %v3389 = vor.u32 4788187, %v3388
        %v3390 = vand.u32 2147483647, %v3389
        %v3392 = vcvt.s32.f32 %v3385
        %v3393 = vmul.f32 %v3392, %v3390
        %v3394 = vxor.u32 %v3393, 2147483648
        %v3395 = vsel %vm3312, %v3394, %v3393
        %v3396 = vsub.s32 4, %v3372
        %v3397 = vsel %vm3312, %v3396, %v3372
        %v3398 = vsel %vm3311, %v3092, %v3395
        %v3399 = vsel %vm3311, 0, %v3397
        %v3400 = vcosq.f32.pop %v3398
        %v3401 = vsinq.f32.pop %v3398
        %vm3402 = vweird.f32 %v3092
        %v3403 = vadd.s32 %v3399, 3
        %v3404 = vand.u32 %v3403, 3
        %vm3405 = vcmp.lt.s32.totalorder %v3404, 2
        %vm3406 = vcmp.eq.s32.totalorder %v3404, 0
        %v3407 = vxor.u32 %v3401, 2147483648
        %v3408 = vsel %vm3406, %v3400, %v3407
        %vm3409 = vcmp.eq.s32.totalorder %v3404, 2
        %v3410 = vxor.u32 %v3400, 2147483648
        %v3411 = vsel %vm3409, %v3410, %v3401
        %v3412 = vsel %vm3405, %v3408, %v3411
        %v3413 = vsel %vm3402, nan, %v3412
        %v3414 = vand.u32 2147483647, %v3098
        %vm3415 = vcmp.le.f32.partialorder %v3414, 0.7853982
        %vm3416 = vcmp.lt.s32.totalorder %v3098, 0
        %v3417 = vand.u32 %v3098, 2139095040
        %v3418 = vshrl.u32 %v3417, 23
        %v3419 = vsub.s32 %v3418, 127
        %v3420 = vand.u32 2147483647, %v3098
        %v3421 = vand.u32 %v3420, 8388607
        %v3422 = vor.u32 %v3421, 8388608
        %v3423 = vsub.s32 0, %v3422
        %v3424 = vadd.s32 %v3419, 1
        %vm3425 = vcmp.gt.s32.totalorder %v3424, 0
        %v3426 = vsel %vm3425, %v3424, 0
        %v3427 = vshrl.u32 %v3426, 5
        %v3428 = vand.u32 %v3426, 31
        %v3429 = vsub.s32 32, %v3428
        %v3430 = vshrl.u32 683565275, %v3429
        %v3431 = vshll.u32 683565275, %v3428
        %v3432 = vshrl.u32 2475754826, %v3429
        %v3433 = vor.u32 %v3431, %v3432
        %v3434 = vshll.u32 2475754826, %v3428
        %v3435 = vshrl.u32 2131351028, %v3429
        %v3436 = vor.u32 %v3434, %v3435
        %v3437 = vshll.u32 2131351028, %v3428
        %v3438 = vshrl.u32 2102212464, %v3429
        %v3439 = vor.u32 %v3437, %v3438
        %v3440 = vshll.u32 2102212464, %v3428
        %v3441 = vshrl.u32 920167782, %v3429
        %v3442 = vor.u32 %v3440, %v3441
        %v3443 = vshll.u32 920167782, %v3428
        %v3444 = vshrl.u32 1326507024, %v3429
        %v3445 = vor.u32 %v3443, %v3444
        %vm3446 = vcmp.lt.s32.totalorder %v3427, 1
        %vm3447 = vcmp.lt.s32.totalorder %v3427, 2
        %vm3448 = vcmp.lt.s32.totalorder %v3427, 3
        %vm3449 = vcmp.lt.s32.totalorder %v3427, 4
        %v3450 = vsel %vm3446, %v3430, %v3433
        %v3451 = vsel %vm3449, %v3439, 2102212464
        %v3452 = vsel %vm3448, %v3436, %v3451
        %v3453 = vsel %vm3447, %v3450, %v3452
        %v3454 = vsel %vm3446, %v3433, %v3436
        %v3455 = vsel %vm3449, %v3442, 920167782
        %v3456 = vsel %vm3448, %v3439, %v3455
        %v3457 = vsel %vm3447, %v3454, %v3456
        %v3458 = vsel %vm3446, %v3436, %v3439
        %v3459 = vsel %vm3449, %v3445, 1326507024
        %v3460 = vsel %vm3448, %v3442, %v3459
        %v3461 = vsel %vm3447, %v3458, %v3460
        %v3462 = vshll.u32 %v3422, 8
        %v3463 = vmul.u32.u64.compose %v3462, %v3461
        %v3464 = vextract.low.u32 %v3463
        %v3465 = vextract.high.u32 %v3463
        %v3466 = vmul.u32.u64.compose %v3462, %v3457
        %v3467 = vextract.low.u32 %v3466
        %v3468 = vextract.high.u32 %v3466
        %v3469 = vmul.u32 %v3462, %v3453
        %v3470 = vadd.s32 %v3465, %v3467
        %vm3471 = vc.u32 %v3465, %v3467
        %v3472 = vadd.s32 %v3468, 1
        %v3473 = vsel %vm3471, %v3472, %v3468
        %v3474 = vadd.s32 %v3469, %v3473
        %v3475 = vadd.s32 %v3474, 536870912
        %v3476 = vshrl.u32 %v3475, 30
        %v3477 = vshll.u32 %v3476, 30
        %v3478 = vsub.s32 %v3474, %v3477
        %vm3479 = vcmp.lt.s32.totalorder %v3478, 0
        %v3480 = vsub.s32 0, %v3478
        %v3481 = vsel %vm3479, %v3480, %v3478
        %v3482 = vclz %v3481
        %v3483 = vsub.s32 %v3482, 2
        %vm3484 = vcmp.gt.s32.totalorder 0, %v3483
        %v3485 = vsel %vm3484, 0, %v3483
        %v3486 = vsub.s32 32, %v3485
        %v3487 = vshll.u32 %v3478, %v3485
        %v3488 = vshrl.u32 %v3470, %v3486
        %v3489 = vor.u32 %v3487, %v3488
        %v3490 = vsub.s32 4294967266, %v3485
        %v3491 = vadd.s32 %v3490, 127
        %v3492 = vshll.u32 %v3491, 23
        %v3493 = vor.u32 4788187, %v3492
        %v3494 = vand.u32 2147483647, %v3493
        %v3496 = vcvt.s32.f32 %v3489
        %v3497 = vmul.f32 %v3496, %v3494
        %v3498 = vxor.u32 %v3497, 2147483648
        %v3499 = vsel %vm3416, %v3498, %v3497
        %v3500 = vsub.s32 4, %v3476
        %v3501 = vsel %vm3416, %v3500, %v3476
        %v3502 = vsel %vm3415, %v3098, %v3499
        %v3503 = vsel %vm3415, 0, %v3501
        %v3504 = vcosq.f32.pop %v3502
        %v3505 = vsinq.f32.pop %v3502
        %vm3506 = vweird.f32 %v3098
        %v3507 = vadd.s32 %v3503, 3
        %v3508 = vand.u32 %v3507, 3
        %vm3509 = vcmp.lt.s32.totalorder %v3508, 2
        %vm3510 = vcmp.eq.s32.totalorder %v3508, 0
        %v3511 = vxor.u32 %v3505, 2147483648
        %v3512 = vsel %vm3510, %v3504, %v3511
        %vm3513 = vcmp.eq.s32.totalorder %v3508, 2
        %v3514 = vxor.u32 %v3504, 2147483648
        %v3515 = vsel %vm3513, %v3514, %v3505
        %v3516 = vsel %vm3509, %v3512, %v3515
        %v3517 = vsel %vm3506, nan, %v3516
        %v3519 = vlaneseq
        %v3520 = vshrl.u32 %v3519, 7
        %v3521 = vsub.s32 0, %v3520
        %v3522 = vrot.slane %v3001, %v3521
        %3524 = vmatprep.subr.mxu0 0.0
        %3525 = vmatpush1.msra.mxu0 %v2985
        %3526 = vmatprep.subr.mxu0 0.0
        %3527 = vmatpush1.msra.mxu0 %v2986
        %3528 = vmatprep.subr.mxu0 0.0
        %3529 = vmatpush1.msra.mxu0 %v2987
        %3530 = vmatprep.subr.mxu0 0.0
        %3531 = vmatpush1.msra.mxu0 %v2988
        %3532 = vmatprep.subr.mxu0 0.0
        %3533 = vmatpush1.msra.mxu0 %v2989
        %3534 = vmatprep.subr.mxu0 0.0
        %3535 = vmatpush1.msra.mxu0 %v2990
        %3536 = vmatprep.subr.mxu0 0.0
        %3537 = vmatpush1.msra.mxu0 %v2991
        %3538 = vmatprep.subr.mxu0 0.0
        %3539 = vmatpush1.msra.mxu0 %v2992
        %3540 = vmatprep.subr.mxu0 0.0
        %3541 = vmatpush1.msra.mxu0 %v2993
        %3542 = vmatprep.subr.mxu0 0.0
        %3543 = vmatpush1.msra.mxu0 %v2994
        %3544 = vmatprep.subr.mxu0 0.0
        %3545 = vmatpush1.msra.mxu0 %v2995
        %3546 = vmatprep.subr.mxu0 0.0
        %3547 = vmatpush1.msra.mxu0 %v2996
        %3548 = vmatprep.subr.mxu0 0.0
        %3549 = vmatpush1.msra.mxu0 %v2997
        %3550 = vmatprep.subr.mxu0 0.0
        %3551 = vmatpush1.msra.mxu0 %v2998
        %3552 = vmatprep.subr.mxu0 0.0
        %3553 = vmatpush1.msra.mxu0 %v2999
        %3554 = vmatprep.subr.mxu0 0.0
        %3555 = vmatpush1.msra.mxu0 %v3000
        %3556 = vmatprep.subr.mxu0 0.0
        %3557 = vmatpush1.msra.mxu0 0.0
        %3558 = vmatprep.subr.mxu0 0.0
        %3559 = vmatpush1.msra.mxu0 0.0
        %3560 = vmatprep.subr.mxu0 0.0
        %3561 = vmatpush1.msra.mxu0 0.0
        %3562 = vmatprep.subr.mxu0 0.0
        %3563 = vmatpush1.msra.mxu0 0.0
        %3564 = vmatprep.subr.mxu0 0.0
        %3565 = vmatpush1.msra.mxu0 0.0
        %3566 = vmatprep.subr.mxu0 0.0
        %3567 = vmatpush1.msra.mxu0 0.0
        %3568 = vmatprep.subr.mxu0 0.0
        %3569 = vmatpush1.msra.mxu0 0.0
        %3570 = vmatprep.subr.mxu0 0.0
        %3571 = vmatpush1.msra.mxu0 0.0
        %3572 = vmatprep.subr.mxu0 0.0
        %3573 = vmatpush1.msra.mxu0 0.0
        %3574 = vmatprep.subr.mxu0 0.0
        %3575 = vmatpush1.msra.mxu0 0.0
        %3576 = vmatprep.subr.mxu0 0.0
        %3577 = vmatpush1.msra.mxu0 0.0
        %3578 = vmatprep.subr.mxu0 0.0
        %3579 = vmatpush1.msra.mxu0 0.0
        %3580 = vmatprep.subr.mxu0 0.0
        %3581 = vmatpush1.msra.mxu0 0.0
        %3582 = vmatprep.subr.mxu0 0.0
        %3583 = vmatpush1.msra.mxu0 0.0
        %3584 = vmatprep.subr.mxu0 0.0
        %3585 = vmatpush1.msra.mxu0 0.0
        %3586 = vmatprep.subr.mxu0 0.0
        %3587 = vmatpush1.msra.mxu0 0.0
        %3588 = vmatprep.mubr.f32.mxu0 0.0
        %3589 = vmatmul.mubr.f32.gmra.mrb[0].mxu0 %v3205
        %v3590 = vpop.f32.mrb[0].mxu0
        %v3591 = vadd.f32 %v3522, %v3590
        %v3592 = vpop.f32.mrb[0].mxu0
        %3593 = vmatprep.mubr.f32.mxu0 0.0
        %3594 = vmatmul.mubr.f32.gmra.mrb[0].mxu0 %v3309
        %v3595 = vpop.f32.mrb[0].mxu0
        %v3596 = vadd.f32 %v3522, %v3595
        %v3597 = vpop.f32.mrb[0].mxu0
        %3598 = vmatprep.mubr.f32.mxu0 0.0
        %3599 = vmatmul.mubr.f32.gmra.mrb[0].mxu0 %v3413
        %v3600 = vpop.f32.mrb[0].mxu0
        %v3601 = vadd.f32 %v3522, %v3600
        %v3602 = vpop.f32.mrb[0].mxu0
        %3603 = vmatprep.mubr.f32.mxu0 0.0
        %3604 = vmatmul.mubr.f32.gmra.mrb[0].mxu0 %v3517
        %v3605 = vpop.f32.mrb[0].mxu0
        %v3606 = vadd.f32 %v3522, %v3605
        %v3607 = vpop.f32.mrb[0].mxu0
        %3608 = vdwg.mxu0
        %v3609 = vtanh.pop %v3591
        %v3610 = vtanh.pop %v3596
        %v3611 = vtanh.pop %v3601
        %v3612 = vtanh.pop %v3606
        %v3613 = vmul.f32 %v3609, 0.1
        %v3614 = vmul.f32 %v3610, 0.1
        %v3615 = vmul.f32 %v3611, 0.1
        %v3616 = vmul.f32 %v3612, 0.1
        %v3617 = vadd.f32 %v3613, %v3082
        %v3618 = vadd.f32 %v3614, %v3088
        %v3619 = vadd.f32 %v3615, %v3094
        %v3620 = vadd.f32 %v3616, %v3100
        %v3621 = vld [vmem:[%s17] sm:$0xff]
        %v3622 = vld [vmem:[%s17 + $0x8] sm:$0xff]
        %v3623 = vld [vmem:[%s17 + $0x10] sm:$0xff]
        %v3624 = vld [vmem:[%s17 + $0x18] sm:$0xff]
        %v3625 = vld [vmem:[%s17 + $0x20] sm:$0xff]
        %v3626 = vld [vmem:[%s17 + $0x28] sm:$0xff]
        %v3627 = vld [vmem:[%s17 + $0x30] sm:$0xff]
        %v3628 = vld [vmem:[%s17 + $0x38] sm:$0xff]
        %v3629 = vld [vmem:[%s17 + $0x40] sm:$0xff]
        %v3630 = vld [vmem:[%s17 + $0x48] sm:$0xff]
        %v3631 = vld [vmem:[%s17 + $0x50] sm:$0xff]
        %v3632 = vld [vmem:[%s17 + $0x58] sm:$0xff]
        %v3633 = vld [vmem:[%s17 + $0x60] sm:$0xff]
        %v3634 = vld [vmem:[%s17 + $0x68] sm:$0xff]
        %v3635 = vld [vmem:[%s17 + $0x70] sm:$0xff]
        %v3636 = vld [vmem:[%s17 + $0x78] sm:$0xff]
        %v3637 = vld [vmem:[%s18] sm:$0x1]
        %v3638 = vld [vmem:[#allocation25] sm:$0xff]
        %v3639 = vld [vmem:[#allocation25 + $0x8] sm:$0xff]
        %v3640 = vld [vmem:[#allocation25 + $0x10] sm:$0xff]
        %v3641 = vld [vmem:[#allocation25 + $0x18] sm:$0xff]
        %v3642 = vld [vmem:[#allocation25 + $0x20] sm:$0xff]
        %v3643 = vld [vmem:[#allocation25 + $0x28] sm:$0xff]
        %v3644 = vld [vmem:[#allocation25 + $0x30] sm:$0xff]
        %v3645 = vld [vmem:[#allocation25 + $0x38] sm:$0xff]
        %v3646 = vld [vmem:[#allocation25 + $0x40] sm:$0xff]
        %v3647 = vld [vmem:[#allocation25 + $0x48] sm:$0xff]
        %v3648 = vld [vmem:[#allocation25 + $0x50] sm:$0xff]
        %v3649 = vld [vmem:[#allocation25 + $0x58] sm:$0xff]
        %v3650 = vld [vmem:[#allocation25 + $0x60] sm:$0xff]
        %v3651 = vld [vmem:[#allocation25 + $0x68] sm:$0xff]
        %v3652 = vld [vmem:[#allocation25 + $0x70] sm:$0xff]
        %v3653 = vld [vmem:[#allocation25 + $0x78] sm:$0xff]
        %v3654 = vld [vmem:[%s20] sm:$0x1]
        %v3656 = vlaneseq
        %v3657 = vshrl.u32 %v3656, 7
        %v3658 = vsub.s32 0, %v3657
        %v3659 = vrot.slane %v3637, %v3658
        %3661 = vmatprep.subr.mxu0 0.0
        %3662 = vmatpush1.msra.mxu0 %v3621
        %3663 = vmatprep.subr.mxu0 0.0
        %3664 = vmatpush1.msra.mxu0 %v3622
        %3665 = vmatprep.subr.mxu0 0.0
        %3666 = vmatpush1.msra.mxu0 %v3623
        %3667 = vmatprep.subr.mxu0 0.0
        %3668 = vmatpush1.msra.mxu0 %v3624
        %3669 = vmatprep.subr.mxu0 0.0
        %3670 = vmatpush1.msra.mxu0 %v3625
        %3671 = vmatprep.subr.mxu0 0.0
        %3672 = vmatpush1.msra.mxu0 %v3626
        %3673 = vmatprep.subr.mxu0 0.0
        %3674 = vmatpush1.msra.mxu0 %v3627
        %3675 = vmatprep.subr.mxu0 0.0
        %3676 = vmatpush1.msra.mxu0 %v3628
        %3677 = vmatprep.subr.mxu0 0.0
        %3678 = vmatpush1.msra.mxu0 %v3629
        %3679 = vmatprep.subr.mxu0 0.0
        %3680 = vmatpush1.msra.mxu0 %v3630
        %3681 = vmatprep.subr.mxu0 0.0
        %3682 = vmatpush1.msra.mxu0 %v3631
        %3683 = vmatprep.subr.mxu0 0.0
        %3684 = vmatpush1.msra.mxu0 %v3632
        %3685 = vmatprep.subr.mxu0 0.0
        %3686 = vmatpush1.msra.mxu0 %v3633
        %3687 = vmatprep.subr.mxu0 0.0
        %3688 = vmatpush1.msra.mxu0 %v3634
        %3689 = vmatprep.subr.mxu0 0.0
        %3690 = vmatpush1.msra.mxu0 %v3635
        %3691 = vmatprep.subr.mxu0 0.0
        %3692 = vmatpush1.msra.mxu0 %v3636
        %3693 = vmatprep.subr.mxu0 0.0
        %3694 = vmatpush1.msra.mxu0 0.0
        %3695 = vmatprep.subr.mxu0 0.0
        %3696 = vmatpush1.msra.mxu0 0.0
        %3697 = vmatprep.subr.mxu0 0.0
        %3698 = vmatpush1.msra.mxu0 0.0
        %3699 = vmatprep.subr.mxu0 0.0
        %3700 = vmatpush1.msra.mxu0 0.0
        %3701 = vmatprep.subr.mxu0 0.0
        %3702 = vmatpush1.msra.mxu0 0.0
        %3703 = vmatprep.subr.mxu0 0.0
        %3704 = vmatpush1.msra.mxu0 0.0
        %3705 = vmatprep.subr.mxu0 0.0
        %3706 = vmatpush1.msra.mxu0 0.0
        %3707 = vmatprep.subr.mxu0 0.0
        %3708 = vmatpush1.msra.mxu0 0.0
        %3709 = vmatprep.subr.mxu0 0.0
        %3710 = vmatpush1.msra.mxu0 0.0
        %3711 = vmatprep.subr.mxu0 0.0
        %3712 = vmatpush1.msra.mxu0 0.0
        %3713 = vmatprep.subr.mxu0 0.0
        %3714 = vmatpush1.msra.mxu0 0.0
        %3715 = vmatprep.subr.mxu0 0.0
        %3716 = vmatpush1.msra.mxu0 0.0
        %3717 = vmatprep.subr.mxu0 0.0
        %3718 = vmatpush1.msra.mxu0 0.0
        %3719 = vmatprep.subr.mxu0 0.0
        %3720 = vmatpush1.msra.mxu0 0.0
        %3721 = vmatprep.subr.mxu0 0.0
        %3722 = vmatpush1.msra.mxu0 0.0
        %3723 = vmatprep.subr.mxu0 0.0
        %3724 = vmatpush1.msra.mxu0 0.0
        %3725 = vmatprep.mubr.f32.mxu0 0.0
        %3726 = vmatmul.mubr.f32.gmra.mrb[0].mxu0 %v3617
        %v3727 = vpop.f32.mrb[0].mxu0
        %v3728 = vadd.f32 %v3659, %v3727
        %v3729 = vpop.f32.mrb[0].mxu0
        %3730 = vmatprep.mubr.f32.mxu0 0.0
        %3731 = vmatmul.mubr.f32.gmra.mrb[0].mxu0 %v3618
        %v3732 = vpop.f32.mrb[0].mxu0
        %v3733 = vadd.f32 %v3659, %v3732
        %v3734 = vpop.f32.mrb[0].mxu0
        %3735 = vmatprep.mubr.f32.mxu0 0.0
        %3736 = vmatmul.mubr.f32.gmra.mrb[0].mxu0 %v3619
        %v3737 = vpop.f32.mrb[0].mxu0
        %v3738 = vadd.f32 %v3659, %v3737
        %v3739 = vpop.f32.mrb[0].mxu0
        %3740 = vmatprep.mubr.f32.mxu0 0.0
        %3741 = vmatmul.mubr.f32.gmra.mrb[0].mxu0 %v3620
        %v3742 = vpop.f32.mrb[0].mxu0
        %v3743 = vadd.f32 %v3659, %v3742
        %v3744 = vpop.f32.mrb[0].mxu0
        %3745 = vdwg.mxu0
        %v3746 = vand.u32 2147483647, %v3728
        %vm3747 = vcmp.le.f32.partialorder %v3746, 0.7853982
        %vm3748 = vcmp.lt.s32.totalorder %v3728, 0
        %v3749 = vand.u32 %v3728, 2139095040
        %v3750 = vshrl.u32 %v3749, 23
        %v3751 = vsub.s32 %v3750, 127
        %v3752 = vand.u32 2147483647, %v3728
        %v3753 = vand.u32 %v3752, 8388607
        %v3754 = vor.u32 %v3753, 8388608
        %v3755 = vsub.s32 0, %v3754
        %v3756 = vadd.s32 %v3751, 1
        %vm3757 = vcmp.gt.s32.totalorder %v3756, 0
        %v3758 = vsel %vm3757, %v3756, 0
        %v3759 = vshrl.u32 %v3758, 5
        %v3760 = vand.u32 %v3758, 31
        %v3761 = vsub.s32 32, %v3760
        %v3762 = vshrl.u32 683565275, %v3761
        %v3763 = vshll.u32 683565275, %v3760
        %v3764 = vshrl.u32 2475754826, %v3761
        %v3765 = vor.u32 %v3763, %v3764
        %v3766 = vshll.u32 2475754826, %v3760
        %v3767 = vshrl.u32 2131351028, %v3761
        %v3768 = vor.u32 %v3766, %v3767
        %v3769 = vshll.u32 2131351028, %v3760
        %v3770 = vshrl.u32 2102212464, %v3761
        %v3771 = vor.u32 %v3769, %v3770
        %v3772 = vshll.u32 2102212464, %v3760
        %v3773 = vshrl.u32 920167782, %v3761
        %v3774 = vor.u32 %v3772, %v3773
        %v3775 = vshll.u32 920167782, %v3760
        %v3776 = vshrl.u32 1326507024, %v3761
        %v3777 = vor.u32 %v3775, %v3776
        %vm3778 = vcmp.lt.s32.totalorder %v3759, 1
        %vm3779 = vcmp.lt.s32.totalorder %v3759, 2
        %vm3780 = vcmp.lt.s32.totalorder %v3759, 3
        %vm3781 = vcmp.lt.s32.totalorder %v3759, 4
        %v3782 = vsel %vm3778, %v3762, %v3765
        %v3783 = vsel %vm3781, %v3771, 2102212464
        %v3784 = vsel %vm3780, %v3768, %v3783
        %v3785 = vsel %vm3779, %v3782, %v3784
        %v3786 = vsel %vm3778, %v3765, %v3768
        %v3787 = vsel %vm3781, %v3774, 920167782
        %v3788 = vsel %vm3780, %v3771, %v3787
        %v3789 = vsel %vm3779, %v3786, %v3788
        %v3790 = vsel %vm3778, %v3768, %v3771
        %v3791 = vsel %vm3781, %v3777, 1326507024
        %v3792 = vsel %vm3780, %v3774, %v3791
        %v3793 = vsel %vm3779, %v3790, %v3792
        %v3794 = vshll.u32 %v3754, 8
        %v3795 = vmul.u32.u64.compose %v3794, %v3793
        %v3796 = vextract.low.u32 %v3795
        %v3797 = vextract.high.u32 %v3795
        %v3798 = vmul.u32.u64.compose %v3794, %v3789
        %v3799 = vextract.low.u32 %v3798
        %v3800 = vextract.high.u32 %v3798
        %v3801 = vmul.u32 %v3794, %v3785
        %v3802 = vadd.s32 %v3797, %v3799
        %vm3803 = vc.u32 %v3797, %v3799
        %v3804 = vadd.s32 %v3800, 1
        %v3805 = vsel %vm3803, %v3804, %v3800
        %v3806 = vadd.s32 %v3801, %v3805
        %v3807 = vadd.s32 %v3806, 536870912
        %v3808 = vshrl.u32 %v3807, 30
        %v3809 = vshll.u32 %v3808, 30
        %v3810 = vsub.s32 %v3806, %v3809
        %vm3811 = vcmp.lt.s32.totalorder %v3810, 0
        %v3812 = vsub.s32 0, %v3810
        %v3813 = vsel %vm3811, %v3812, %v3810
        %v3814 = vclz %v3813
        %v3815 = vsub.s32 %v3814, 2
        %vm3816 = vcmp.gt.s32.totalorder 0, %v3815
        %v3817 = vsel %vm3816, 0, %v3815
        %v3818 = vsub.s32 32, %v3817
        %v3819 = vshll.u32 %v3810, %v3817
        %v3820 = vshrl.u32 %v3802, %v3818
        %v3821 = vor.u32 %v3819, %v3820
        %v3822 = vsub.s32 4294967266, %v3817
        %v3823 = vadd.s32 %v3822, 127
        %v3824 = vshll.u32 %v3823, 23
        %v3825 = vor.u32 4788187, %v3824
        %v3826 = vand.u32 2147483647, %v3825
        %v3828 = vcvt.s32.f32 %v3821
        %v3829 = vmul.f32 %v3828, %v3826
        %v3830 = vxor.u32 %v3829, 2147483648
        %v3831 = vsel %vm3748, %v3830, %v3829
        %v3832 = vsub.s32 4, %v3808
        %v3833 = vsel %vm3748, %v3832, %v3808
        %v3834 = vsel %vm3747, %v3728, %v3831
        %v3835 = vsel %vm3747, 0, %v3833
        %v3836 = vcosq.f32.pop %v3834
        %v3837 = vsinq.f32.pop %v3834
        %vm3838 = vweird.f32 %v3728
        %v3839 = vadd.s32 %v3835, 3
        %v3840 = vand.u32 %v3839, 3
        %vm3841 = vcmp.lt.s32.totalorder %v3840, 2
        %vm3842 = vcmp.eq.s32.totalorder %v3840, 0
        %v3843 = vxor.u32 %v3837, 2147483648
        %v3844 = vsel %vm3842, %v3836, %v3843
        %vm3845 = vcmp.eq.s32.totalorder %v3840, 2
        %v3846 = vxor.u32 %v3836, 2147483648
        %v3847 = vsel %vm3845, %v3846, %v3837
        %v3848 = vsel %vm3841, %v3844, %v3847
        %v3849 = vsel %vm3838, nan, %v3848
        %v3850 = vand.u32 2147483647, %v3733
        %vm3851 = vcmp.le.f32.partialorder %v3850, 0.7853982
        %vm3852 = vcmp.lt.s32.totalorder %v3733, 0
        %v3853 = vand.u32 %v3733, 2139095040
        %v3854 = vshrl.u32 %v3853, 23
        %v3855 = vsub.s32 %v3854, 127
        %v3856 = vand.u32 2147483647, %v3733
        %v3857 = vand.u32 %v3856, 8388607
        %v3858 = vor.u32 %v3857, 8388608
        %v3859 = vsub.s32 0, %v3858
        %v3860 = vadd.s32 %v3855, 1
        %vm3861 = vcmp.gt.s32.totalorder %v3860, 0
        %v3862 = vsel %vm3861, %v3860, 0
        %v3863 = vshrl.u32 %v3862, 5
        %v3864 = vand.u32 %v3862, 31
        %v3865 = vsub.s32 32, %v3864
        %v3866 = vshrl.u32 683565275, %v3865
        %v3867 = vshll.u32 683565275, %v3864
        %v3868 = vshrl.u32 2475754826, %v3865
        %v3869 = vor.u32 %v3867, %v3868
        %v3870 = vshll.u32 2475754826, %v3864
        %v3871 = vshrl.u32 2131351028, %v3865
        %v3872 = vor.u32 %v3870, %v3871
        %v3873 = vshll.u32 2131351028, %v3864
        %v3874 = vshrl.u32 2102212464, %v3865
        %v3875 = vor.u32 %v3873, %v3874
        %v3876 = vshll.u32 2102212464, %v3864
        %v3877 = vshrl.u32 920167782, %v3865
        %v3878 = vor.u32 %v3876, %v3877
        %v3879 = vshll.u32 920167782, %v3864
        %v3880 = vshrl.u32 1326507024, %v3865
        %v3881 = vor.u32 %v3879, %v3880
        %vm3882 = vcmp.lt.s32.totalorder %v3863, 1
        %vm3883 = vcmp.lt.s32.totalorder %v3863, 2
        %vm3884 = vcmp.lt.s32.totalorder %v3863, 3
        %vm3885 = vcmp.lt.s32.totalorder %v3863, 4
        %v3886 = vsel %vm3882, %v3866, %v3869
        %v3887 = vsel %vm3885, %v3875, 2102212464
        %v3888 = vsel %vm3884, %v3872, %v3887
        %v3889 = vsel %vm3883, %v3886, %v3888
        %v3890 = vsel %vm3882, %v3869, %v3872
        %v3891 = vsel %vm3885, %v3878, 920167782
        %v3892 = vsel %vm3884, %v3875, %v3891
        %v3893 = vsel %vm3883, %v3890, %v3892
        %v3894 = vsel %vm3882, %v3872, %v3875
        %v3895 = vsel %vm3885, %v3881, 1326507024
        %v3896 = vsel %vm3884, %v3878, %v3895
        %v3897 = vsel %vm3883, %v3894, %v3896
        %v3898 = vshll.u32 %v3858, 8
        %v3899 = vmul.u32.u64.compose %v3898, %v3897
        %v3900 = vextract.low.u32 %v3899
        %v3901 = vextract.high.u32 %v3899
        %v3902 = vmul.u32.u64.compose %v3898, %v3893
        %v3903 = vextract.low.u32 %v3902
        %v3904 = vextract.high.u32 %v3902
        %v3905 = vmul.u32 %v3898, %v3889
        %v3906 = vadd.s32 %v3901, %v3903
        %vm3907 = vc.u32 %v3901, %v3903
        %v3908 = vadd.s32 %v3904, 1
        %v3909 = vsel %vm3907, %v3908, %v3904
        %v3910 = vadd.s32 %v3905, %v3909
        %v3911 = vadd.s32 %v3910, 536870912
        %v3912 = vshrl.u32 %v3911, 30
        %v3913 = vshll.u32 %v3912, 30
        %v3914 = vsub.s32 %v3910, %v3913
        %vm3915 = vcmp.lt.s32.totalorder %v3914, 0
        %v3916 = vsub.s32 0, %v3914
        %v3917 = vsel %vm3915, %v3916, %v3914
        %v3918 = vclz %v3917
        %v3919 = vsub.s32 %v3918, 2
        %vm3920 = vcmp.gt.s32.totalorder 0, %v3919
        %v3921 = vsel %vm3920, 0, %v3919
        %v3922 = vsub.s32 32, %v3921
        %v3923 = vshll.u32 %v3914, %v3921
        %v3924 = vshrl.u32 %v3906, %v3922
        %v3925 = vor.u32 %v3923, %v3924
        %v3926 = vsub.s32 4294967266, %v3921
        %v3927 = vadd.s32 %v3926, 127
        %v3928 = vshll.u32 %v3927, 23
        %v3929 = vor.u32 4788187, %v3928
        %v3930 = vand.u32 2147483647, %v3929
        %v3932 = vcvt.s32.f32 %v3925
        %v3933 = vmul.f32 %v3932, %v3930
        %v3934 = vxor.u32 %v3933, 2147483648
        %v3935 = vsel %vm3852, %v3934, %v3933
        %v3936 = vsub.s32 4, %v3912
        %v3937 = vsel %vm3852, %v3936, %v3912
        %v3938 = vsel %vm3851, %v3733, %v3935
        %v3939 = vsel %vm3851, 0, %v3937
        %v3940 = vcosq.f32.pop %v3938
        %v3941 = vsinq.f32.pop %v3938
        %vm3942 = vweird.f32 %v3733
        %v3943 = vadd.s32 %v3939, 3
        %v3944 = vand.u32 %v3943, 3
        %vm3945 = vcmp.lt.s32.totalorder %v3944, 2
        %vm3946 = vcmp.eq.s32.totalorder %v3944, 0
        %v3947 = vxor.u32 %v3941, 2147483648
        %v3948 = vsel %vm3946, %v3940, %v3947
        %vm3949 = vcmp.eq.s32.totalorder %v3944, 2
        %v3950 = vxor.u32 %v3940, 2147483648
        %v3951 = vsel %vm3949, %v3950, %v3941
        %v3952 = vsel %vm3945, %v3948, %v3951
        %v3953 = vsel %vm3942, nan, %v3952
        %v3954 = vand.u32 2147483647, %v3738
        %vm3955 = vcmp.le.f32.partialorder %v3954, 0.7853982
        %vm3956 = vcmp.lt.s32.totalorder %v3738, 0
        %v3957 = vand.u32 %v3738, 2139095040
        %v3958 = vshrl.u32 %v3957, 23
        %v3959 = vsub.s32 %v3958, 127
        %v3960 = vand.u32 2147483647, %v3738
        %v3961 = vand.u32 %v3960, 8388607
        %v3962 = vor.u32 %v3961, 8388608
        %v3963 = vsub.s32 0, %v3962
        %v3964 = vadd.s32 %v3959, 1
        %vm3965 = vcmp.gt.s32.totalorder %v3964, 0
        %v3966 = vsel %vm3965, %v3964, 0
        %v3967 = vshrl.u32 %v3966, 5
        %v3968 = vand.u32 %v3966, 31
        %v3969 = vsub.s32 32, %v3968
        %v3970 = vshrl.u32 683565275, %v3969
        %v3971 = vshll.u32 683565275, %v3968
        %v3972 = vshrl.u32 2475754826, %v3969
        %v3973 = vor.u32 %v3971, %v3972
        %v3974 = vshll.u32 2475754826, %v3968
        %v3975 = vshrl.u32 2131351028, %v3969
        %v3976 = vor.u32 %v3974, %v3975
        %v3977 = vshll.u32 2131351028, %v3968
        %v3978 = vshrl.u32 2102212464, %v3969
        %v3979 = vor.u32 %v3977, %v3978
        %v3980 = vshll.u32 2102212464, %v3968
        %v3981 = vshrl.u32 920167782, %v3969
        %v3982 = vor.u32 %v3980, %v3981
        %v3983 = vshll.u32 920167782, %v3968
        %v3984 = vshrl.u32 1326507024, %v3969
        %v3985 = vor.u32 %v3983, %v3984
        %vm3986 = vcmp.lt.s32.totalorder %v3967, 1
        %vm3987 = vcmp.lt.s32.totalorder %v3967, 2
        %vm3988 = vcmp.lt.s32.totalorder %v3967, 3
        %vm3989 = vcmp.lt.s32.totalorder %v3967, 4
        %v3990 = vsel %vm3986, %v3970, %v3973
        %v3991 = vsel %vm3989, %v3979, 2102212464
        %v3992 = vsel %vm3988, %v3976, %v3991
        %v3993 = vsel %vm3987, %v3990, %v3992
        %v3994 = vsel %vm3986, %v3973, %v3976
        %v3995 = vsel %vm3989, %v3982, 920167782
        %v3996 = vsel %vm3988, %v3979, %v3995
        %v3997 = vsel %vm3987, %v3994, %v3996
        %v3998 = vsel %vm3986, %v3976, %v3979
        %v3999 = vsel %vm3989, %v3985, 1326507024
        %v4000 = vsel %vm3988, %v3982, %v3999
        %v4001 = vsel %vm3987, %v3998, %v4000
        %v4002 = vshll.u32 %v3962, 8
        %v4003 = vmul.u32.u64.compose %v4002, %v4001
        %v4004 = vextract.low.u32 %v4003
        %v4005 = vextract.high.u32 %v4003
        %v4006 = vmul.u32.u64.compose %v4002, %v3997
        %v4007 = vextract.low.u32 %v4006
        %v4008 = vextract.high.u32 %v4006
        %v4009 = vmul.u32 %v4002, %v3993
        %v4010 = vadd.s32 %v4005, %v4007
        %vm4011 = vc.u32 %v4005, %v4007
        %v4012 = vadd.s32 %v4008, 1
        %v4013 = vsel %vm4011, %v4012, %v4008
        %v4014 = vadd.s32 %v4009, %v4013
        %v4015 = vadd.s32 %v4014, 536870912
        %v4016 = vshrl.u32 %v4015, 30
        %v4017 = vshll.u32 %v4016, 30
        %v4018 = vsub.s32 %v4014, %v4017
        %vm4019 = vcmp.lt.s32.totalorder %v4018, 0
        %v4020 = vsub.s32 0, %v4018
        %v4021 = vsel %vm4019, %v4020, %v4018
        %v4022 = vclz %v4021
        %v4023 = vsub.s32 %v4022, 2
        %vm4024 = vcmp.gt.s32.totalorder 0, %v4023
        %v4025 = vsel %vm4024, 0, %v4023
        %v4026 = vsub.s32 32, %v4025
        %v4027 = vshll.u32 %v4018, %v4025
        %v4028 = vshrl.u32 %v4010, %v4026
        %v4029 = vor.u32 %v4027, %v4028
        %v4030 = vsub.s32 4294967266, %v4025
        %v4031 = vadd.s32 %v4030, 127
        %v4032 = vshll.u32 %v4031, 23
        %v4033 = vor.u32 4788187, %v4032
        %v4034 = vand.u32 2147483647, %v4033
        %v4036 = vcvt.s32.f32 %v4029
        %v4037 = vmul.f32 %v4036, %v4034
        %v4038 = vxor.u32 %v4037, 2147483648
        %v4039 = vsel %vm3956, %v4038, %v4037
        %v4040 = vsub.s32 4, %v4016
        %v4041 = vsel %vm3956, %v4040, %v4016
        %v4042 = vsel %vm3955, %v3738, %v4039
        %v4043 = vsel %vm3955, 0, %v4041
        %v4044 = vcosq.f32.pop %v4042
        %v4045 = vsinq.f32.pop %v4042
        %vm4046 = vweird.f32 %v3738
        %v4047 = vadd.s32 %v4043, 3
        %v4048 = vand.u32 %v4047, 3
        %vm4049 = vcmp.lt.s32.totalorder %v4048, 2
        %vm4050 = vcmp.eq.s32.totalorder %v4048, 0
        %v4051 = vxor.u32 %v4045, 2147483648
        %v4052 = vsel %vm4050, %v4044, %v4051
        %vm4053 = vcmp.eq.s32.totalorder %v4048, 2
        %v4054 = vxor.u32 %v4044, 2147483648
        %v4055 = vsel %vm4053, %v4054, %v4045
        %v4056 = vsel %vm4049, %v4052, %v4055
        %v4057 = vsel %vm4046, nan, %v4056
        %v4058 = vand.u32 2147483647, %v3743
        %vm4059 = vcmp.le.f32.partialorder %v4058, 0.7853982
        %vm4060 = vcmp.lt.s32.totalorder %v3743, 0
        %v4061 = vand.u32 %v3743, 2139095040
        %v4062 = vshrl.u32 %v4061, 23
        %v4063 = vsub.s32 %v4062, 127
        %v4064 = vand.u32 2147483647, %v3743
        %v4065 = vand.u32 %v4064, 8388607
        %v4066 = vor.u32 %v4065, 8388608
        %v4067 = vsub.s32 0, %v4066
        %v4068 = vadd.s32 %v4063, 1
        %vm4069 = vcmp.gt.s32.totalorder %v4068, 0
        %v4070 = vsel %vm4069, %v4068, 0
        %v4071 = vshrl.u32 %v4070, 5
        %v4072 = vand.u32 %v4070, 31
        %v4073 = vsub.s32 32, %v4072
        %v4074 = vshrl.u32 683565275, %v4073
        %v4075 = vshll.u32 683565275, %v4072
        %v4076 = vshrl.u32 2475754826, %v4073
        %v4077 = vor.u32 %v4075, %v4076
        %v4078 = vshll.u32 2475754826, %v4072
        %v4079 = vshrl.u32 2131351028, %v4073
        %v4080 = vor.u32 %v4078, %v4079
        %v4081 = vshll.u32 2131351028, %v4072
        %v4082 = vshrl.u32 2102212464, %v4073
        %v4083 = vor.u32 %v4081, %v4082
        %v4084 = vshll.u32 2102212464, %v4072
        %v4085 = vshrl.u32 920167782, %v4073
        %v4086 = vor.u32 %v4084, %v4085
        %v4087 = vshll.u32 920167782, %v4072
        %v4088 = vshrl.u32 1326507024, %v4073
        %v4089 = vor.u32 %v4087, %v4088
        %vm4090 = vcmp.lt.s32.totalorder %v4071, 1
        %vm4091 = vcmp.lt.s32.totalorder %v4071, 2
        %vm4092 = vcmp.lt.s32.totalorder %v4071, 3
        %vm4093 = vcmp.lt.s32.totalorder %v4071, 4
        %v4094 = vsel %vm4090, %v4074, %v4077
        %v4095 = vsel %vm4093, %v4083, 2102212464
        %v4096 = vsel %vm4092, %v4080, %v4095
        %v4097 = vsel %vm4091, %v4094, %v4096
        %v4098 = vsel %vm4090, %v4077, %v4080
        %v4099 = vsel %vm4093, %v4086, 920167782
        %v4100 = vsel %vm4092, %v4083, %v4099
        %v4101 = vsel %vm4091, %v4098, %v4100
        %v4102 = vsel %vm4090, %v4080, %v4083
        %v4103 = vsel %vm4093, %v4089, 1326507024
        %v4104 = vsel %vm4092, %v4086, %v4103
        %v4105 = vsel %vm4091, %v4102, %v4104
        %v4106 = vshll.u32 %v4066, 8
        %v4107 = vmul.u32.u64.compose %v4106, %v4105
        %v4108 = vextract.low.u32 %v4107
        %v4109 = vextract.high.u32 %v4107
        %v4110 = vmul.u32.u64.compose %v4106, %v4101
        %v4111 = vextract.low.u32 %v4110
        %v4112 = vextract.high.u32 %v4110
        %v4113 = vmul.u32 %v4106, %v4097
        %v4114 = vadd.s32 %v4109, %v4111
        %vm4115 = vc.u32 %v4109, %v4111
        %v4116 = vadd.s32 %v4112, 1
        %v4117 = vsel %vm4115, %v4116, %v4112
        %v4118 = vadd.s32 %v4113, %v4117
        %v4119 = vadd.s32 %v4118, 536870912
        %v4120 = vshrl.u32 %v4119, 30
        %v4121 = vshll.u32 %v4120, 30
        %v4122 = vsub.s32 %v4118, %v4121
        %vm4123 = vcmp.lt.s32.totalorder %v4122, 0
        %v4124 = vsub.s32 0, %v4122
        %v4125 = vsel %vm4123, %v4124, %v4122
        %v4126 = vclz %v4125
        %v4127 = vsub.s32 %v4126, 2
        %vm4128 = vcmp.gt.s32.totalorder 0, %v4127
        %v4129 = vsel %vm4128, 0, %v4127
        %v4130 = vsub.s32 32, %v4129
        %v4131 = vshll.u32 %v4122, %v4129
        %v4132 = vshrl.u32 %v4114, %v4130
        %v4133 = vor.u32 %v4131, %v4132
        %v4134 = vsub.s32 4294967266, %v4129
        %v4135 = vadd.s32 %v4134, 127
        %v4136 = vshll.u32 %v4135, 23
        %v4137 = vor.u32 4788187, %v4136
        %v4138 = vand.u32 2147483647, %v4137
        %v4140 = vcvt.s32.f32 %v4133
        %v4141 = vmul.f32 %v4140, %v4138
        %v4142 = vxor.u32 %v4141, 2147483648
        %v4143 = vsel %vm4060, %v4142, %v4141
        %v4144 = vsub.s32 4, %v4120
        %v4145 = vsel %vm4060, %v4144, %v4120
        %v4146 = vsel %vm4059, %v3743, %v4143
        %v4147 = vsel %vm4059, 0, %v4145
        %v4148 = vcosq.f32.pop %v4146
        %v4149 = vsinq.f32.pop %v4146
        %vm4150 = vweird.f32 %v3743
        %v4151 = vadd.s32 %v4147, 3
        %v4152 = vand.u32 %v4151, 3
        %vm4153 = vcmp.lt.s32.totalorder %v4152, 2
        %vm4154 = vcmp.eq.s32.totalorder %v4152, 0
        %v4155 = vxor.u32 %v4149, 2147483648
        %v4156 = vsel %vm4154, %v4148, %v4155
        %vm4157 = vcmp.eq.s32.totalorder %v4152, 2
        %v4158 = vxor.u32 %v4148, 2147483648
        %v4159 = vsel %vm4157, %v4158, %v4149
        %v4160 = vsel %vm4153, %v4156, %v4159
        %v4161 = vsel %vm4150, nan, %v4160
        %v4163 = vlaneseq
        %v4164 = vshrl.u32 %v4163, 7
        %v4165 = vsub.s32 0, %v4164
        %v4166 = vrot.slane %v3654, %v4165
        %4168 = vmatprep.subr.mxu0 0.0
        %4169 = vmatpush1.msra.mxu0 %v3638
        %4170 = vmatprep.subr.mxu0 0.0
        %4171 = vmatpush1.msra.mxu0 %v3639
        %4172 = vmatprep.subr.mxu0 0.0
        %4173 = vmatpush1.msra.mxu0 %v3640
        %4174 = vmatprep.subr.mxu0 0.0
        %4175 = vmatpush1.msra.mxu0 %v3641
        %4176 = vmatprep.subr.mxu0 0.0
        %4177 = vmatpush1.msra.mxu0 %v3642
        %4178 = vmatprep.subr.mxu0 0.0
        %4179 = vmatpush1.msra.mxu0 %v3643
        %4180 = vmatprep.subr.mxu0 0.0
        %4181 = vmatpush1.msra.mxu0 %v3644
        %4182 = vmatprep.subr.mxu0 0.0
        %4183 = vmatpush1.msra.mxu0 %v3645
        %4184 = vmatprep.subr.mxu0 0.0
        %4185 = vmatpush1.msra.mxu0 %v3646
        %4186 = vmatprep.subr.mxu0 0.0
        %4187 = vmatpush1.msra.mxu0 %v3647
        %4188 = vmatprep.subr.mxu0 0.0
        %4189 = vmatpush1.msra.mxu0 %v3648
        %4190 = vmatprep.subr.mxu0 0.0
        %4191 = vmatpush1.msra.mxu0 %v3649
        %4192 = vmatprep.subr.mxu0 0.0
        %4193 = vmatpush1.msra.mxu0 %v3650
        %4194 = vmatprep.subr.mxu0 0.0
        %4195 = vmatpush1.msra.mxu0 %v3651
        %4196 = vmatprep.subr.mxu0 0.0
        %4197 = vmatpush1.msra.mxu0 %v3652
        %4198 = vmatprep.subr.mxu0 0.0
        %4199 = vmatpush1.msra.mxu0 %v3653
        %4200 = vmatprep.subr.mxu0 0.0
        %4201 = vmatpush1.msra.mxu0 0.0
        %4202 = vmatprep.subr.mxu0 0.0
        %4203 = vmatpush1.msra.mxu0 0.0
        %4204 = vmatprep.subr.mxu0 0.0
        %4205 = vmatpush1.msra.mxu0 0.0
        %4206 = vmatprep.subr.mxu0 0.0
        %4207 = vmatpush1.msra.mxu0 0.0
        %4208 = vmatprep.subr.mxu0 0.0
        %4209 = vmatpush1.msra.mxu0 0.0
        %4210 = vmatprep.subr.mxu0 0.0
        %4211 = vmatpush1.msra.mxu0 0.0
        %4212 = vmatprep.subr.mxu0 0.0
        %4213 = vmatpush1.msra.mxu0 0.0
        %4214 = vmatprep.subr.mxu0 0.0
        %4215 = vmatpush1.msra.mxu0 0.0
        %4216 = vmatprep.subr.mxu0 0.0
        %4217 = vmatpush1.msra.mxu0 0.0
        %4218 = vmatprep.subr.mxu0 0.0
        %4219 = vmatpush1.msra.mxu0 0.0
        %4220 = vmatprep.subr.mxu0 0.0
        %4221 = vmatpush1.msra.mxu0 0.0
        %4222 = vmatprep.subr.mxu0 0.0
        %4223 = vmatpush1.msra.mxu0 0.0
        %4224 = vmatprep.subr.mxu0 0.0
        %4225 = vmatpush1.msra.mxu0 0.0
        %4226 = vmatprep.subr.mxu0 0.0
        %4227 = vmatpush1.msra.mxu0 0.0
        %4228 = vmatprep.subr.mxu0 0.0
        %4229 = vmatpush1.msra.mxu0 0.0
        %4230 = vmatprep.subr.mxu0 0.0
        %4231 = vmatpush1.msra.mxu0 0.0
        %4232 = vmatprep.mubr.f32.mxu0 0.0
        %4233 = vmatmul.mubr.f32.gmra.mrb[0].mxu0 %v3849
        %v4234 = vpop.f32.mrb[0].mxu0
        %v4235 = vadd.f32 %v4166, %v4234
        %v4236 = vpop.f32.mrb[0].mxu0
        %4237 = vmatprep.mubr.f32.mxu0 0.0
        %4238 = vmatmul.mubr.f32.gmra.mrb[0].mxu0 %v3953
        %v4239 = vpop.f32.mrb[0].mxu0
        %v4240 = vadd.f32 %v4166, %v4239
        %v4241 = vpop.f32.mrb[0].mxu0
        %4242 = vmatprep.mubr.f32.mxu0 0.0
        %4243 = vmatmul.mubr.f32.gmra.mrb[0].mxu0 %v4057
        %v4244 = vpop.f32.mrb[0].mxu0
        %v4245 = vadd.f32 %v4166, %v4244
        %v4246 = vpop.f32.mrb[0].mxu0
        %4247 = vmatprep.mubr.f32.mxu0 0.0
        %4248 = vmatmul.mubr.f32.gmra.mrb[0].mxu0 %v4161
        %v4249 = vpop.f32.mrb[0].mxu0
        %v4250 = vadd.f32 %v4166, %v4249
        %v4251 = vpop.f32.mrb[0].mxu0
        %4252 = vdwg.mxu0
        %v4253 = vtanh.pop %v4235
        %v4254 = vtanh.pop %v4240
        %v4255 = vtanh.pop %v4245
        %v4256 = vtanh.pop %v4250
        %v4257 = vmul.f32 %v4253, 0.1
        %v4258 = vmul.f32 %v4254, 0.1
        %v4259 = vmul.f32 %v4255, 0.1
        %v4260 = vmul.f32 %v4256, 0.1
        %v4261 = vadd.f32 %v4257, %v3617
        %v4262 = vadd.f32 %v4258, %v3618
        %v4263 = vadd.f32 %v4259, %v3619
        %v4264 = vadd.f32 %v4260, %v3620
        %v4265 = vld [vmem:[#allocation27] sm:$0xff]
        %v4266 = vld [vmem:[#allocation27 + $0x8] sm:$0xff]
        %v4267 = vld [vmem:[#allocation27 + $0x10] sm:$0xff]
        %v4268 = vld [vmem:[#allocation27 + $0x18] sm:$0xff]
        %v4269 = vld [vmem:[#allocation27 + $0x20] sm:$0xff]
        %v4270 = vld [vmem:[#allocation27 + $0x28] sm:$0xff]
        %v4271 = vld [vmem:[#allocation27 + $0x30] sm:$0xff]
        %v4272 = vld [vmem:[#allocation27 + $0x38] sm:$0xff]
        %v4273 = vld [vmem:[#allocation27 + $0x40] sm:$0xff]
        %v4274 = vld [vmem:[#allocation27 + $0x48] sm:$0xff]
        %v4275 = vld [vmem:[#allocation27 + $0x50] sm:$0xff]
        %v4276 = vld [vmem:[#allocation27 + $0x58] sm:$0xff]
        %v4277 = vld [vmem:[#allocation27 + $0x60] sm:$0xff]
        %v4278 = vld [vmem:[#allocation27 + $0x68] sm:$0xff]
        %v4279 = vld [vmem:[#allocation27 + $0x70] sm:$0xff]
        %v4280 = vld [vmem:[#allocation27 + $0x78] sm:$0xff]
        %v4281 = vld [vmem:[#allocation27 + $0x80] sm:$0xff]
        %v4282 = vld [vmem:[#allocation27 + $0x88] sm:$0xff]
        %v4283 = vld [vmem:[#allocation27 + $0x90] sm:$0xff]
        %v4284 = vld [vmem:[#allocation27 + $0x98] sm:$0xff]
        %v4285 = vld [vmem:[#allocation27 + $0xa0] sm:$0xff]
        %v4286 = vld [vmem:[#allocation27 + $0xa8] sm:$0xff]
        %v4287 = vld [vmem:[#allocation27 + $0xb0] sm:$0xff]
        %v4288 = vld [vmem:[#allocation27 + $0xb8] sm:$0xff]
        %v4289 = vld [vmem:[#allocation27 + $0xc0] sm:$0xff]
        %v4290 = vld [vmem:[#allocation27 + $0xc8] sm:$0xff]
        %v4291 = vld [vmem:[#allocation27 + $0xd0] sm:$0xff]
        %v4292 = vld [vmem:[#allocation27 + $0xd8] sm:$0xff]
        %v4293 = vld [vmem:[#allocation27 + $0xe0] sm:$0xff]
        %v4294 = vld [vmem:[#allocation27 + $0xe8] sm:$0xff]
        %v4295 = vld [vmem:[#allocation27 + $0xf0] sm:$0xff]
        %v4296 = vld [vmem:[#allocation27 + $0xf8] sm:$0xff]
        %v4297 = vld [vmem:[%s22] sm:$0x3]
        %v4298 = vld [vmem:[#allocation28] sm:$0xff]
        %v4299 = vld [vmem:[#allocation28 + $0x8] sm:$0xff]
        %v4300 = vld [vmem:[#allocation28 + $0x10] sm:$0xff]
        %v4301 = vld [vmem:[#allocation28 + $0x18] sm:$0xff]
        %v4302 = vld [vmem:[#allocation28 + $0x20] sm:$0xff]
        %v4303 = vld [vmem:[#allocation28 + $0x28] sm:$0xff]
        %v4304 = vld [vmem:[#allocation28 + $0x30] sm:$0xff]
        %v4305 = vld [vmem:[#allocation28 + $0x38] sm:$0xff]
        %v4306 = vld [vmem:[#allocation28 + $0x40] sm:$0xff]
        %v4307 = vld [vmem:[#allocation28 + $0x48] sm:$0xff]
        %v4308 = vld [vmem:[#allocation28 + $0x50] sm:$0xff]
        %v4309 = vld [vmem:[#allocation28 + $0x58] sm:$0xff]
        %v4310 = vld [vmem:[#allocation28 + $0x60] sm:$0xff]
        %v4311 = vld [vmem:[#allocation28 + $0x68] sm:$0xff]
        %v4312 = vld [vmem:[#allocation28 + $0x70] sm:$0xff]
        %v4313 = vld [vmem:[#allocation28 + $0x78] sm:$0xff]
        %v4314 = vld [vmem:[%s24] sm:$0x1]
        %v4316 = vlaneseq
        %v4317 = vshrl.u32 %v4316, 7
        %v4318 = vsub.s32 0, %v4317
        %v4319 = vrot.slane %v4297, %v4318
        %v4320 = vlaneseq
        %v4321 = vshrl.u32 %v4320, 7
        %v4322 = vsub.s32 1, %v4321
        %v4323 = vrot.slane %v4297, %v4322
        %4326 = vmatprep.subr.mxu0 %v4266
        %4327 = vmatpush1.msra.mxu0 %v4265
        %4328 = vmatprep.subr.mxu0 %v4268
        %4329 = vmatpush1.msra.mxu0 %v4267
        %4330 = vmatprep.subr.mxu0 %v4270
        %4331 = vmatpush1.msra.mxu0 %v4269
        %4332 = vmatprep.subr.mxu0 %v4272
        %4333 = vmatpush1.msra.mxu0 %v4271
        %4334 = vmatprep.subr.mxu0 %v4274
        %4335 = vmatpush1.msra.mxu0 %v4273
        %4336 = vmatprep.subr.mxu0 %v4276
        %4337 = vmatpush1.msra.mxu0 %v4275
        %4338 = vmatprep.subr.mxu0 %v4278
        %4339 = vmatpush1.msra.mxu0 %v4277
        %4340 = vmatprep.subr.mxu0 %v4280
        %4341 = vmatpush1.msra.mxu0 %v4279
        %4342 = vmatprep.subr.mxu0 %v4282
        %4343 = vmatpush1.msra.mxu0 %v4281
        %4344 = vmatprep.subr.mxu0 %v4284
        %4345 = vmatpush1.msra.mxu0 %v4283
        %4346 = vmatprep.subr.mxu0 %v4286
        %4347 = vmatpush1.msra.mxu0 %v4285
        %4348 = vmatprep.subr.mxu0 %v4288
        %4349 = vmatpush1.msra.mxu0 %v4287
        %4350 = vmatprep.subr.mxu0 %v4290
        %4351 = vmatpush1.msra.mxu0 %v4289
        %4352 = vmatprep.subr.mxu0 %v4292
        %4353 = vmatpush1.msra.mxu0 %v4291
        %4354 = vmatprep.subr.mxu0 %v4294
        %4355 = vmatpush1.msra.mxu0 %v4293
        %4356 = vmatprep.subr.mxu0 %v4296
        %4357 = vmatpush1.msra.mxu0 %v4295
        %4358 = vmatprep.subr.mxu0 0.0
        %4359 = vmatpush1.msra.mxu0 0.0
        %4360 = vmatprep.subr.mxu0 0.0
        %4361 = vmatpush1.msra.mxu0 0.0
        %4362 = vmatprep.subr.mxu0 0.0
        %4363 = vmatpush1.msra.mxu0 0.0
        %4364 = vmatprep.subr.mxu0 0.0
        %4365 = vmatpush1.msra.mxu0 0.0
        %4366 = vmatprep.subr.mxu0 0.0
        %4367 = vmatpush1.msra.mxu0 0.0
        %4368 = vmatprep.subr.mxu0 0.0
        %4369 = vmatpush1.msra.mxu0 0.0
        %4370 = vmatprep.subr.mxu0 0.0
        %4371 = vmatpush1.msra.mxu0 0.0
        %4372 = vmatprep.subr.mxu0 0.0
        %4373 = vmatpush1.msra.mxu0 0.0
        %4374 = vmatprep.subr.mxu0 0.0
        %4375 = vmatpush1.msra.mxu0 0.0
        %4376 = vmatprep.subr.mxu0 0.0
        %4377 = vmatpush1.msra.mxu0 0.0
        %4378 = vmatprep.subr.mxu0 0.0
        %4379 = vmatpush1.msra.mxu0 0.0
        %4380 = vmatprep.subr.mxu0 0.0
        %4381 = vmatpush1.msra.mxu0 0.0
        %4382 = vmatprep.subr.mxu0 0.0
        %4383 = vmatpush1.msra.mxu0 0.0
        %4384 = vmatprep.subr.mxu0 0.0
        %4385 = vmatpush1.msra.mxu0 0.0
        %4386 = vmatprep.subr.mxu0 0.0
        %4387 = vmatpush1.msra.mxu0 0.0
        %4388 = vmatprep.subr.mxu0 0.0
        %4389 = vmatpush1.msra.mxu0 0.0
        %4390 = vmatprep.mubr.f32.mxu0 0.0
        %4391 = vmatmul.mubr.f32.gmra.mrb[0].mxu0 %v4261
        %v4392 = vpop.f32.mrb[0].mxu0
        %v4393 = vadd.f32 %v4319, %v4392
        %v4394 = vpop.f32.mrb[0].mxu0
        %v4395 = vadd.f32 %v4323, %v4394
        %4396 = vmatprep.mubr.f32.mxu0 0.0
        %4397 = vmatmul.mubr.f32.gmra.mrb[0].mxu0 %v4262
        %v4398 = vpop.f32.mrb[0].mxu0
        %v4399 = vadd.f32 %v4319, %v4398
        %v4400 = vpop.f32.mrb[0].mxu0
        %v4401 = vadd.f32 %v4323, %v4400
        %4402 = vmatprep.mubr.f32.mxu0 0.0
        %4403 = vmatmul.mubr.f32.gmra.mrb[0].mxu0 %v4263
        %v4404 = vpop.f32.mrb[0].mxu0
        %v4405 = vadd.f32 %v4319, %v4404
        %v4406 = vpop.f32.mrb[0].mxu0
        %v4407 = vadd.f32 %v4323, %v4406
        %4408 = vmatprep.mubr.f32.mxu0 0.0
        %4409 = vmatmul.mubr.f32.gmra.mrb[0].mxu0 %v4264
        %v4410 = vpop.f32.mrb[0].mxu0
        %v4411 = vadd.f32 %v4319, %v4410
        %v4412 = vpop.f32.mrb[0].mxu0
        %v4413 = vadd.f32 %v4323, %v4412
        %4414 = vdwg.mxu0
        %v4415 = vand.u32 2147483647, %v4393
        %vm4416 = vcmp.le.f32.partialorder %v4415, 0.7853982
        %vm4417 = vcmp.lt.s32.totalorder %v4393, 0
        %v4418 = vand.u32 %v4393, 2139095040
        %v4419 = vshrl.u32 %v4418, 23
        %v4420 = vsub.s32 %v4419, 127
        %v4421 = vand.u32 2147483647, %v4393
        %v4422 = vand.u32 %v4421, 8388607
        %v4423 = vor.u32 %v4422, 8388608
        %v4424 = vsub.s32 0, %v4423
        %v4425 = vadd.s32 %v4420, 1
        %vm4426 = vcmp.gt.s32.totalorder %v4425, 0
        %v4427 = vsel %vm4426, %v4425, 0
        %v4428 = vshrl.u32 %v4427, 5
        %v4429 = vand.u32 %v4427, 31
        %v4430 = vsub.s32 32, %v4429
        %v4431 = vshrl.u32 683565275, %v4430
        %v4432 = vshll.u32 683565275, %v4429
        %v4433 = vshrl.u32 2475754826, %v4430
        %v4434 = vor.u32 %v4432, %v4433
        %v4435 = vshll.u32 2475754826, %v4429
        %v4436 = vshrl.u32 2131351028, %v4430
        %v4437 = vor.u32 %v4435, %v4436
        %v4438 = vshll.u32 2131351028, %v4429
        %v4439 = vshrl.u32 2102212464, %v4430
        %v4440 = vor.u32 %v4438, %v4439
        %v4441 = vshll.u32 2102212464, %v4429
        %v4442 = vshrl.u32 920167782, %v4430
        %v4443 = vor.u32 %v4441, %v4442
        %v4444 = vshll.u32 920167782, %v4429
        %v4445 = vshrl.u32 1326507024, %v4430
        %v4446 = vor.u32 %v4444, %v4445
        %vm4447 = vcmp.lt.s32.totalorder %v4428, 1
        %vm4448 = vcmp.lt.s32.totalorder %v4428, 2
        %vm4449 = vcmp.lt.s32.totalorder %v4428, 3
        %vm4450 = vcmp.lt.s32.totalorder %v4428, 4
        %v4451 = vsel %vm4447, %v4431, %v4434
        %v4452 = vsel %vm4450, %v4440, 2102212464
        %v4453 = vsel %vm4449, %v4437, %v4452
        %v4454 = vsel %vm4448, %v4451, %v4453
        %v4455 = vsel %vm4447, %v4434, %v4437
        %v4456 = vsel %vm4450, %v4443, 920167782
        %v4457 = vsel %vm4449, %v4440, %v4456
        %v4458 = vsel %vm4448, %v4455, %v4457
        %v4459 = vsel %vm4447, %v4437, %v4440
        %v4460 = vsel %vm4450, %v4446, 1326507024
        %v4461 = vsel %vm4449, %v4443, %v4460
        %v4462 = vsel %vm4448, %v4459, %v4461
        %v4463 = vshll.u32 %v4423, 8
        %v4464 = vmul.u32.u64.compose %v4463, %v4462
        %v4465 = vextract.low.u32 %v4464
        %v4466 = vextract.high.u32 %v4464
        %v4467 = vmul.u32.u64.compose %v4463, %v4458
        %v4468 = vextract.low.u32 %v4467
        %v4469 = vextract.high.u32 %v4467
        %v4470 = vmul.u32 %v4463, %v4454
        %v4471 = vadd.s32 %v4466, %v4468
        %vm4472 = vc.u32 %v4466, %v4468
        %v4473 = vadd.s32 %v4469, 1
        %v4474 = vsel %vm4472, %v4473, %v4469
        %v4475 = vadd.s32 %v4470, %v4474
        %v4476 = vadd.s32 %v4475, 536870912
        %v4477 = vshrl.u32 %v4476, 30
        %v4478 = vshll.u32 %v4477, 30
        %v4479 = vsub.s32 %v4475, %v4478
        %vm4480 = vcmp.lt.s32.totalorder %v4479, 0
        %v4481 = vsub.s32 0, %v4479
        %v4482 = vsel %vm4480, %v4481, %v4479
        %v4483 = vclz %v4482
        %v4484 = vsub.s32 %v4483, 2
        %vm4485 = vcmp.gt.s32.totalorder 0, %v4484
        %v4486 = vsel %vm4485, 0, %v4484
        %v4487 = vsub.s32 32, %v4486
        %v4488 = vshll.u32 %v4479, %v4486
        %v4489 = vshrl.u32 %v4471, %v4487
        %v4490 = vor.u32 %v4488, %v4489
        %v4491 = vsub.s32 4294967266, %v4486
        %v4492 = vadd.s32 %v4491, 127
        %v4493 = vshll.u32 %v4492, 23
        %v4494 = vor.u32 4788187, %v4493
        %v4495 = vand.u32 2147483647, %v4494
        %v4497 = vcvt.s32.f32 %v4490
        %v4498 = vmul.f32 %v4497, %v4495
        %v4499 = vxor.u32 %v4498, 2147483648
        %v4500 = vsel %vm4417, %v4499, %v4498
        %v4501 = vsub.s32 4, %v4477
        %v4502 = vsel %vm4417, %v4501, %v4477
        %v4503 = vsel %vm4416, %v4393, %v4500
        %v4504 = vsel %vm4416, 0, %v4502
        %v4505 = vcosq.f32.pop %v4503
        %v4506 = vsinq.f32.pop %v4503
        %vm4507 = vweird.f32 %v4393
        %v4508 = vadd.s32 %v4504, 3
        %v4509 = vand.u32 %v4508, 3
        %vm4510 = vcmp.lt.s32.totalorder %v4509, 2
        %vm4511 = vcmp.eq.s32.totalorder %v4509, 0
        %v4512 = vxor.u32 %v4506, 2147483648
        %v4513 = vsel %vm4511, %v4505, %v4512
        %vm4514 = vcmp.eq.s32.totalorder %v4509, 2
        %v4515 = vxor.u32 %v4505, 2147483648
        %v4516 = vsel %vm4514, %v4515, %v4506
        %v4517 = vsel %vm4510, %v4513, %v4516
        %v4518 = vsel %vm4507, nan, %v4517
        %v4519 = vand.u32 2147483647, %v4399
        %vm4520 = vcmp.le.f32.partialorder %v4519, 0.7853982
        %vm4521 = vcmp.lt.s32.totalorder %v4399, 0
        %v4522 = vand.u32 %v4399, 2139095040
        %v4523 = vshrl.u32 %v4522, 23
        %v4524 = vsub.s32 %v4523, 127
        %v4525 = vand.u32 2147483647, %v4399
        %v4526 = vand.u32 %v4525, 8388607
        %v4527 = vor.u32 %v4526, 8388608
        %v4528 = vsub.s32 0, %v4527
        %v4529 = vadd.s32 %v4524, 1
        %vm4530 = vcmp.gt.s32.totalorder %v4529, 0
        %v4531 = vsel %vm4530, %v4529, 0
        %v4532 = vshrl.u32 %v4531, 5
        %v4533 = vand.u32 %v4531, 31
        %v4534 = vsub.s32 32, %v4533
        %v4535 = vshrl.u32 683565275, %v4534
        %v4536 = vshll.u32 683565275, %v4533
        %v4537 = vshrl.u32 2475754826, %v4534
        %v4538 = vor.u32 %v4536, %v4537
        %v4539 = vshll.u32 2475754826, %v4533
        %v4540 = vshrl.u32 2131351028, %v4534
        %v4541 = vor.u32 %v4539, %v4540
        %v4542 = vshll.u32 2131351028, %v4533
        %v4543 = vshrl.u32 2102212464, %v4534
        %v4544 = vor.u32 %v4542, %v4543
        %v4545 = vshll.u32 2102212464, %v4533
        %v4546 = vshrl.u32 920167782, %v4534
        %v4547 = vor.u32 %v4545, %v4546
        %v4548 = vshll.u32 920167782, %v4533
        %v4549 = vshrl.u32 1326507024, %v4534
        %v4550 = vor.u32 %v4548, %v4549
        %vm4551 = vcmp.lt.s32.totalorder %v4532, 1
        %vm4552 = vcmp.lt.s32.totalorder %v4532, 2
        %vm4553 = vcmp.lt.s32.totalorder %v4532, 3
        %vm4554 = vcmp.lt.s32.totalorder %v4532, 4
        %v4555 = vsel %vm4551, %v4535, %v4538
        %v4556 = vsel %vm4554, %v4544, 2102212464
        %v4557 = vsel %vm4553, %v4541, %v4556
        %v4558 = vsel %vm4552, %v4555, %v4557
        %v4559 = vsel %vm4551, %v4538, %v4541
        %v4560 = vsel %vm4554, %v4547, 920167782
        %v4561 = vsel %vm4553, %v4544, %v4560
        %v4562 = vsel %vm4552, %v4559, %v4561
        %v4563 = vsel %vm4551, %v4541, %v4544
        %v4564 = vsel %vm4554, %v4550, 1326507024
        %v4565 = vsel %vm4553, %v4547, %v4564
        %v4566 = vsel %vm4552, %v4563, %v4565
        %v4567 = vshll.u32 %v4527, 8
        %v4568 = vmul.u32.u64.compose %v4567, %v4566
        %v4569 = vextract.low.u32 %v4568
        %v4570 = vextract.high.u32 %v4568
        %v4571 = vmul.u32.u64.compose %v4567, %v4562
        %v4572 = vextract.low.u32 %v4571
        %v4573 = vextract.high.u32 %v4571
        %v4574 = vmul.u32 %v4567, %v4558
        %v4575 = vadd.s32 %v4570, %v4572
        %vm4576 = vc.u32 %v4570, %v4572
        %v4577 = vadd.s32 %v4573, 1
        %v4578 = vsel %vm4576, %v4577, %v4573
        %v4579 = vadd.s32 %v4574, %v4578
        %v4580 = vadd.s32 %v4579, 536870912
        %v4581 = vshrl.u32 %v4580, 30
        %v4582 = vshll.u32 %v4581, 30
        %v4583 = vsub.s32 %v4579, %v4582
        %vm4584 = vcmp.lt.s32.totalorder %v4583, 0
        %v4585 = vsub.s32 0, %v4583
        %v4586 = vsel %vm4584, %v4585, %v4583
        %v4587 = vclz %v4586
        %v4588 = vsub.s32 %v4587, 2
        %vm4589 = vcmp.gt.s32.totalorder 0, %v4588
        %v4590 = vsel %vm4589, 0, %v4588
        %v4591 = vsub.s32 32, %v4590
        %v4592 = vshll.u32 %v4583, %v4590
        %v4593 = vshrl.u32 %v4575, %v4591
        %v4594 = vor.u32 %v4592, %v4593
        %v4595 = vsub.s32 4294967266, %v4590
        %v4596 = vadd.s32 %v4595, 127
        %v4597 = vshll.u32 %v4596, 23
        %v4598 = vor.u32 4788187, %v4597
        %v4599 = vand.u32 2147483647, %v4598
        %v4601 = vcvt.s32.f32 %v4594
        %v4602 = vmul.f32 %v4601, %v4599
        %v4603 = vxor.u32 %v4602, 2147483648
        %v4604 = vsel %vm4521, %v4603, %v4602
        %v4605 = vsub.s32 4, %v4581
        %v4606 = vsel %vm4521, %v4605, %v4581
        %v4607 = vsel %vm4520, %v4399, %v4604
        %v4608 = vsel %vm4520, 0, %v4606
        %v4609 = vcosq.f32.pop %v4607
        %v4610 = vsinq.f32.pop %v4607
        %vm4611 = vweird.f32 %v4399
        %v4612 = vadd.s32 %v4608, 3
        %v4613 = vand.u32 %v4612, 3
        %vm4614 = vcmp.lt.s32.totalorder %v4613, 2
        %vm4615 = vcmp.eq.s32.totalorder %v4613, 0
        %v4616 = vxor.u32 %v4610, 2147483648
        %v4617 = vsel %vm4615, %v4609, %v4616
        %vm4618 = vcmp.eq.s32.totalorder %v4613, 2
        %v4619 = vxor.u32 %v4609, 2147483648
        %v4620 = vsel %vm4618, %v4619, %v4610
        %v4621 = vsel %vm4614, %v4617, %v4620
        %v4622 = vsel %vm4611, nan, %v4621
        %v4623 = vand.u32 2147483647, %v4405
        %vm4624 = vcmp.le.f32.partialorder %v4623, 0.7853982
        %vm4625 = vcmp.lt.s32.totalorder %v4405, 0
        %v4626 = vand.u32 %v4405, 2139095040
        %v4627 = vshrl.u32 %v4626, 23
        %v4628 = vsub.s32 %v4627, 127
        %v4629 = vand.u32 2147483647, %v4405
        %v4630 = vand.u32 %v4629, 8388607
        %v4631 = vor.u32 %v4630, 8388608
        %v4632 = vsub.s32 0, %v4631
        %v4633 = vadd.s32 %v4628, 1
        %vm4634 = vcmp.gt.s32.totalorder %v4633, 0
        %v4635 = vsel %vm4634, %v4633, 0
        %v4636 = vshrl.u32 %v4635, 5
        %v4637 = vand.u32 %v4635, 31
        %v4638 = vsub.s32 32, %v4637
        %v4639 = vshrl.u32 683565275, %v4638
        %v4640 = vshll.u32 683565275, %v4637
        %v4641 = vshrl.u32 2475754826, %v4638
        %v4642 = vor.u32 %v4640, %v4641
        %v4643 = vshll.u32 2475754826, %v4637
        %v4644 = vshrl.u32 2131351028, %v4638
        %v4645 = vor.u32 %v4643, %v4644
        %v4646 = vshll.u32 2131351028, %v4637
        %v4647 = vshrl.u32 2102212464, %v4638
        %v4648 = vor.u32 %v4646, %v4647
        %v4649 = vshll.u32 2102212464, %v4637
        %v4650 = vshrl.u32 920167782, %v4638
        %v4651 = vor.u32 %v4649, %v4650
        %v4652 = vshll.u32 920167782, %v4637
        %v4653 = vshrl.u32 1326507024, %v4638
        %v4654 = vor.u32 %v4652, %v4653
        %vm4655 = vcmp.lt.s32.totalorder %v4636, 1
        %vm4656 = vcmp.lt.s32.totalorder %v4636, 2
        %vm4657 = vcmp.lt.s32.totalorder %v4636, 3
        %vm4658 = vcmp.lt.s32.totalorder %v4636, 4
        %v4659 = vsel %vm4655, %v4639, %v4642
        %v4660 = vsel %vm4658, %v4648, 2102212464
        %v4661 = vsel %vm4657, %v4645, %v4660
        %v4662 = vsel %vm4656, %v4659, %v4661
        %v4663 = vsel %vm4655, %v4642, %v4645
        %v4664 = vsel %vm4658, %v4651, 920167782
        %v4665 = vsel %vm4657, %v4648, %v4664
        %v4666 = vsel %vm4656, %v4663, %v4665
        %v4667 = vsel %vm4655, %v4645, %v4648
        %v4668 = vsel %vm4658, %v4654, 1326507024
        %v4669 = vsel %vm4657, %v4651, %v4668
        %v4670 = vsel %vm4656, %v4667, %v4669
        %v4671 = vshll.u32 %v4631, 8
        %v4672 = vmul.u32.u64.compose %v4671, %v4670
        %v4673 = vextract.low.u32 %v4672
        %v4674 = vextract.high.u32 %v4672
        %v4675 = vmul.u32.u64.compose %v4671, %v4666
        %v4676 = vextract.low.u32 %v4675
        %v4677 = vextract.high.u32 %v4675
        %v4678 = vmul.u32 %v4671, %v4662
        %v4679 = vadd.s32 %v4674, %v4676
        %vm4680 = vc.u32 %v4674, %v4676
        %v4681 = vadd.s32 %v4677, 1
        %v4682 = vsel %vm4680, %v4681, %v4677
        %v4683 = vadd.s32 %v4678, %v4682
        %v4684 = vadd.s32 %v4683, 536870912
        %v4685 = vshrl.u32 %v4684, 30
        %v4686 = vshll.u32 %v4685, 30
        %v4687 = vsub.s32 %v4683, %v4686
        %vm4688 = vcmp.lt.s32.totalorder %v4687, 0
        %v4689 = vsub.s32 0, %v4687
        %v4690 = vsel %vm4688, %v4689, %v4687
        %v4691 = vclz %v4690
        %v4692 = vsub.s32 %v4691, 2
        %vm4693 = vcmp.gt.s32.totalorder 0, %v4692
        %v4694 = vsel %vm4693, 0, %v4692
        %v4695 = vsub.s32 32, %v4694
        %v4696 = vshll.u32 %v4687, %v4694
        %v4697 = vshrl.u32 %v4679, %v4695
        %v4698 = vor.u32 %v4696, %v4697
        %v4699 = vsub.s32 4294967266, %v4694
        %v4700 = vadd.s32 %v4699, 127
        %v4701 = vshll.u32 %v4700, 23
        %v4702 = vor.u32 4788187, %v4701
        %v4703 = vand.u32 2147483647, %v4702
        %v4705 = vcvt.s32.f32 %v4698
        %v4706 = vmul.f32 %v4705, %v4703
        %v4707 = vxor.u32 %v4706, 2147483648
        %v4708 = vsel %vm4625, %v4707, %v4706
        %v4709 = vsub.s32 4, %v4685
        %v4710 = vsel %vm4625, %v4709, %v4685
        %v4711 = vsel %vm4624, %v4405, %v4708
        %v4712 = vsel %vm4624, 0, %v4710
        %v4713 = vcosq.f32.pop %v4711
        %v4714 = vsinq.f32.pop %v4711
        %vm4715 = vweird.f32 %v4405
        %v4716 = vadd.s32 %v4712, 3
        %v4717 = vand.u32 %v4716, 3
        %vm4718 = vcmp.lt.s32.totalorder %v4717, 2
        %vm4719 = vcmp.eq.s32.totalorder %v4717, 0
        %v4720 = vxor.u32 %v4714, 2147483648
        %v4721 = vsel %vm4719, %v4713, %v4720
        %vm4722 = vcmp.eq.s32.totalorder %v4717, 2
        %v4723 = vxor.u32 %v4713, 2147483648
        %v4724 = vsel %vm4722, %v4723, %v4714
        %v4725 = vsel %vm4718, %v4721, %v4724
        %v4726 = vsel %vm4715, nan, %v4725
        %v4727 = vand.u32 2147483647, %v4411
        %vm4728 = vcmp.le.f32.partialorder %v4727, 0.7853982
        %vm4729 = vcmp.lt.s32.totalorder %v4411, 0
        %v4730 = vand.u32 %v4411, 2139095040
        %v4731 = vshrl.u32 %v4730, 23
        %v4732 = vsub.s32 %v4731, 127
        %v4733 = vand.u32 2147483647, %v4411
        %v4734 = vand.u32 %v4733, 8388607
        %v4735 = vor.u32 %v4734, 8388608
        %v4736 = vsub.s32 0, %v4735
        %v4737 = vadd.s32 %v4732, 1
        %vm4738 = vcmp.gt.s32.totalorder %v4737, 0
        %v4739 = vsel %vm4738, %v4737, 0
        %v4740 = vshrl.u32 %v4739, 5
        %v4741 = vand.u32 %v4739, 31
        %v4742 = vsub.s32 32, %v4741
        %v4743 = vshrl.u32 683565275, %v4742
        %v4744 = vshll.u32 683565275, %v4741
        %v4745 = vshrl.u32 2475754826, %v4742
        %v4746 = vor.u32 %v4744, %v4745
        %v4747 = vshll.u32 2475754826, %v4741
        %v4748 = vshrl.u32 2131351028, %v4742
        %v4749 = vor.u32 %v4747, %v4748
        %v4750 = vshll.u32 2131351028, %v4741
        %v4751 = vshrl.u32 2102212464, %v4742
        %v4752 = vor.u32 %v4750, %v4751
        %v4753 = vshll.u32 2102212464, %v4741
        %v4754 = vshrl.u32 920167782, %v4742
        %v4755 = vor.u32 %v4753, %v4754
        %v4756 = vshll.u32 920167782, %v4741
        %v4757 = vshrl.u32 1326507024, %v4742
        %v4758 = vor.u32 %v4756, %v4757
        %vm4759 = vcmp.lt.s32.totalorder %v4740, 1
        %vm4760 = vcmp.lt.s32.totalorder %v4740, 2
        %vm4761 = vcmp.lt.s32.totalorder %v4740, 3
        %vm4762 = vcmp.lt.s32.totalorder %v4740, 4
        %v4763 = vsel %vm4759, %v4743, %v4746
        %v4764 = vsel %vm4762, %v4752, 2102212464
        %v4765 = vsel %vm4761, %v4749, %v4764
        %v4766 = vsel %vm4760, %v4763, %v4765
        %v4767 = vsel %vm4759, %v4746, %v4749
        %v4768 = vsel %vm4762, %v4755, 920167782
        %v4769 = vsel %vm4761, %v4752, %v4768
        %v4770 = vsel %vm4760, %v4767, %v4769
        %v4771 = vsel %vm4759, %v4749, %v4752
        %v4772 = vsel %vm4762, %v4758, 1326507024
        %v4773 = vsel %vm4761, %v4755, %v4772
        %v4774 = vsel %vm4760, %v4771, %v4773
        %v4775 = vshll.u32 %v4735, 8
        %v4776 = vmul.u32.u64.compose %v4775, %v4774
        %v4777 = vextract.low.u32 %v4776
        %v4778 = vextract.high.u32 %v4776
        %v4779 = vmul.u32.u64.compose %v4775, %v4770
        %v4780 = vextract.low.u32 %v4779
        %v4781 = vextract.high.u32 %v4779
        %v4782 = vmul.u32 %v4775, %v4766
        %v4783 = vadd.s32 %v4778, %v4780
        %vm4784 = vc.u32 %v4778, %v4780
        %v4785 = vadd.s32 %v4781, 1
        %v4786 = vsel %vm4784, %v4785, %v4781
        %v4787 = vadd.s32 %v4782, %v4786
        %v4788 = vadd.s32 %v4787, 536870912
        %v4789 = vshrl.u32 %v4788, 30
        %v4790 = vshll.u32 %v4789, 30
        %v4791 = vsub.s32 %v4787, %v4790
        %vm4792 = vcmp.lt.s32.totalorder %v4791, 0
        %v4793 = vsub.s32 0, %v4791
        %v4794 = vsel %vm4792, %v4793, %v4791
        %v4795 = vclz %v4794
        %v4796 = vsub.s32 %v4795, 2
        %vm4797 = vcmp.gt.s32.totalorder 0, %v4796
        %v4798 = vsel %vm4797, 0, %v4796
        %v4799 = vsub.s32 32, %v4798
        %v4800 = vshll.u32 %v4791, %v4798
        %v4801 = vshrl.u32 %v4783, %v4799
        %v4802 = vor.u32 %v4800, %v4801
        %v4803 = vsub.s32 4294967266, %v4798
        %v4804 = vadd.s32 %v4803, 127
        %v4805 = vshll.u32 %v4804, 23
        %v4806 = vor.u32 4788187, %v4805
        %v4807 = vand.u32 2147483647, %v4806
        %v4809 = vcvt.s32.f32 %v4802
        %v4810 = vmul.f32 %v4809, %v4807
        %v4811 = vxor.u32 %v4810, 2147483648
        %v4812 = vsel %vm4729, %v4811, %v4810
        %v4813 = vsub.s32 4, %v4789
        %v4814 = vsel %vm4729, %v4813, %v4789
        %v4815 = vsel %vm4728, %v4411, %v4812
        %v4816 = vsel %vm4728, 0, %v4814
        %v4817 = vcosq.f32.pop %v4815
        %v4818 = vsinq.f32.pop %v4815
        %vm4819 = vweird.f32 %v4411
        %v4820 = vadd.s32 %v4816, 3
        %v4821 = vand.u32 %v4820, 3
        %vm4822 = vcmp.lt.s32.totalorder %v4821, 2
        %vm4823 = vcmp.eq.s32.totalorder %v4821, 0
        %v4824 = vxor.u32 %v4818, 2147483648
        %v4825 = vsel %vm4823, %v4817, %v4824
        %vm4826 = vcmp.eq.s32.totalorder %v4821, 2
        %v4827 = vxor.u32 %v4817, 2147483648
        %v4828 = vsel %vm4826, %v4827, %v4818
        %v4829 = vsel %vm4822, %v4825, %v4828
        %v4830 = vsel %vm4819, nan, %v4829
        %v4832 = vlaneseq
        %v4833 = vshrl.u32 %v4832, 7
        %v4834 = vsub.s32 0, %v4833
        %v4835 = vrot.slane %v4314, %v4834
        %4837 = vmatprep.subr.mxu0 0.0
        %4838 = vmatpush1.msra.mxu0 %v4298
        %4839 = vmatprep.subr.mxu0 0.0
        %4840 = vmatpush1.msra.mxu0 %v4299
        %4841 = vmatprep.subr.mxu0 0.0
        %4842 = vmatpush1.msra.mxu0 %v4300
        %4843 = vmatprep.subr.mxu0 0.0
        %4844 = vmatpush1.msra.mxu0 %v4301
        %4845 = vmatprep.subr.mxu0 0.0
        %4846 = vmatpush1.msra.mxu0 %v4302
        %4847 = vmatprep.subr.mxu0 0.0
        %4848 = vmatpush1.msra.mxu0 %v4303
        %4849 = vmatprep.subr.mxu0 0.0
        %4850 = vmatpush1.msra.mxu0 %v4304
        %4851 = vmatprep.subr.mxu0 0.0
        %4852 = vmatpush1.msra.mxu0 %v4305
        %4853 = vmatprep.subr.mxu0 0.0
        %4854 = vmatpush1.msra.mxu0 %v4306
        %4855 = vmatprep.subr.mxu0 0.0
        %4856 = vmatpush1.msra.mxu0 %v4307
        %4857 = vmatprep.subr.mxu0 0.0
        %4858 = vmatpush1.msra.mxu0 %v4308
        %4859 = vmatprep.subr.mxu0 0.0
        %4860 = vmatpush1.msra.mxu0 %v4309
        %4861 = vmatprep.subr.mxu0 0.0
        %4862 = vmatpush1.msra.mxu0 %v4310
        %4863 = vmatprep.subr.mxu0 0.0
        %4864 = vmatpush1.msra.mxu0 %v4311
        %4865 = vmatprep.subr.mxu0 0.0
        %4866 = vmatpush1.msra.mxu0 %v4312
        %4867 = vmatprep.subr.mxu0 0.0
        %4868 = vmatpush1.msra.mxu0 %v4313
        %4869 = vmatprep.subr.mxu0 0.0
        %4870 = vmatpush1.msra.mxu0 0.0
        %4871 = vmatprep.subr.mxu0 0.0
        %4872 = vmatpush1.msra.mxu0 0.0
        %4873 = vmatprep.subr.mxu0 0.0
        %4874 = vmatpush1.msra.mxu0 0.0
        %4875 = vmatprep.subr.mxu0 0.0
        %4876 = vmatpush1.msra.mxu0 0.0
        %4877 = vmatprep.subr.mxu0 0.0
        %4878 = vmatpush1.msra.mxu0 0.0
        %4879 = vmatprep.subr.mxu0 0.0
        %4880 = vmatpush1.msra.mxu0 0.0
        %4881 = vmatprep.subr.mxu0 0.0
        %4882 = vmatpush1.msra.mxu0 0.0
        %4883 = vmatprep.subr.mxu0 0.0
        %4884 = vmatpush1.msra.mxu0 0.0
        %4885 = vmatprep.subr.mxu0 0.0
        %4886 = vmatpush1.msra.mxu0 0.0
        %4887 = vmatprep.subr.mxu0 0.0
        %4888 = vmatpush1.msra.mxu0 0.0
        %4889 = vmatprep.subr.mxu0 0.0
        %4890 = vmatpush1.msra.mxu0 0.0
        %4891 = vmatprep.subr.mxu0 0.0
        %4892 = vmatpush1.msra.mxu0 0.0
        %4893 = vmatprep.subr.mxu0 0.0
        %4894 = vmatpush1.msra.mxu0 0.0
        %4895 = vmatprep.subr.mxu0 0.0
        %4896 = vmatpush1.msra.mxu0 0.0
        %4897 = vmatprep.subr.mxu0 0.0
        %4898 = vmatpush1.msra.mxu0 0.0
        %4899 = vmatprep.subr.mxu0 0.0
        %4900 = vmatpush1.msra.mxu0 0.0
        %4901 = vmatprep.mubr.f32.mxu0 0.0
        %4902 = vmatmul.mubr.f32.gmra.mrb[0].mxu0 %v4518
        %v4903 = vpop.f32.mrb[0].mxu0
        %v4904 = vadd.f32 %v4835, %v4903
        %v4905 = vpop.f32.mrb[0].mxu0
        %4906 = vmatprep.mubr.f32.mxu0 0.0
        %4907 = vmatmul.mubr.f32.gmra.mrb[0].mxu0 %v4622
        %v4908 = vpop.f32.mrb[0].mxu0
        %v4909 = vadd.f32 %v4835, %v4908
        %v4910 = vpop.f32.mrb[0].mxu0
        %4911 = vmatprep.mubr.f32.mxu0 0.0
        %4912 = vmatmul.mubr.f32.gmra.mrb[0].mxu0 %v4726
        %v4913 = vpop.f32.mrb[0].mxu0
        %v4914 = vadd.f32 %v4835, %v4913
        %v4915 = vpop.f32.mrb[0].mxu0
        %4916 = vmatprep.mubr.f32.mxu0 0.0
        %4917 = vmatmul.mubr.f32.gmra.mrb[0].mxu0 %v4830
        %v4918 = vpop.f32.mrb[0].mxu0
        %v4919 = vadd.f32 %v4835, %v4918
        %v4920 = vpop.f32.mrb[0].mxu0
        %4921 = vdwg.mxu0
        %v4922 = vtanh.pop %v4904
        %v4923 = vtanh.pop %v4909
        %v4924 = vtanh.pop %v4914
        %v4925 = vtanh.pop %v4919
        %v4926 = vmul.f32 %v4922, 0.1
        %v4927 = vmul.f32 %v4923, 0.1
        %v4928 = vmul.f32 %v4924, 0.1
        %v4929 = vmul.f32 %v4925, 0.1
        %v4930 = vadd.f32 %v4926, %v4395
        %v4931 = vadd.f32 %v4927, %v4401
        %v4932 = vadd.f32 %v4928, %v4407
        %v4933 = vadd.f32 %v4929, %v4413
        %vm4934 = vcmask 7168
        %4935 = vst.msk [vmem:[%s1012] sm:$0xff] %vm4934, %v4930
        %4936 = vst.msk [vmem:[%s1012 + $0x8] sm:$0xff] %vm4934, %v4931
        %4937 = vst.msk [vmem:[%s1012 + $0x10] sm:$0xff] %vm4934, %v4932
        %4938 = vst.msk [vmem:[%s1012 + $0x18] sm:$0xff] %vm4934, %v4933
        %s4939 = smul.u32 4, %s46
        %p4940 = scmp.lt.s32.totalorder %s4939, 7
        %s4941 = scalar_select %p4940, %s4939, 7
        %s4942 = smul.addr %s4941, 8
        %s4943 = scalar_lea.vmem %s25, %s4942
        // Predicated region
        $region193: #{pinn_forward.1} parent=119 // pred_check
          %p4944 = pneg %p594
        $region194: #{pinn_forward.1} parent=119 // pred_check_branch
          %4946 = sbr.rel (%p4944) target = $region196
        $region195: #{pinn_forward.1} parent=119 // pred_region
          %s4947 = smul.u32 4, %s46
        $region196: #{pinn_forward.1} parent=119 // pred_fallthru
          _
      $region120: #{pinn_forward.1} parent=5 // pred_fallthru
        _
      %p4948 = scmp.le.s32.totalorder 2, %s41
      // Predicated region
      $region197: #{pinn_forward.1} parent=5 // pred_check
        %p4949 = pneg %p4948
      $region198: #{pinn_forward.1} parent=5 // pred_check_branch
        %4951 = sbr.rel (%p4949) target = $region200
      $region199: #{pinn_forward.1} parent=5 // pred_region
        %s4952 = ssub.s32 %s41, 2
        // Predicated region
        $region201: #{pinn_forward.1} parent=199 // pred_check
          %p4953 = pneg %p600
        $region202: #{pinn_forward.1} parent=199 // pred_check_branch
          %4955 = sbr.rel (%p4953) target = $region204
        $region203: #{pinn_forward.1} parent=199 // pred_region
          %s4956 = smul.u32 4, %s47
          %p4957 = scmp.lt.s32.totalorder %s4956, 7
          %s4958 = scalar_select %p4957, %s4956, 7
          %s4959 = smul.addr %s4958, 8
          %s4960 = scalar_lea.vmem %s25, %s4959
        $region204: #{pinn_forward.1} parent=199 // pred_fallthru
          _
      $region200: #{pinn_forward.1} parent=5 // pred_fallthru
        _
    $region6: #{pinn_forward.1} parent=1 // loop_footer
      %s45 = sadd.s32 1, %s41
    $region7: #{pinn_forward.1} parent=1 // loop_footer_branch
      %40 = sbr.rel target = $region3
    $region8: #{pinn_forward.1} parent=1 // loop_exit
      _
    %4961 = vsyncpa [#allocation3], 1
    %s4962 = scalar_lea.sflag [#allocation3], 1
    %4963 = vsyncpa %s4962, 1
    %4964 = vsyncpa [#allocation5], 1
    %4965 = vsyncpa [#allocation8], 1
    %4966 = vsyncpa [#allocation11], 1
    %4967 = vsyncpa [#allocation14], 1
    %4968 = vsyncpa [#allocation17], 1
    %4969 = vsyncpa [#allocation20], 1
    %4970 = vsyncpa [#allocation23], 1
    %4971 = vsyncpa [#allocation26], 1
    %4972 = vsyncpa [#allocation29], 1

</llo_original>
